<compile_context>
chip_gen: v7x
topology: tpu7x:2x2x1
jax: 0.10.0
libtpu: 0.0.40
codegen_flags: <defaults>
</compile_context>

<pallas_src>
import functools

import jax
import jax.numpy as jnp
from jax import lax
from jax.experimental import pallas as pl
from jax.experimental.pallas import tpu as pltpu


def _conv_relu_kernel(x_ref, w_ref, b_ref, out_ref, *, kh, kw):
    # x_ref:   (1, H + kh - 1, W + kw - 1, Cin_p)  bf16 (halo pre-padded)
    # w_ref:   (kh * kw * Cin_p, Cout_p)           bf16 (taps folded into K)
    # b_ref:   (1, Cout_p)                         f32
    # out_ref: (1, TH, W, Cout_p)                  f32 (one row strip)
    TH = out_ref.shape[1]
    W = out_ref.shape[2]
    cin_p = x_ref.shape[3]

    row0 = pl.multiple_of(pl.program_id(1) * TH, TH)

    # im2col-lite: gather the kh*kw shifted (TH, W, Cin_p) windows directly
    # from the VMEM block (plain offset loads, no padded-buffer rebuild) and
    # fold them along the channel/lane dim -> one fat MXU contraction.
    taps = []
    for ky in range(kh):
        for kx in range(kw):
            t = x_ref[0, pl.ds(row0 + ky, TH), pl.ds(kx, W), :]
            taps.append(t.reshape(TH * W, cin_p))
    slab = jnp.concatenate(taps, axis=-1)                 # (TH*W, kh*kw*Cin_p) bf16

    acc = jnp.dot(slab, w_ref[...], preferred_element_type=jnp.float32)
    y = jnp.maximum(acc + b_ref[...], 0.0)                # bias + ReLU in f32
    out_ref[0] = y.reshape(TH, W, -1).astype(out_ref.dtype)


def _round_up(x, m):
    return ((x + m - 1) // m) * m


def _pick_strip_height(H, W, kh, kw, cin_p,
                       target_rows=256, slab_budget_bytes=4 << 20):
    # Strip height TH such that:
    #   * TH divides H (uniform blocks),
    #   * TH * W is ~target_rows matmul rows (big tiles, few grid steps),
    #   * the bf16 im2col slab TH*W * kh*kw*cin_p * 2B stays under budget.
    rows_cap = max(8, slab_budget_bytes // (kh * kw * cin_p * 2))
    target = max(1, min(target_rows, rows_cap))
    th = max(1, min(H, target // max(W, 1)))
    while H % th != 0:
        th -= 1
    return th


def conv_relu_forward(x, w, b, *, strip_rows=None):
    """x: (N, H, W, Cin) f32 NHWC; w: (kh, kw, Cin, Cout) HWIO; b: (Cout,)."""
    N, H, W, Cin = x.shape
    kh, kw, wcin, Cout = w.shape
    assert wcin == Cin
    assert kh % 2 == 1 and kw % 2 == 1, "SAME padding requires odd kernel size"

    LANE = 128
    Cin_p = _round_up(Cin, LANE)
    Cout_p = _round_up(Cout, LANE)
    TH = strip_rows or _pick_strip_height(H, W, kh, kw, Cin_p)
    S = H // TH

    # Lane-dense channel padding + SAME halo (done once, wrapper side), bf16
    # MXU operands with f32 accumulation inside the kernel.
    ph, pw = kh // 2, kw // 2
    xp = jnp.pad(x, ((0, 0), (ph, ph), (pw, pw), (0, Cin_p - Cin))
                 ).astype(jnp.bfloat16)
    wp = jnp.pad(w, ((0, 0), (0, 0), (0, Cin_p - Cin), (0, Cout_p - Cout)))
    wp = wp.reshape(kh * kw * Cin_p, Cout_p).astype(jnp.bfloat16)
    bp = jnp.pad(b, (0, Cout_p - Cout)).reshape(1, Cout_p).astype(jnp.float32)

    Hp, Wp = H + kh - 1, W + kw - 1

    # VMEM budget estimate (double-buffered blocks + in-kernel intermediates).
    # NOTE: the padded image is kept resident per batch element; for very large
    # images a per-strip haloed input block would be needed instead.
    bytes_in = Hp * Wp * Cin_p * 2
    bytes_out = TH * W * Cout_p * 4
    bytes_wgt = kh * kw * Cin_p * Cout_p * 2 + Cout_p * 4
    bytes_tmp = TH * W * (kh * kw * Cin_p) * 2 + TH * W * Cout_p * 4
    est = 2 * (bytes_in + bytes_out + bytes_wgt) + 2 * bytes_tmp
    vmem_limit = int(min(64 * 1024 * 1024, max(32 * 1024 * 1024, 2 * est)))

    # Advisory cost hint for XLA's scheduler around the custom call.
    flops = 2 * N * H * W * kh * kw * Cin_p * Cout_p
    bytes_accessed = (xp.size * 2 + wp.size * 2 + bp.size * 4
                      + N * H * W * Cout_p * 4)
    cost = pl.CostEstimate(flops=flops, transcendentals=0,
                           bytes_accessed=bytes_accessed)

    kernel = functools.partial(_conv_relu_kernel, kh=kh, kw=kw)

    out_p = pl.pallas_call(
        kernel,
        out_shape=jax.ShapeDtypeStruct((N, H, W, Cout_p), jnp.float32),
        grid_spec=pltpu.PrefetchScalarGridSpec(
            num_scalar_prefetch=0,
            grid=(N, S),
            in_specs=[
                # Padded image stays resident across the strip axis (index_map
                # ignores s -> fetched once per batch element).
                pl.BlockSpec((1, Hp, Wp, Cin_p), lambda n, s: (n, 0, 0, 0)),
                pl.BlockSpec((kh * kw * Cin_p, Cout_p), lambda n, s: (0, 0)),
                pl.BlockSpec((1, Cout_p), lambda n, s: (0, 0)),
            ],
            out_specs=pl.BlockSpec((1, TH, W, Cout_p),
                                   lambda n, s: (n, s, 0, 0)),
        ),
        compiler_params=pltpu.CompilerParams(
            dimension_semantics=("parallel", "parallel"),
            vmem_limit_bytes=vmem_limit,
        ),
        cost_estimate=cost,
    )(xp, wp, bp)

    return out_p[..., :Cout]


def conv_relu_forward_nchw(x_nchw, w_oihw, b):
    """PyTorch-layout entry point: x (N,C,H,W), w (Cout,Cin,kh,kw), b (Cout,)."""
    x = jnp.transpose(x_nchw, (0, 2, 3, 1))      # NCHW -> NHWC
    w = jnp.transpose(w_oihw, (2, 3, 1, 0))      # OIHW -> HWIO
    y = conv_relu_forward(x, w, b)
    return jnp.transpose(y, (0, 3, 1, 2))        # NHWC -> NCHW


def conv_relu_reference_nchw(x, w, b):
    """Pure-JAX reference matching the PyTorch module (NCHW/OIHW, f32)."""
    dn = ("NCHW", "OIHW", "NCHW")
    y = lax.conv_general_dilated(x, w, (1, 1), "SAME", dimension_numbers=dn)
    return jnp.maximum(y + b[None, :, None, None], 0.0)


if __name__ == "__main__":
    # ConvReLU(in_channels=4, out_channels=8, kernel_size=3), N=2, 16x16.
    N, Cin, Cout, H, W = 2, 4, 8, 16, 16
    key = jax.random.PRNGKey(0)
    k_x, k_w, k_b = jax.random.split(key, 3)

    x = jax.random.normal(k_x, (N, Cin, H, W), jnp.float32)            # NCHW
    w = 0.1 * jax.random.normal(k_w, (Cout, Cin, 3, 3), jnp.float32)   # OIHW
    b = 0.1 * jax.random.normal(k_b, (Cout,), jnp.float32)

    out = jax.block_until_ready(conv_relu_forward_nchw(x, w, b))
    ref = jax.block_until_ready(conv_relu_reference_nchw(x, w, b))

    assert out.shape == (N, Cout, H, W)
    max_err = float(jnp.max(jnp.abs(out - ref)))
    # bf16 MXU operands with f32 accumulation -> tolerance loosened vs pure f32.
    assert jnp.allclose(out, ref, atol=2e-2, rtol=2e-2), max_err

    print("KERNEL_OK")
</pallas_src>

<mosaic_0001>
module attributes {stable_mosaic.version = 11 : i64} {
  func.func @_conv_relu_kernel(%arg0: i32, %arg1: i32, %arg2: memref<1x18x18x128xbf16, #tpu.memory_space<vmem>>, %arg3: memref<1152x128xbf16, #tpu.memory_space<vmem>>, %arg4: memref<1x128xf32, #tpu.memory_space<vmem>>, %arg5: memref<1x16x16x128xf32, #tpu.memory_space<vmem>>) attributes {dimension_semantics = [#tpu.dimension_semantics<parallel>, #tpu.dimension_semantics<parallel>], iteration_bounds = array<i64: 2, 1>, scalar_prefetch = 0 : i64, scratch_operands = 0 : i64, tpu.core_type = #tpu.core_type<tc>, window_params = [{transform_indices = @transform_0, window_bounds = array<i64: 1, 18, 18, 128>}, {pipeline_mode = #tpu.pipeline_mode<synchronous>, transform_indices = @transform_1, window_bounds = array<i64: 1152, 128>}, {pipeline_mode = #tpu.pipeline_mode<synchronous>, transform_indices = @transform_2, window_bounds = array<i64: 1, 128>}, {transform_indices = @transform_3, window_bounds = array<i64: 1, 16, 16, 128>}]} {
    %c16_i32 = arith.constant 16 : i32
    %0 = arith.muli %arg1, %c16_i32 : i32
    %1 = tpu.assume_multiple %0, 16 : i32
    %c0_i32 = arith.constant 0 : i32
    %2 = arith.addi %1, %c0_i32 : i32
    %c0 = arith.constant 0 : index
    %3 = arith.index_cast %2 : i32 to index
    %c0_0 = arith.constant 0 : index
    %c0_1 = arith.constant 0 : index
    %4 = vector.load %arg2[%c0, %3, %c0_0, %c0_1] : memref<1x18x18x128xbf16, #tpu.memory_space<vmem>>, vector<1x16x16x128xbf16>
    %5 = vector.shape_cast %4 : vector<1x16x16x128xbf16> to vector<16x16x128xbf16>
    %6 = vector.shape_cast %5 : vector<16x16x128xbf16> to vector<256x128xbf16>
    %c0_i32_2 = arith.constant 0 : i32
    %7 = arith.addi %1, %c0_i32_2 : i32
    %c0_3 = arith.constant 0 : index
    %8 = arith.index_cast %7 : i32 to index
    %c1 = arith.constant 1 : index
    %c0_4 = arith.constant 0 : index
    %9 = vector.load %arg2[%c0_3, %8, %c1, %c0_4] : memref<1x18x18x128xbf16, #tpu.memory_space<vmem>>, vector<1x16x16x128xbf16>
    %10 = vector.shape_cast %9 : vector<1x16x16x128xbf16> to vector<16x16x128xbf16>
    %11 = vector.shape_cast %10 : vector<16x16x128xbf16> to vector<256x128xbf16>
    %c0_i32_5 = arith.constant 0 : i32
    %12 = arith.addi %1, %c0_i32_5 : i32
    %c0_6 = arith.constant 0 : index
    %13 = arith.index_cast %12 : i32 to index
    %c2 = arith.constant 2 : index
    %c0_7 = arith.constant 0 : index
    %14 = vector.load %arg2[%c0_6, %13, %c2, %c0_7] : memref<1x18x18x128xbf16, #tpu.memory_space<vmem>>, vector<1x16x16x128xbf16>
    %15 = vector.shape_cast %14 : vector<1x16x16x128xbf16> to vector<16x16x128xbf16>
    %16 = vector.shape_cast %15 : vector<16x16x128xbf16> to vector<256x128xbf16>
    %c1_i32 = arith.constant 1 : i32
    %17 = arith.addi %1, %c1_i32 : i32
    %c0_8 = arith.constant 0 : index
    %18 = arith.index_cast %17 : i32 to index
    %c0_9 = arith.constant 0 : index
    %c0_10 = arith.constant 0 : index
    %19 = vector.load %arg2[%c0_8, %18, %c0_9, %c0_10] : memref<1x18x18x128xbf16, #tpu.memory_space<vmem>>, vector<1x16x16x128xbf16>
    %20 = vector.shape_cast %19 : vector<1x16x16x128xbf16> to vector<16x16x128xbf16>
    %21 = vector.shape_cast %20 : vector<16x16x128xbf16> to vector<256x128xbf16>
    %c1_i32_11 = arith.constant 1 : i32
    %22 = arith.addi %1, %c1_i32_11 : i32
    %c0_12 = arith.constant 0 : index
    %23 = arith.index_cast %22 : i32 to index
    %c1_13 = arith.constant 1 : index
    %c0_14 = arith.constant 0 : index
    %24 = vector.load %arg2[%c0_12, %23, %c1_13, %c0_14] : memref<1x18x18x128xbf16, #tpu.memory_space<vmem>>, vector<1x16x16x128xbf16>
    %25 = vector.shape_cast %24 : vector<1x16x16x128xbf16> to vector<16x16x128xbf16>
    %26 = vector.shape_cast %25 : vector<16x16x128xbf16> to vector<256x128xbf16>
    %c1_i32_15 = arith.constant 1 : i32
    %27 = arith.addi %1, %c1_i32_15 : i32
    %c0_16 = arith.constant 0 : index
    %28 = arith.index_cast %27 : i32 to index
    %c2_17 = arith.constant 2 : index
    %c0_18 = arith.constant 0 : index
    %29 = vector.load %arg2[%c0_16, %28, %c2_17, %c0_18] : memref<1x18x18x128xbf16, #tpu.memory_space<vmem>>, vector<1x16x16x128xbf16>
    %30 = vector.shape_cast %29 : vector<1x16x16x128xbf16> to vector<16x16x128xbf16>
    %31 = vector.shape_cast %30 : vector<16x16x128xbf16> to vector<256x128xbf16>
    %c2_i32 = arith.constant 2 : i32
    %32 = arith.addi %1, %c2_i32 : i32
    %c0_19 = arith.constant 0 : index
    %33 = arith.index_cast %32 : i32 to index
    %c0_20 = arith.constant 0 : index
    %c0_21 = arith.constant 0 : index
    %34 = vector.load %arg2[%c0_19, %33, %c0_20, %c0_21] : memref<1x18x18x128xbf16, #tpu.memory_space<vmem>>, vector<1x16x16x128xbf16>
    %35 = vector.shape_cast %34 : vector<1x16x16x128xbf16> to vector<16x16x128xbf16>
    %36 = vector.shape_cast %35 : vector<16x16x128xbf16> to vector<256x128xbf16>
    %c2_i32_22 = arith.constant 2 : i32
    %37 = arith.addi %1, %c2_i32_22 : i32
    %c0_23 = arith.constant 0 : index
    %38 = arith.index_cast %37 : i32 to index
    %c1_24 = arith.constant 1 : index
    %c0_25 = arith.constant 0 : index
    %39 = vector.load %arg2[%c0_23, %38, %c1_24, %c0_25] : memref<1x18x18x128xbf16, #tpu.memory_space<vmem>>, vector<1x16x16x128xbf16>
    %40 = vector.shape_cast %39 : vector<1x16x16x128xbf16> to vector<16x16x128xbf16>
    %41 = vector.shape_cast %40 : vector<16x16x128xbf16> to vector<256x128xbf16>
    %c2_i32_26 = arith.constant 2 : i32
    %42 = arith.addi %1, %c2_i32_26 : i32
    %c0_27 = arith.constant 0 : index
    %43 = arith.index_cast %42 : i32 to index
    %c2_28 = arith.constant 2 : index
    %c0_29 = arith.constant 0 : index
    %44 = vector.load %arg2[%c0_27, %43, %c2_28, %c0_29] : memref<1x18x18x128xbf16, #tpu.memory_space<vmem>>, vector<1x16x16x128xbf16>
    %45 = vector.shape_cast %44 : vector<1x16x16x128xbf16> to vector<16x16x128xbf16>
    %46 = vector.shape_cast %45 : vector<16x16x128xbf16> to vector<256x128xbf16>
    %47 = tpu.concatenate %6, %11, %16, %21, %26, %31, %36, %41, %46 in 1 : vector<256x128xbf16>, vector<256x128xbf16>, vector<256x128xbf16>, vector<256x128xbf16>, vector<256x128xbf16>, vector<256x128xbf16>, vector<256x128xbf16>, vector<256x128xbf16>, vector<256x128xbf16> -> vector<256x1152xbf16>
    %c0_30 = arith.constant 0 : index
    %c0_31 = arith.constant 0 : index
    %48 = vector.load %arg3[%c0_30, %c0_31] : memref<1152x128xbf16, #tpu.memory_space<vmem>>, vector<1152x128xbf16>
    %cst = arith.constant dense<0.000000e+00> : vector<256x128xf32>
    %49 = tpu.matmul %47, %48, %cst {dimension_numbers = #tpu.dot_dimension_numbers<[1], [0], [0], [1], [0, 0, 1, 1], [], []>} : vector<256x1152xbf16>, vector<1152x128xbf16>, vector<256x128xf32> -> vector<256x128xf32>
    %c0_32 = arith.constant 0 : index
    %c0_33 = arith.constant 0 : index
    %50 = vector.load %arg4[%c0_32, %c0_33] : memref<1x128xf32, #tpu.memory_space<vmem>>, vector<1x128xf32>
    %51 = vector.broadcast %50 : vector<1x128xf32> to vector<256x128xf32>
    %52 = arith.addf %49, %51 : vector<256x128xf32>
    %cst_34 = arith.constant 0.000000e+00 : f32
    %53 = vector.broadcast %cst_34 : f32 to vector<256x128xf32>
    %54 = arith.maximumf %52, %53 : vector<256x128xf32>
    %55 = vector.shape_cast %54 : vector<256x128xf32> to vector<16x16x128xf32>
    %c0_35 = arith.constant 0 : index
    %c0_36 = arith.constant 0 : index
    %c0_37 = arith.constant 0 : index
    %c0_38 = arith.constant 0 : index
    %56 = vector.load %arg5[%c0_35, %c0_36, %c0_37, %c0_38] : memref<1x16x16x128xf32, #tpu.memory_space<vmem>>, vector<1x16x16x128xf32>
    %57 = vector.shape_cast %56 : vector<1x16x16x128xf32> to vector<16x16x128xf32>
    %58 = vector.shape_cast %55 : vector<16x16x128xf32> to vector<1x16x16x128xf32>
    tpu.vector_store %arg5[%c0_35, %c0_36, %c0_37, %c0_38], %58 {strides = array<i32>} : memref<1x16x16x128xf32, #tpu.memory_space<vmem>>, vector<1x16x16x128xf32>,
    return
  }
  func.func @transform_0(%arg0: i32, %arg1: i32) -> (i32, i32, i32, i32) {
    %c0_i32 = arith.constant 0 : i32
    %c0_i32_0 = arith.constant 0 : i32
    %c0_i32_1 = arith.constant 0 : i32
    %c0_i32_2 = arith.constant 0 : i32
    return %arg0, %c0_i32, %c0_i32_0, %c0_i32_1 : i32, i32, i32, i32
  }
  func.func @transform_1(%arg0: i32, %arg1: i32) -> (i32, i32) {
    %c0_i32 = arith.constant 0 : i32
    %c0_i32_0 = arith.constant 0 : i32
    %c0_i32_1 = arith.constant 0 : i32
    return %c0_i32, %c0_i32_0 : i32, i32
  }
  func.func @transform_2(%arg0: i32, %arg1: i32) -> (i32, i32) {
    %c0_i32 = arith.constant 0 : i32
    %c0_i32_0 = arith.constant 0 : i32
    %c0_i32_1 = arith.constant 0 : i32
    return %c0_i32, %c0_i32_0 : i32, i32
  }
  func.func @transform_3(%arg0: i32, %arg1: i32) -> (i32, i32, i32, i32) {
    %c0_i32 = arith.constant 0 : i32
    %c0_i32_0 = arith.constant 0 : i32
    %c0_i32_1 = arith.constant 0 : i32
    return %arg0, %arg1, %c0_i32, %c0_i32_0 : i32, i32, i32, i32
  }
}

</mosaic_0001>

<llo_original>
// kernel: tpu_custom_call.1
$region0: #{tpu_custom_call.1}
  #allocation0 [shape = 'u32[]', space=smem, size = 0x4, offset = 0x4, fixed_abs, tag = 'smem constant byte address 0x4 - core index']
  #allocation1 [shape = 'u32[144,128]{1,0:T(1,128)}', space=vmem, size = 0x12000, scoped, tag = 'internal scratch']
  %s0 = inlined_call_operand.vmem [shape: bf16[2,18,18,128], index: 0, kind: input, shape index: {}]
  %s1 = inlined_call_operand.vmem [shape: bf16[1152,128], index: 1, kind: input, shape index: {}]
  %s2 = inlined_call_operand.vmem [shape: f32[1,128], index: 2, kind: input, shape index: {}]
  %s3 = inlined_call_operand.hbm [shape: f32[2,16,16,128], index: 3, kind: output, shape index: {}]
  %s4 = sld [smem:[#allocation0]]
  $region45: #{tpu_custom_call.1} parent=0
    _
  %s6 = ssub.s32 1, %s4
  %s7 = scalar_select 0, %s6, %s4
  $region1: #{tpu_custom_call.1} parent=0
    #allocation2 [shape = 'u8[262144]{0}', space=vmem, size = 0x40000, scoped, tag = 'output window, operand 0']
    #allocation3 [shape = 's32[2]{0}', space=sflag, size = 0x8, scoped, tag = 'scoped memory for tpu_custom_call.1']
    %8 = vsyncpa [#allocation3], 0
    %s9 = scalar_lea.sflag [#allocation3], 1
    %10 = vsyncpa %s9, 0
    loop: start=0, step=1, limit=4
    $region2: #{tpu_custom_call.1} parent=1 // loop_pre_header
      _
    $region3: #{tpu_custom_call.1} parent=1 // loop_header
      %s12 = sphi 0, %s16
      %p13 = scmp.ge.s32.totalorder %s12, 4
      %s19 = sphi 0, %s31
      %s20 = sphi 0, %s27
      %s21 = sphi 0, %s19
      %s22 = sphi 0, %s20
      %s23 = sphi 0, %s21
      %s24 = sphi 0, %s22
      %s34 = sphi 0, %s36
      %s37 = sphi 0, %s34
      %s38 = sphi 0, %s37
      %s54 = sphi 0, %s38
      %s58 = sphi 0, %s58
      %s60 = sphi 0, %s58
      %s61 = sphi 0, %s60
      %s75 = sphi 0, %s61
      %s79 = sphi 0, %s79
      %s81 = sphi 0, %s79
      %s82 = sphi 0, %s81
      %s96 = sphi 0, %s82
      %s104 = sphi 0, %s106
      %s107 = sphi 0, %s104
      %s108 = sphi 0, %s107
      %s124 = sphi 0, %s108
    $region4: #{tpu_custom_call.1} parent=1 // loop_header_branch
      %15 = sbr.rel (%p13) target = $region8
    $region5: #{tpu_custom_call.1} parent=1 // loop_body
      %s17 = ssub.s32 %s12, 1
      %s18 = ssub.s32 %s12, 2
      %s25 = sadd.s32 1, %s20
      %p26 = scmp.ge.s32.totalorder %s25, 1
      %s27 = scalar_select %p26, 0, %s25
      %s28 = sadd.s32 1, %s19
      %s29 = scalar_select %p26, %s28, %s19
      %p30 = scmp.ge.s32.totalorder %s29, 2
      %s31 = scalar_select %p30, 0, %s29
      %s32 = ssub.s32 %s19, %s31
      %p33 = scmp.eq.s32.totalorder %s32, 0
      %s35 = sadd.s32 %s34, 1
      %s36 = scalar_select %p33, %s34, %s35
      %p39 = pneg %p33
      %p40 = scmp.eq.s32.totalorder %s12, 1
      %p41 = por %p39, %p40
      %p42 = scmp.ne.s32.totalorder %s34, %s37
      %p43 = scmp.eq.s32.totalorder %s12, 0
      %p44 = por %p42, %p43
      %p45 = scmp.ne.s32.totalorder %s34, %s37
      %p46 = scmp.eq.s32.totalorder %s17, 1
      %p47 = por %p45, %p46
      %p48 = scmp.ne.s32.totalorder %s37, %s38
      %p49 = scmp.eq.s32.totalorder %s17, 0
      %p50 = por %p48, %p49
      %p51 = scmp.ne.s32.totalorder %s37, %s38
      %p52 = scmp.eq.s32.totalorder %s18, 1
      %p53 = por %p51, %p52
      %p55 = scmp.ne.s32.totalorder %s38, %s54
      %p56 = scmp.eq.s32.totalorder %s18, 0
      %p57 = por %p55, %p56
      %s59 = sadd.s32 %s58, 1
      %p62 = scmp.eq.s32.totalorder %s12, 1
      %p63 = scmp.ne.s32.totalorder %s58, %s60
      %p64 = scmp.eq.s32.totalorder %s12, 0
      %p65 = por %p63, %p64
      %p66 = scmp.ne.s32.totalorder %s58, %s60
      %p67 = scmp.eq.s32.totalorder %s17, 1
      %p68 = por %p66, %p67
      %p69 = scmp.ne.s32.totalorder %s60, %s61
      %p70 = scmp.eq.s32.totalorder %s17, 0
      %p71 = por %p69, %p70
      %p72 = scmp.ne.s32.totalorder %s60, %s61
      %p73 = scmp.eq.s32.totalorder %s18, 1
      %p74 = por %p72, %p73
      %p76 = scmp.ne.s32.totalorder %s61, %s75
      %p77 = scmp.eq.s32.totalorder %s18, 0
      %p78 = por %p76, %p77
      %s80 = sadd.s32 %s79, 1
      %p83 = scmp.eq.s32.totalorder %s12, 1
      %p84 = scmp.ne.s32.totalorder %s79, %s81
      %p85 = scmp.eq.s32.totalorder %s12, 0
      %p86 = por %p84, %p85
      %p87 = scmp.ne.s32.totalorder %s79, %s81
      %p88 = scmp.eq.s32.totalorder %s17, 1
      %p89 = por %p87, %p88
      %p90 = scmp.ne.s32.totalorder %s81, %s82
      %p91 = scmp.eq.s32.totalorder %s17, 0
      %p92 = por %p90, %p91
      %p93 = scmp.ne.s32.totalorder %s81, %s82
      %p94 = scmp.eq.s32.totalorder %s18, 1
      %p95 = por %p93, %p94
      %p97 = scmp.ne.s32.totalorder %s82, %s96
      %p98 = scmp.eq.s32.totalorder %s18, 0
      %p99 = por %p97, %p98
      %s100 = ssub.s32 %s19, %s31
      %s101 = ssub.s32 %s20, %s27
      %s102 = sor.u32 %s100, %s101
      %p103 = scmp.eq.s32.totalorder %s102, 0
      %s105 = sadd.s32 %s104, 1
      %s106 = scalar_select %p103, %s104, %s105
      %p109 = pneg %p103
      %p110 = scmp.eq.s32.totalorder %s12, 1
      %p111 = por %p109, %p110
      %p112 = scmp.ne.s32.totalorder %s104, %s107
      %p113 = scmp.eq.s32.totalorder %s12, 0
      %p114 = por %p112, %p113
      %p115 = scmp.ne.s32.totalorder %s104, %s107
      %p116 = scmp.eq.s32.totalorder %s17, 1
      %p117 = por %p115, %p116
      %p118 = scmp.ne.s32.totalorder %s107, %s108
      %p119 = scmp.eq.s32.totalorder %s17, 0
      %p120 = por %p118, %p119
      %p121 = scmp.ne.s32.totalorder %s107, %s108
      %p122 = scmp.eq.s32.totalorder %s18, 1
      %p123 = por %p121, %p122
      %p125 = scmp.ne.s32.totalorder %s108, %s124
      %p126 = scmp.eq.s32.totalorder %s18, 0
      %p127 = por %p125, %p126
      %p128 = scmp.le.s32.totalorder 1, %s12
      %p129 = scmp.lt.s32.totalorder %s12, 3
      %p130 = pnand %p128, %p129
      %p131 = pneg %p130
      // Predicated region
      $region9: #{tpu_custom_call.1} parent=5 // pred_check
        _
      $region10: #{tpu_custom_call.1} parent=5 // pred_check_branch
        %133 = sbr.rel (%p130) target = $region12
      $region11: #{tpu_custom_call.1} parent=5 // pred_region
        %s134 = ssub.s32 %s12, 1
        // Predicated region
        $region13: #{tpu_custom_call.1} parent=11 // pred_check
          %p135 = pneg %p71
        $region14: #{tpu_custom_call.1} parent=11 // pred_check_branch
          %137 = sbr.rel (%p135) target = $region16
        $region15: #{tpu_custom_call.1} parent=11 // pred_region
          _
        $region16: #{tpu_custom_call.1} parent=11 // pred_fallthru
          _
        // Predicated region
        $region17: #{tpu_custom_call.1} parent=11 // pred_check
          %p138 = pneg %p92
        $region18: #{tpu_custom_call.1} parent=11 // pred_check_branch
          %140 = sbr.rel (%p138) target = $region20
        $region19: #{tpu_custom_call.1} parent=11 // pred_region
          _
        $region20: #{tpu_custom_call.1} parent=11 // pred_fallthru
          _
      $region12: #{tpu_custom_call.1} parent=5 // pred_fallthru
        _
      %p141 = scmp.lt.s32.totalorder %s12, 2
      // Predicated region
      $region21: #{tpu_custom_call.1} parent=5 // pred_check
        %p142 = pneg %p141
      $region22: #{tpu_custom_call.1} parent=5 // pred_check_branch
        %144 = sbr.rel (%p142) target = $region24
      $region23: #{tpu_custom_call.1} parent=5 // pred_region
        // Predicated region
        $region25: #{tpu_custom_call.1} parent=23 // pred_check
          %p145 = pneg %p44
        $region26: #{tpu_custom_call.1} parent=23 // pred_check_branch
          %147 = sbr.rel (%p145) target = $region28
        $region27: #{tpu_custom_call.1} parent=23 // pred_region
          %p148 = scmp.lt.s32.totalorder %s19, 1
          %s149 = scalar_select %p148, %s19, 1
          %s150 = smul.addr %s149, 54
          %s151 = smul.addr %s150, 4
          %s152 = scalar_lea.vmem %s0, %s151
        $region28: #{tpu_custom_call.1} parent=23 // pred_fallthru
          _
      $region24: #{tpu_custom_call.1} parent=5 // pred_fallthru
        _
      %p153 = scmp.le.s32.totalorder 1, %s12
      %p154 = scmp.lt.s32.totalorder %s12, 3
      %p155 = pnand %p153, %p154
      %p156 = pneg %p155
      // Predicated region
      $region29: #{tpu_custom_call.1} parent=5 // pred_check
        _
      $region30: #{tpu_custom_call.1} parent=5 // pred_check_branch
        %158 = sbr.rel (%p155) target = $region32
      $region31: #{tpu_custom_call.1} parent=5 // pred_region
        %s159 = ssub.s32 %s12, 1
        %p160 = scmp.lt.s32.totalorder %s21, 1
        %s161 = scalar_select %p160, %s21, 1
        %s162 = smul.addr %s161, 54
        %s163 = smul.addr %s162, 4
        %s164 = scalar_lea.vmem %s0, %s163
        %p165 = pneg %p50
        %p166 = pneg %p47
        %p167 = pneg %p71
        %p168 = pneg %p68
        %p169 = pneg %p92
        %p170 = pneg %p89
        %p171 = pneg %p120
        %p172 = pneg %p117
        %s173 = sand.u32 %s107, 1
        %s174 = scalar_lea.sflag [#allocation3], %s173
        %s175 = sand.u32 %s107, 1
        %s176 = smul.addr %s175, 256
        %s177 = scalar_lea.vmem [#allocation2], %s176
        %p178 = scmp.lt.s32.totalorder %s21, 1
        %s179 = scalar_select %p178, %s21, 1
        %s180 = smul.addr %s179, 54
        %s181 = smul.addr %s180, 4
        %s182 = scalar_lea.vmem %s0, %s181
        %s183 = smul.u32 16, %s22
        %s185 = smul.u32 %s22, 16
        %s186 = smul.u32 %s185, 3
        %s187 = smul.addr %s186, 4
        %s188 = scalar_lea.vmem %s182, %s187
        %v189 = vld [vmem:[%s188] sm:$0xf]
        %v190 = vld [vmem:[%s188 + $0x4] sm:$0xf]
        %v191 = vld [vmem:[%s188 + $0xc] sm:$0xf]
        %v192 = vld [vmem:[%s188 + $0x10] sm:$0xf]
        %v193 = vld [vmem:[%s188 + $0x18] sm:$0xf]
        %v194 = vld [vmem:[%s188 + $0x1c] sm:$0xf]
        %v195 = vld [vmem:[%s188 + $0x24] sm:$0xf]
        %v196 = vld [vmem:[%s188 + $0x28] sm:$0xf]
        %v197 = vld [vmem:[%s188 + $0x30] sm:$0xf]
        %v198 = vld [vmem:[%s188 + $0x34] sm:$0xf]
        %v199 = vld [vmem:[%s188 + $0x3c] sm:$0xf]
        %v200 = vld [vmem:[%s188 + $0x40] sm:$0xf]
        %v201 = vld [vmem:[%s188 + $0x48] sm:$0xf]
        %v202 = vld [vmem:[%s188 + $0x4c] sm:$0xf]
        %v203 = vld [vmem:[%s188 + $0x54] sm:$0xf]
        %v204 = vld [vmem:[%s188 + $0x58] sm:$0xf]
        %v205 = vld [vmem:[%s188 + $0x60] sm:$0xf]
        %v206 = vld [vmem:[%s188 + $0x64] sm:$0xf]
        %v207 = vld [vmem:[%s188 + $0x6c] sm:$0xf]
        %v208 = vld [vmem:[%s188 + $0x70] sm:$0xf]
        %v209 = vld [vmem:[%s188 + $0x78] sm:$0xf]
        %v210 = vld [vmem:[%s188 + $0x7c] sm:$0xf]
        %v211 = vld [vmem:[%s188 + $0x84] sm:$0xf]
        %v212 = vld [vmem:[%s188 + $0x88] sm:$0xf]
        %v213 = vld [vmem:[%s188 + $0x90] sm:$0xf]
        %v214 = vld [vmem:[%s188 + $0x94] sm:$0xf]
        %v215 = vld [vmem:[%s188 + $0x9c] sm:$0xf]
        %v216 = vld [vmem:[%s188 + $0xa0] sm:$0xf]
        %v217 = vld [vmem:[%s188 + $0xa8] sm:$0xf]
        %v218 = vld [vmem:[%s188 + $0xac] sm:$0xf]
        %v219 = vld [vmem:[%s188 + $0xb4] sm:$0xf]
        %v220 = vld [vmem:[%s188 + $0xb8] sm:$0xf]
        %v221 = vld [vmem:[%s188 + $0x8] sm:$0x1]
        %v222 = vld [vmem:[%s188 + $0x14] sm:$0x1]
        %v223 = vld [vmem:[%s188 + $0x20] sm:$0x1]
        %v224 = vld [vmem:[%s188 + $0x2c] sm:$0x1]
        %v225 = vld [vmem:[%s188 + $0x38] sm:$0x1]
        %v226 = vld [vmem:[%s188 + $0x44] sm:$0x1]
        %v227 = vld [vmem:[%s188 + $0x50] sm:$0x1]
        %v228 = vld [vmem:[%s188 + $0x5c] sm:$0x1]
        %v229 = vld [vmem:[%s188 + $0x68] sm:$0x1]
        %v230 = vld [vmem:[%s188 + $0x74] sm:$0x1]
        %v231 = vld [vmem:[%s188 + $0x80] sm:$0x1]
        %v232 = vld [vmem:[%s188 + $0x8c] sm:$0x1]
        %v233 = vld [vmem:[%s188 + $0x98] sm:$0x1]
        %v234 = vld [vmem:[%s188 + $0xa4] sm:$0x1]
        %v235 = vld [vmem:[%s188 + $0xb0] sm:$0x1]
        %v236 = vld [vmem:[%s188 + $0xbc] sm:$0x1]
        %vm237 = vsmask.f32 3328
        %vm238 = vsmask.f32 7440
        %vm239 = vmor %vm237, %vm238
        %v241 = vshrl.u32 %v189, 16
        %v243 = vrot.slane %v241, 4
        %v244 = vshll.u32 %v189, 16
        %v246 = vrot.slane %v244, 5
        %v247 = vor.u32 %v243, %v246
        %v248 = vrot.slane %v247, 4
        %v250 = vshll.u32 %v190, 16
        %v252 = vrot.slane %v250, 5
        %v253 = vsel %vm239, %v248, %v252
        %v254 = vshrl.u32 %v190, 16
        %v256 = vrot.slane %v254, 4
        %v257 = vor.u32 %v256, %v252
        %v258 = vrot.slane %v257, 4
        %v260 = vshll.u32 %v221, 16
        %v262 = vrot.slane %v260, 5
        %v263 = vsel %vm239, %v258, %v262
        %v265 = vshrl.u32 %v191, 16
        %v267 = vrot.slane %v265, 4
        %v268 = vshll.u32 %v191, 16
        %v270 = vrot.slane %v268, 5
        %v271 = vor.u32 %v267, %v270
        %v272 = vrot.slane %v271, 4
        %v274 = vshll.u32 %v192, 16
        %v276 = vrot.slane %v274, 5
        %v277 = vsel %vm239, %v272, %v276
        %v278 = vshrl.u32 %v192, 16
        %v280 = vrot.slane %v278, 4
        %v281 = vor.u32 %v280, %v276
        %v282 = vrot.slane %v281, 4
        %v284 = vshll.u32 %v222, 16
        %v286 = vrot.slane %v284, 5
        %v287 = vsel %vm239, %v282, %v286
        %v289 = vshrl.u32 %v193, 16
        %v291 = vrot.slane %v289, 4
        %v292 = vshll.u32 %v193, 16
        %v294 = vrot.slane %v292, 5
        %v295 = vor.u32 %v291, %v294
        %v296 = vrot.slane %v295, 4
        %v298 = vshll.u32 %v194, 16
        %v300 = vrot.slane %v298, 5
        %v301 = vsel %vm239, %v296, %v300
        %v302 = vshrl.u32 %v194, 16
        %v304 = vrot.slane %v302, 4
        %v305 = vor.u32 %v304, %v300
        %v306 = vrot.slane %v305, 4
        %v308 = vshll.u32 %v223, 16
        %v310 = vrot.slane %v308, 5
        %v311 = vsel %vm239, %v306, %v310
        %v313 = vshrl.u32 %v195, 16
        %v315 = vrot.slane %v313, 4
        %v316 = vshll.u32 %v195, 16
        %v318 = vrot.slane %v316, 5
        %v319 = vor.u32 %v315, %v318
        %v320 = vrot.slane %v319, 4
        %v322 = vshll.u32 %v196, 16
        %v324 = vrot.slane %v322, 5
        %v325 = vsel %vm239, %v320, %v324
        %v326 = vshrl.u32 %v196, 16
        %v328 = vrot.slane %v326, 4
        %v329 = vor.u32 %v328, %v324
        %v330 = vrot.slane %v329, 4
        %v332 = vshll.u32 %v224, 16
        %v334 = vrot.slane %v332, 5
        %v335 = vsel %vm239, %v330, %v334
        %v337 = vshrl.u32 %v197, 16
        %v339 = vrot.slane %v337, 4
        %v340 = vshll.u32 %v197, 16
        %v342 = vrot.slane %v340, 5
        %v343 = vor.u32 %v339, %v342
        %v344 = vrot.slane %v343, 4
        %v346 = vshll.u32 %v198, 16
        %v348 = vrot.slane %v346, 5
        %v349 = vsel %vm239, %v344, %v348
        %v350 = vshrl.u32 %v198, 16
        %v352 = vrot.slane %v350, 4
        %v353 = vor.u32 %v352, %v348
        %v354 = vrot.slane %v353, 4
        %v356 = vshll.u32 %v225, 16
        %v358 = vrot.slane %v356, 5
        %v359 = vsel %vm239, %v354, %v358
        %v361 = vshrl.u32 %v199, 16
        %v363 = vrot.slane %v361, 4
        %v364 = vshll.u32 %v199, 16
        %v366 = vrot.slane %v364, 5
        %v367 = vor.u32 %v363, %v366
        %v368 = vrot.slane %v367, 4
        %v370 = vshll.u32 %v200, 16
        %v372 = vrot.slane %v370, 5
        %v373 = vsel %vm239, %v368, %v372
        %v374 = vshrl.u32 %v200, 16
        %v376 = vrot.slane %v374, 4
        %v377 = vor.u32 %v376, %v372
        %v378 = vrot.slane %v377, 4
        %v380 = vshll.u32 %v226, 16
        %v382 = vrot.slane %v380, 5
        %v383 = vsel %vm239, %v378, %v382
        %v385 = vshrl.u32 %v201, 16
        %v387 = vrot.slane %v385, 4
        %v388 = vshll.u32 %v201, 16
        %v390 = vrot.slane %v388, 5
        %v391 = vor.u32 %v387, %v390
        %v392 = vrot.slane %v391, 4
        %v394 = vshll.u32 %v202, 16
        %v396 = vrot.slane %v394, 5
        %v397 = vsel %vm239, %v392, %v396
        %v398 = vshrl.u32 %v202, 16
        %v400 = vrot.slane %v398, 4
        %v401 = vor.u32 %v400, %v396
        %v402 = vrot.slane %v401, 4
        %v404 = vshll.u32 %v227, 16
        %v406 = vrot.slane %v404, 5
        %v407 = vsel %vm239, %v402, %v406
        %v409 = vshrl.u32 %v203, 16
        %v411 = vrot.slane %v409, 4
        %v412 = vshll.u32 %v203, 16
        %v414 = vrot.slane %v412, 5
        %v415 = vor.u32 %v411, %v414
        %v416 = vrot.slane %v415, 4
        %v418 = vshll.u32 %v204, 16
        %v420 = vrot.slane %v418, 5
        %v421 = vsel %vm239, %v416, %v420
        %v422 = vshrl.u32 %v204, 16
        %v424 = vrot.slane %v422, 4
        %v425 = vor.u32 %v424, %v420
        %v426 = vrot.slane %v425, 4
        %v428 = vshll.u32 %v228, 16
        %v430 = vrot.slane %v428, 5
        %v431 = vsel %vm239, %v426, %v430
        %v433 = vshrl.u32 %v205, 16
        %v435 = vrot.slane %v433, 4
        %v436 = vshll.u32 %v205, 16
        %v438 = vrot.slane %v436, 5
        %v439 = vor.u32 %v435, %v438
        %v440 = vrot.slane %v439, 4
        %v442 = vshll.u32 %v206, 16
        %v444 = vrot.slane %v442, 5
        %v445 = vsel %vm239, %v440, %v444
        %v446 = vshrl.u32 %v206, 16
        %v448 = vrot.slane %v446, 4
        %v449 = vor.u32 %v448, %v444
        %v450 = vrot.slane %v449, 4
        %v452 = vshll.u32 %v229, 16
        %v454 = vrot.slane %v452, 5
        %v455 = vsel %vm239, %v450, %v454
        %v457 = vshrl.u32 %v207, 16
        %v459 = vrot.slane %v457, 4
        %v460 = vshll.u32 %v207, 16
        %v462 = vrot.slane %v460, 5
        %v463 = vor.u32 %v459, %v462
        %v464 = vrot.slane %v463, 4
        %v466 = vshll.u32 %v208, 16
        %v468 = vrot.slane %v466, 5
        %v469 = vsel %vm239, %v464, %v468
        %v470 = vshrl.u32 %v208, 16
        %v472 = vrot.slane %v470, 4
        %v473 = vor.u32 %v472, %v468
        %v474 = vrot.slane %v473, 4
        %v476 = vshll.u32 %v230, 16
        %v478 = vrot.slane %v476, 5
        %v479 = vsel %vm239, %v474, %v478
        %v481 = vshrl.u32 %v209, 16
        %v483 = vrot.slane %v481, 4
        %v484 = vshll.u32 %v209, 16
        %v486 = vrot.slane %v484, 5
        %v487 = vor.u32 %v483, %v486
        %v488 = vrot.slane %v487, 4
        %v490 = vshll.u32 %v210, 16
        %v492 = vrot.slane %v490, 5
        %v493 = vsel %vm239, %v488, %v492
        %v494 = vshrl.u32 %v210, 16
        %v496 = vrot.slane %v494, 4
        %v497 = vor.u32 %v496, %v492
        %v498 = vrot.slane %v497, 4
        %v500 = vshll.u32 %v231, 16
        %v502 = vrot.slane %v500, 5
        %v503 = vsel %vm239, %v498, %v502
        %v505 = vshrl.u32 %v211, 16
        %v507 = vrot.slane %v505, 4
        %v508 = vshll.u32 %v211, 16
        %v510 = vrot.slane %v508, 5
        %v511 = vor.u32 %v507, %v510
        %v512 = vrot.slane %v511, 4
        %v514 = vshll.u32 %v212, 16
        %v516 = vrot.slane %v514, 5
        %v517 = vsel %vm239, %v512, %v516
        %v518 = vshrl.u32 %v212, 16
        %v520 = vrot.slane %v518, 4
        %v521 = vor.u32 %v520, %v516
        %v522 = vrot.slane %v521, 4
        %v524 = vshll.u32 %v232, 16
        %v526 = vrot.slane %v524, 5
        %v527 = vsel %vm239, %v522, %v526
        %v529 = vshrl.u32 %v213, 16
        %v531 = vrot.slane %v529, 4
        %v532 = vshll.u32 %v213, 16
        %v534 = vrot.slane %v532, 5
        %v535 = vor.u32 %v531, %v534
        %v536 = vrot.slane %v535, 4
        %v538 = vshll.u32 %v214, 16
        %v540 = vrot.slane %v538, 5
        %v541 = vsel %vm239, %v536, %v540
        %v542 = vshrl.u32 %v214, 16
        %v544 = vrot.slane %v542, 4
        %v545 = vor.u32 %v544, %v540
        %v546 = vrot.slane %v545, 4
        %v548 = vshll.u32 %v233, 16
        %v550 = vrot.slane %v548, 5
        %v551 = vsel %vm239, %v546, %v550
        %v553 = vshrl.u32 %v215, 16
        %v555 = vrot.slane %v553, 4
        %v556 = vshll.u32 %v215, 16
        %v558 = vrot.slane %v556, 5
        %v559 = vor.u32 %v555, %v558
        %v560 = vrot.slane %v559, 4
        %v562 = vshll.u32 %v216, 16
        %v564 = vrot.slane %v562, 5
        %v565 = vsel %vm239, %v560, %v564
        %v566 = vshrl.u32 %v216, 16
        %v568 = vrot.slane %v566, 4
        %v569 = vor.u32 %v568, %v564
        %v570 = vrot.slane %v569, 4
        %v572 = vshll.u32 %v234, 16
        %v574 = vrot.slane %v572, 5
        %v575 = vsel %vm239, %v570, %v574
        %v577 = vshrl.u32 %v217, 16
        %v579 = vrot.slane %v577, 4
        %v580 = vshll.u32 %v217, 16
        %v582 = vrot.slane %v580, 5
        %v583 = vor.u32 %v579, %v582
        %v584 = vrot.slane %v583, 4
        %v586 = vshll.u32 %v218, 16
        %v588 = vrot.slane %v586, 5
        %v589 = vsel %vm239, %v584, %v588
        %v590 = vshrl.u32 %v218, 16
        %v592 = vrot.slane %v590, 4
        %v593 = vor.u32 %v592, %v588
        %v594 = vrot.slane %v593, 4
        %v596 = vshll.u32 %v235, 16
        %v598 = vrot.slane %v596, 5
        %v599 = vsel %vm239, %v594, %v598
        %v601 = vshrl.u32 %v219, 16
        %v603 = vrot.slane %v601, 4
        %v604 = vshll.u32 %v219, 16
        %v606 = vrot.slane %v604, 5
        %v607 = vor.u32 %v603, %v606
        %v608 = vrot.slane %v607, 4
        %v610 = vshll.u32 %v220, 16
        %v612 = vrot.slane %v610, 5
        %v613 = vsel %vm239, %v608, %v612
        %v614 = vshrl.u32 %v220, 16
        %v616 = vrot.slane %v614, 4
        %v617 = vor.u32 %v616, %v612
        %v618 = vrot.slane %v617, 4
        %v620 = vshll.u32 %v236, 16
        %v622 = vrot.slane %v620, 5
        %v623 = vsel %vm239, %v618, %v622
        %v624 = vld [vmem:[%s188] sm:$0xe]
        %v625 = vld [vmem:[%s188 + $0xc] sm:$0xe]
        %v626 = vld [vmem:[%s188 + $0x18] sm:$0xe]
        %v627 = vld [vmem:[%s188 + $0x24] sm:$0xe]
        %v628 = vld [vmem:[%s188 + $0x30] sm:$0xe]
        %v629 = vld [vmem:[%s188 + $0x3c] sm:$0xe]
        %v630 = vld [vmem:[%s188 + $0x48] sm:$0xe]
        %v631 = vld [vmem:[%s188 + $0x54] sm:$0xe]
        %v632 = vld [vmem:[%s188 + $0x60] sm:$0xe]
        %v633 = vld [vmem:[%s188 + $0x6c] sm:$0xe]
        %v634 = vld [vmem:[%s188 + $0x78] sm:$0xe]
        %v635 = vld [vmem:[%s188 + $0x84] sm:$0xe]
        %v636 = vld [vmem:[%s188 + $0x90] sm:$0xe]
        %v637 = vld [vmem:[%s188 + $0x9c] sm:$0xe]
        %v638 = vld [vmem:[%s188 + $0xa8] sm:$0xe]
        %v639 = vld [vmem:[%s188 + $0xb4] sm:$0xe]
        %vm688 = vcmask 1042432
        %vm689 = vcmask 1046532
        %vm690 = vmor %vm688, %vm689
        %v691 = vrot.slane %v624, 5
        %v692 = vrot.slane %v691, 4
        %v693 = vrot.slane %v190, 5
        %v694 = vsel %vm690, %v692, %v693
        %v695 = vrot.slane %v693, 4
        %v696 = vrot.slane %v221, 5
        %v697 = vsel %vm690, %v695, %v696
        %v698 = vrot.slane %v625, 5
        %v699 = vrot.slane %v698, 4
        %v700 = vrot.slane %v192, 5
        %v701 = vsel %vm690, %v699, %v700
        %v702 = vrot.slane %v700, 4
        %v703 = vrot.slane %v222, 5
        %v704 = vsel %vm690, %v702, %v703
        %v705 = vrot.slane %v626, 5
        %v706 = vrot.slane %v705, 4
        %v707 = vrot.slane %v194, 5
        %v708 = vsel %vm690, %v706, %v707
        %v709 = vrot.slane %v707, 4
        %v710 = vrot.slane %v223, 5
        %v711 = vsel %vm690, %v709, %v710
        %v712 = vrot.slane %v627, 5
        %v713 = vrot.slane %v712, 4
        %v714 = vrot.slane %v196, 5
        %v715 = vsel %vm690, %v713, %v714
        %v716 = vrot.slane %v714, 4
        %v717 = vrot.slane %v224, 5
        %v718 = vsel %vm690, %v716, %v717
        %v719 = vrot.slane %v628, 5
        %v720 = vrot.slane %v719, 4
        %v721 = vrot.slane %v198, 5
        %v722 = vsel %vm690, %v720, %v721
        %v723 = vrot.slane %v721, 4
        %v724 = vrot.slane %v225, 5
        %v725 = vsel %vm690, %v723, %v724
        %v726 = vrot.slane %v629, 5
        %v727 = vrot.slane %v726, 4
        %v728 = vrot.slane %v200, 5
        %v729 = vsel %vm690, %v727, %v728
        %v730 = vrot.slane %v728, 4
        %v731 = vrot.slane %v226, 5
        %v732 = vsel %vm690, %v730, %v731
        %v733 = vrot.slane %v630, 5
        %v734 = vrot.slane %v733, 4
        %v735 = vrot.slane %v202, 5
        %v736 = vsel %vm690, %v734, %v735
        %v737 = vrot.slane %v735, 4
        %v738 = vrot.slane %v227, 5
        %v739 = vsel %vm690, %v737, %v738
        %v740 = vrot.slane %v631, 5
        %v741 = vrot.slane %v740, 4
        %v742 = vrot.slane %v204, 5
        %v743 = vsel %vm690, %v741, %v742
        %v744 = vrot.slane %v742, 4
        %v745 = vrot.slane %v228, 5
        %v746 = vsel %vm690, %v744, %v745
        %v747 = vrot.slane %v632, 5
        %v748 = vrot.slane %v747, 4
        %v749 = vrot.slane %v206, 5
        %v750 = vsel %vm690, %v748, %v749
        %v751 = vrot.slane %v749, 4
        %v752 = vrot.slane %v229, 5
        %v753 = vsel %vm690, %v751, %v752
        %v754 = vrot.slane %v633, 5
        %v755 = vrot.slane %v754, 4
        %v756 = vrot.slane %v208, 5
        %v757 = vsel %vm690, %v755, %v756
        %v758 = vrot.slane %v756, 4
        %v759 = vrot.slane %v230, 5
        %v760 = vsel %vm690, %v758, %v759
        %v761 = vrot.slane %v634, 5
        %v762 = vrot.slane %v761, 4
        %v763 = vrot.slane %v210, 5
        %v764 = vsel %vm690, %v762, %v763
        %v765 = vrot.slane %v763, 4
        %v766 = vrot.slane %v231, 5
        %v767 = vsel %vm690, %v765, %v766
        %v768 = vrot.slane %v635, 5
        %v769 = vrot.slane %v768, 4
        %v770 = vrot.slane %v212, 5
        %v771 = vsel %vm690, %v769, %v770
        %v772 = vrot.slane %v770, 4
        %v773 = vrot.slane %v232, 5
        %v774 = vsel %vm690, %v772, %v773
        %v775 = vrot.slane %v636, 5
        %v776 = vrot.slane %v775, 4
        %v777 = vrot.slane %v214, 5
        %v778 = vsel %vm690, %v776, %v777
        %v779 = vrot.slane %v777, 4
        %v780 = vrot.slane %v233, 5
        %v781 = vsel %vm690, %v779, %v780
        %v782 = vrot.slane %v637, 5
        %v783 = vrot.slane %v782, 4
        %v784 = vrot.slane %v216, 5
        %v785 = vsel %vm690, %v783, %v784
        %v786 = vrot.slane %v784, 4
        %v787 = vrot.slane %v234, 5
        %v788 = vsel %vm690, %v786, %v787
        %v789 = vrot.slane %v638, 5
        %v790 = vrot.slane %v789, 4
        %v791 = vrot.slane %v218, 5
        %v792 = vsel %vm690, %v790, %v791
        %v793 = vrot.slane %v791, 4
        %v794 = vrot.slane %v235, 5
        %v795 = vsel %vm690, %v793, %v794
        %v796 = vrot.slane %v639, 5
        %v797 = vrot.slane %v796, 4
        %v798 = vrot.slane %v220, 5
        %v799 = vsel %vm690, %v797, %v798
        %v800 = vrot.slane %v798, 4
        %v801 = vrot.slane %v236, 5
        %v802 = vsel %vm690, %v800, %v801
        %s803 = sadd.s32 %s185, 1
        %s804 = smul.u32 %s803, 3
        %s805 = smul.addr %s804, 4
        %s806 = scalar_lea.vmem %s182, %s805
        %v807 = vld [vmem:[%s806] sm:$0xf]
        %v808 = vld [vmem:[%s806 + $0x4] sm:$0xf]
        %v809 = vld [vmem:[%s806 + $0xc] sm:$0xf]
        %v810 = vld [vmem:[%s806 + $0x10] sm:$0xf]
        %v811 = vld [vmem:[%s806 + $0x18] sm:$0xf]
        %v812 = vld [vmem:[%s806 + $0x1c] sm:$0xf]
        %v813 = vld [vmem:[%s806 + $0x24] sm:$0xf]
        %v814 = vld [vmem:[%s806 + $0x28] sm:$0xf]
        %v815 = vld [vmem:[%s806 + $0x30] sm:$0xf]
        %v816 = vld [vmem:[%s806 + $0x34] sm:$0xf]
        %v817 = vld [vmem:[%s806 + $0x3c] sm:$0xf]
        %v818 = vld [vmem:[%s806 + $0x40] sm:$0xf]
        %v819 = vld [vmem:[%s806 + $0x48] sm:$0xf]
        %v820 = vld [vmem:[%s806 + $0x4c] sm:$0xf]
        %v821 = vld [vmem:[%s806 + $0x54] sm:$0xf]
        %v822 = vld [vmem:[%s806 + $0x58] sm:$0xf]
        %v823 = vld [vmem:[%s806 + $0x60] sm:$0xf]
        %v824 = vld [vmem:[%s806 + $0x64] sm:$0xf]
        %v825 = vld [vmem:[%s806 + $0x6c] sm:$0xf]
        %v826 = vld [vmem:[%s806 + $0x70] sm:$0xf]
        %v827 = vld [vmem:[%s806 + $0x78] sm:$0xf]
        %v828 = vld [vmem:[%s806 + $0x7c] sm:$0xf]
        %v829 = vld [vmem:[%s806 + $0x84] sm:$0xf]
        %v830 = vld [vmem:[%s806 + $0x88] sm:$0xf]
        %v831 = vld [vmem:[%s806 + $0x90] sm:$0xf]
        %v832 = vld [vmem:[%s806 + $0x94] sm:$0xf]
        %v833 = vld [vmem:[%s806 + $0x9c] sm:$0xf]
        %v834 = vld [vmem:[%s806 + $0xa0] sm:$0xf]
        %v835 = vld [vmem:[%s806 + $0xa8] sm:$0xf]
        %v836 = vld [vmem:[%s806 + $0xac] sm:$0xf]
        %v837 = vld [vmem:[%s806 + $0xb4] sm:$0xf]
        %v838 = vld [vmem:[%s806 + $0xb8] sm:$0xf]
        %v839 = vld [vmem:[%s806 + $0x8] sm:$0x1]
        %v840 = vld [vmem:[%s806 + $0x14] sm:$0x1]
        %v841 = vld [vmem:[%s806 + $0x20] sm:$0x1]
        %v842 = vld [vmem:[%s806 + $0x2c] sm:$0x1]
        %v843 = vld [vmem:[%s806 + $0x38] sm:$0x1]
        %v844 = vld [vmem:[%s806 + $0x44] sm:$0x1]
        %v845 = vld [vmem:[%s806 + $0x50] sm:$0x1]
        %v846 = vld [vmem:[%s806 + $0x5c] sm:$0x1]
        %v847 = vld [vmem:[%s806 + $0x68] sm:$0x1]
        %v848 = vld [vmem:[%s806 + $0x74] sm:$0x1]
        %v849 = vld [vmem:[%s806 + $0x80] sm:$0x1]
        %v850 = vld [vmem:[%s806 + $0x8c] sm:$0x1]
        %v851 = vld [vmem:[%s806 + $0x98] sm:$0x1]
        %v852 = vld [vmem:[%s806 + $0xa4] sm:$0x1]
        %v853 = vld [vmem:[%s806 + $0xb0] sm:$0x1]
        %v854 = vld [vmem:[%s806 + $0xbc] sm:$0x1]
        %v856 = vshrl.u32 %v807, 16
        %v858 = vrot.slane %v856, 4
        %v859 = vshll.u32 %v807, 16
        %v861 = vrot.slane %v859, 5
        %v862 = vor.u32 %v858, %v861
        %v863 = vrot.slane %v862, 4
        %v865 = vshll.u32 %v808, 16
        %v867 = vrot.slane %v865, 5
        %v868 = vsel %vm239, %v863, %v867
        %v869 = vshrl.u32 %v808, 16
        %v871 = vrot.slane %v869, 4
        %v872 = vor.u32 %v871, %v867
        %v873 = vrot.slane %v872, 4
        %v875 = vshll.u32 %v839, 16
        %v877 = vrot.slane %v875, 5
        %v878 = vsel %vm239, %v873, %v877
        %v880 = vshrl.u32 %v809, 16
        %v882 = vrot.slane %v880, 4
        %v883 = vshll.u32 %v809, 16
        %v885 = vrot.slane %v883, 5
        %v886 = vor.u32 %v882, %v885
        %v887 = vrot.slane %v886, 4
        %v889 = vshll.u32 %v810, 16
        %v891 = vrot.slane %v889, 5
        %v892 = vsel %vm239, %v887, %v891
        %v893 = vshrl.u32 %v810, 16
        %v895 = vrot.slane %v893, 4
        %v896 = vor.u32 %v895, %v891
        %v897 = vrot.slane %v896, 4
        %v899 = vshll.u32 %v840, 16
        %v901 = vrot.slane %v899, 5
        %v902 = vsel %vm239, %v897, %v901
        %v904 = vshrl.u32 %v811, 16
        %v906 = vrot.slane %v904, 4
        %v907 = vshll.u32 %v811, 16
        %v909 = vrot.slane %v907, 5
        %v910 = vor.u32 %v906, %v909
        %v911 = vrot.slane %v910, 4
        %v913 = vshll.u32 %v812, 16
        %v915 = vrot.slane %v913, 5
        %v916 = vsel %vm239, %v911, %v915
        %v917 = vshrl.u32 %v812, 16
        %v919 = vrot.slane %v917, 4
        %v920 = vor.u32 %v919, %v915
        %v921 = vrot.slane %v920, 4
        %v923 = vshll.u32 %v841, 16
        %v925 = vrot.slane %v923, 5
        %v926 = vsel %vm239, %v921, %v925
        %v928 = vshrl.u32 %v813, 16
        %v930 = vrot.slane %v928, 4
        %v931 = vshll.u32 %v813, 16
        %v933 = vrot.slane %v931, 5
        %v934 = vor.u32 %v930, %v933
        %v935 = vrot.slane %v934, 4
        %v937 = vshll.u32 %v814, 16
        %v939 = vrot.slane %v937, 5
        %v940 = vsel %vm239, %v935, %v939
        %v941 = vshrl.u32 %v814, 16
        %v943 = vrot.slane %v941, 4
        %v944 = vor.u32 %v943, %v939
        %v945 = vrot.slane %v944, 4
        %v947 = vshll.u32 %v842, 16
        %v949 = vrot.slane %v947, 5
        %v950 = vsel %vm239, %v945, %v949
        %v952 = vshrl.u32 %v815, 16
        %v954 = vrot.slane %v952, 4
        %v955 = vshll.u32 %v815, 16
        %v957 = vrot.slane %v955, 5
        %v958 = vor.u32 %v954, %v957
        %v959 = vrot.slane %v958, 4
        %v961 = vshll.u32 %v816, 16
        %v963 = vrot.slane %v961, 5
        %v964 = vsel %vm239, %v959, %v963
        %v965 = vshrl.u32 %v816, 16
        %v967 = vrot.slane %v965, 4
        %v968 = vor.u32 %v967, %v963
        %v969 = vrot.slane %v968, 4
        %v971 = vshll.u32 %v843, 16
        %v973 = vrot.slane %v971, 5
        %v974 = vsel %vm239, %v969, %v973
        %v976 = vshrl.u32 %v817, 16
        %v978 = vrot.slane %v976, 4
        %v979 = vshll.u32 %v817, 16
        %v981 = vrot.slane %v979, 5
        %v982 = vor.u32 %v978, %v981
        %v983 = vrot.slane %v982, 4
        %v985 = vshll.u32 %v818, 16
        %v987 = vrot.slane %v985, 5
        %v988 = vsel %vm239, %v983, %v987
        %v989 = vshrl.u32 %v818, 16
        %v991 = vrot.slane %v989, 4
        %v992 = vor.u32 %v991, %v987
        %v993 = vrot.slane %v992, 4
        %v995 = vshll.u32 %v844, 16
        %v997 = vrot.slane %v995, 5
        %v998 = vsel %vm239, %v993, %v997
        %v1000 = vshrl.u32 %v819, 16
        %v1002 = vrot.slane %v1000, 4
        %v1003 = vshll.u32 %v819, 16
        %v1005 = vrot.slane %v1003, 5
        %v1006 = vor.u32 %v1002, %v1005
        %v1007 = vrot.slane %v1006, 4
        %v1009 = vshll.u32 %v820, 16
        %v1011 = vrot.slane %v1009, 5
        %v1012 = vsel %vm239, %v1007, %v1011
        %v1013 = vshrl.u32 %v820, 16
        %v1015 = vrot.slane %v1013, 4
        %v1016 = vor.u32 %v1015, %v1011
        %v1017 = vrot.slane %v1016, 4
        %v1019 = vshll.u32 %v845, 16
        %v1021 = vrot.slane %v1019, 5
        %v1022 = vsel %vm239, %v1017, %v1021
        %v1024 = vshrl.u32 %v821, 16
        %v1026 = vrot.slane %v1024, 4
        %v1027 = vshll.u32 %v821, 16
        %v1029 = vrot.slane %v1027, 5
        %v1030 = vor.u32 %v1026, %v1029
        %v1031 = vrot.slane %v1030, 4
        %v1033 = vshll.u32 %v822, 16
        %v1035 = vrot.slane %v1033, 5
        %v1036 = vsel %vm239, %v1031, %v1035
        %v1037 = vshrl.u32 %v822, 16
        %v1039 = vrot.slane %v1037, 4
        %v1040 = vor.u32 %v1039, %v1035
        %v1041 = vrot.slane %v1040, 4
        %v1043 = vshll.u32 %v846, 16
        %v1045 = vrot.slane %v1043, 5
        %v1046 = vsel %vm239, %v1041, %v1045
        %v1048 = vshrl.u32 %v823, 16
        %v1050 = vrot.slane %v1048, 4
        %v1051 = vshll.u32 %v823, 16
        %v1053 = vrot.slane %v1051, 5
        %v1054 = vor.u32 %v1050, %v1053
        %v1055 = vrot.slane %v1054, 4
        %v1057 = vshll.u32 %v824, 16
        %v1059 = vrot.slane %v1057, 5
        %v1060 = vsel %vm239, %v1055, %v1059
        %v1061 = vshrl.u32 %v824, 16
        %v1063 = vrot.slane %v1061, 4
        %v1064 = vor.u32 %v1063, %v1059
        %v1065 = vrot.slane %v1064, 4
        %v1067 = vshll.u32 %v847, 16
        %v1069 = vrot.slane %v1067, 5
        %v1070 = vsel %vm239, %v1065, %v1069
        %v1072 = vshrl.u32 %v825, 16
        %v1074 = vrot.slane %v1072, 4
        %v1075 = vshll.u32 %v825, 16
        %v1077 = vrot.slane %v1075, 5
        %v1078 = vor.u32 %v1074, %v1077
        %v1079 = vrot.slane %v1078, 4
        %v1081 = vshll.u32 %v826, 16
        %v1083 = vrot.slane %v1081, 5
        %v1084 = vsel %vm239, %v1079, %v1083
        %v1085 = vshrl.u32 %v826, 16
        %v1087 = vrot.slane %v1085, 4
        %v1088 = vor.u32 %v1087, %v1083
        %v1089 = vrot.slane %v1088, 4
        %v1091 = vshll.u32 %v848, 16
        %v1093 = vrot.slane %v1091, 5
        %v1094 = vsel %vm239, %v1089, %v1093
        %v1096 = vshrl.u32 %v827, 16
        %v1098 = vrot.slane %v1096, 4
        %v1099 = vshll.u32 %v827, 16
        %v1101 = vrot.slane %v1099, 5
        %v1102 = vor.u32 %v1098, %v1101
        %v1103 = vrot.slane %v1102, 4
        %v1105 = vshll.u32 %v828, 16
        %v1107 = vrot.slane %v1105, 5
        %v1108 = vsel %vm239, %v1103, %v1107
        %v1109 = vshrl.u32 %v828, 16
        %v1111 = vrot.slane %v1109, 4
        %v1112 = vor.u32 %v1111, %v1107
        %v1113 = vrot.slane %v1112, 4
        %v1115 = vshll.u32 %v849, 16
        %v1117 = vrot.slane %v1115, 5
        %v1118 = vsel %vm239, %v1113, %v1117
        %v1120 = vshrl.u32 %v829, 16
        %v1122 = vrot.slane %v1120, 4
        %v1123 = vshll.u32 %v829, 16
        %v1125 = vrot.slane %v1123, 5
        %v1126 = vor.u32 %v1122, %v1125
        %v1127 = vrot.slane %v1126, 4
        %v1129 = vshll.u32 %v830, 16
        %v1131 = vrot.slane %v1129, 5
        %v1132 = vsel %vm239, %v1127, %v1131
        %v1133 = vshrl.u32 %v830, 16
        %v1135 = vrot.slane %v1133, 4
        %v1136 = vor.u32 %v1135, %v1131
        %v1137 = vrot.slane %v1136, 4
        %v1139 = vshll.u32 %v850, 16
        %v1141 = vrot.slane %v1139, 5
        %v1142 = vsel %vm239, %v1137, %v1141
        %v1144 = vshrl.u32 %v831, 16
        %v1146 = vrot.slane %v1144, 4
        %v1147 = vshll.u32 %v831, 16
        %v1149 = vrot.slane %v1147, 5
        %v1150 = vor.u32 %v1146, %v1149
        %v1151 = vrot.slane %v1150, 4
        %v1153 = vshll.u32 %v832, 16
        %v1155 = vrot.slane %v1153, 5
        %v1156 = vsel %vm239, %v1151, %v1155
        %v1157 = vshrl.u32 %v832, 16
        %v1159 = vrot.slane %v1157, 4
        %v1160 = vor.u32 %v1159, %v1155
        %v1161 = vrot.slane %v1160, 4
        %v1163 = vshll.u32 %v851, 16
        %v1165 = vrot.slane %v1163, 5
        %v1166 = vsel %vm239, %v1161, %v1165
        %v1168 = vshrl.u32 %v833, 16
        %v1170 = vrot.slane %v1168, 4
        %v1171 = vshll.u32 %v833, 16
        %v1173 = vrot.slane %v1171, 5
        %v1174 = vor.u32 %v1170, %v1173
        %v1175 = vrot.slane %v1174, 4
        %v1177 = vshll.u32 %v834, 16
        %v1179 = vrot.slane %v1177, 5
        %v1180 = vsel %vm239, %v1175, %v1179
        %v1181 = vshrl.u32 %v834, 16
        %v1183 = vrot.slane %v1181, 4
        %v1184 = vor.u32 %v1183, %v1179
        %v1185 = vrot.slane %v1184, 4
        %v1187 = vshll.u32 %v852, 16
        %v1189 = vrot.slane %v1187, 5
        %v1190 = vsel %vm239, %v1185, %v1189
        %v1192 = vshrl.u32 %v835, 16
        %v1194 = vrot.slane %v1192, 4
        %v1195 = vshll.u32 %v835, 16
        %v1197 = vrot.slane %v1195, 5
        %v1198 = vor.u32 %v1194, %v1197
        %v1199 = vrot.slane %v1198, 4
        %v1201 = vshll.u32 %v836, 16
        %v1203 = vrot.slane %v1201, 5
        %v1204 = vsel %vm239, %v1199, %v1203
        %v1205 = vshrl.u32 %v836, 16
        %v1207 = vrot.slane %v1205, 4
        %v1208 = vor.u32 %v1207, %v1203
        %v1209 = vrot.slane %v1208, 4
        %v1211 = vshll.u32 %v853, 16
        %v1213 = vrot.slane %v1211, 5
        %v1214 = vsel %vm239, %v1209, %v1213
        %v1216 = vshrl.u32 %v837, 16
        %v1218 = vrot.slane %v1216, 4
        %v1219 = vshll.u32 %v837, 16
        %v1221 = vrot.slane %v1219, 5
        %v1222 = vor.u32 %v1218, %v1221
        %v1223 = vrot.slane %v1222, 4
        %v1225 = vshll.u32 %v838, 16
        %v1227 = vrot.slane %v1225, 5
        %v1228 = vsel %vm239, %v1223, %v1227
        %v1229 = vshrl.u32 %v838, 16
        %v1231 = vrot.slane %v1229, 4
        %v1232 = vor.u32 %v1231, %v1227
        %v1233 = vrot.slane %v1232, 4
        %v1235 = vshll.u32 %v854, 16
        %v1237 = vrot.slane %v1235, 5
        %v1238 = vsel %vm239, %v1233, %v1237
        %v1239 = vld [vmem:[%s806] sm:$0xe]
        %v1240 = vld [vmem:[%s806 + $0xc] sm:$0xe]
        %v1241 = vld [vmem:[%s806 + $0x18] sm:$0xe]
        %v1242 = vld [vmem:[%s806 + $0x24] sm:$0xe]
        %v1243 = vld [vmem:[%s806 + $0x30] sm:$0xe]
        %v1244 = vld [vmem:[%s806 + $0x3c] sm:$0xe]
        %v1245 = vld [vmem:[%s806 + $0x48] sm:$0xe]
        %v1246 = vld [vmem:[%s806 + $0x54] sm:$0xe]
        %v1247 = vld [vmem:[%s806 + $0x60] sm:$0xe]
        %v1248 = vld [vmem:[%s806 + $0x6c] sm:$0xe]
        %v1249 = vld [vmem:[%s806 + $0x78] sm:$0xe]
        %v1250 = vld [vmem:[%s806 + $0x84] sm:$0xe]
        %v1251 = vld [vmem:[%s806 + $0x90] sm:$0xe]
        %v1252 = vld [vmem:[%s806 + $0x9c] sm:$0xe]
        %v1253 = vld [vmem:[%s806 + $0xa8] sm:$0xe]
        %v1254 = vld [vmem:[%s806 + $0xb4] sm:$0xe]
        %v1303 = vrot.slane %v1239, 5
        %v1304 = vrot.slane %v1303, 4
        %v1305 = vrot.slane %v808, 5
        %v1306 = vsel %vm690, %v1304, %v1305
        %v1307 = vrot.slane %v1305, 4
        %v1308 = vrot.slane %v839, 5
        %v1309 = vsel %vm690, %v1307, %v1308
        %v1310 = vrot.slane %v1240, 5
        %v1311 = vrot.slane %v1310, 4
        %v1312 = vrot.slane %v810, 5
        %v1313 = vsel %vm690, %v1311, %v1312
        %v1314 = vrot.slane %v1312, 4
        %v1315 = vrot.slane %v840, 5
        %v1316 = vsel %vm690, %v1314, %v1315
        %v1317 = vrot.slane %v1241, 5
        %v1318 = vrot.slane %v1317, 4
        %v1319 = vrot.slane %v812, 5
        %v1320 = vsel %vm690, %v1318, %v1319
        %v1321 = vrot.slane %v1319, 4
        %v1322 = vrot.slane %v841, 5
        %v1323 = vsel %vm690, %v1321, %v1322
        %v1324 = vrot.slane %v1242, 5
        %v1325 = vrot.slane %v1324, 4
        %v1326 = vrot.slane %v814, 5
        %v1327 = vsel %vm690, %v1325, %v1326
        %v1328 = vrot.slane %v1326, 4
        %v1329 = vrot.slane %v842, 5
        %v1330 = vsel %vm690, %v1328, %v1329
        %v1331 = vrot.slane %v1243, 5
        %v1332 = vrot.slane %v1331, 4
        %v1333 = vrot.slane %v816, 5
        %v1334 = vsel %vm690, %v1332, %v1333
        %v1335 = vrot.slane %v1333, 4
        %v1336 = vrot.slane %v843, 5
        %v1337 = vsel %vm690, %v1335, %v1336
        %v1338 = vrot.slane %v1244, 5
        %v1339 = vrot.slane %v1338, 4
        %v1340 = vrot.slane %v818, 5
        %v1341 = vsel %vm690, %v1339, %v1340
        %v1342 = vrot.slane %v1340, 4
        %v1343 = vrot.slane %v844, 5
        %v1344 = vsel %vm690, %v1342, %v1343
        %v1345 = vrot.slane %v1245, 5
        %v1346 = vrot.slane %v1345, 4
        %v1347 = vrot.slane %v820, 5
        %v1348 = vsel %vm690, %v1346, %v1347
        %v1349 = vrot.slane %v1347, 4
        %v1350 = vrot.slane %v845, 5
        %v1351 = vsel %vm690, %v1349, %v1350
        %v1352 = vrot.slane %v1246, 5
        %v1353 = vrot.slane %v1352, 4
        %v1354 = vrot.slane %v822, 5
        %v1355 = vsel %vm690, %v1353, %v1354
        %v1356 = vrot.slane %v1354, 4
        %v1357 = vrot.slane %v846, 5
        %v1358 = vsel %vm690, %v1356, %v1357
        %v1359 = vrot.slane %v1247, 5
        %v1360 = vrot.slane %v1359, 4
        %v1361 = vrot.slane %v824, 5
        %v1362 = vsel %vm690, %v1360, %v1361
        %v1363 = vrot.slane %v1361, 4
        %v1364 = vrot.slane %v847, 5
        %v1365 = vsel %vm690, %v1363, %v1364
        %v1366 = vrot.slane %v1248, 5
        %v1367 = vrot.slane %v1366, 4
        %v1368 = vrot.slane %v826, 5
        %v1369 = vsel %vm690, %v1367, %v1368
        %v1370 = vrot.slane %v1368, 4
        %v1371 = vrot.slane %v848, 5
        %v1372 = vsel %vm690, %v1370, %v1371
        %v1373 = vrot.slane %v1249, 5
        %v1374 = vrot.slane %v1373, 4
        %v1375 = vrot.slane %v828, 5
        %v1376 = vsel %vm690, %v1374, %v1375
        %v1377 = vrot.slane %v1375, 4
        %v1378 = vrot.slane %v849, 5
        %v1379 = vsel %vm690, %v1377, %v1378
        %v1380 = vrot.slane %v1250, 5
        %v1381 = vrot.slane %v1380, 4
        %v1382 = vrot.slane %v830, 5
        %v1383 = vsel %vm690, %v1381, %v1382
        %v1384 = vrot.slane %v1382, 4
        %v1385 = vrot.slane %v850, 5
        %v1386 = vsel %vm690, %v1384, %v1385
        %v1387 = vrot.slane %v1251, 5
        %v1388 = vrot.slane %v1387, 4
        %v1389 = vrot.slane %v832, 5
        %v1390 = vsel %vm690, %v1388, %v1389
        %v1391 = vrot.slane %v1389, 4
        %v1392 = vrot.slane %v851, 5
        %v1393 = vsel %vm690, %v1391, %v1392
        %v1394 = vrot.slane %v1252, 5
        %v1395 = vrot.slane %v1394, 4
        %v1396 = vrot.slane %v834, 5
        %v1397 = vsel %vm690, %v1395, %v1396
        %v1398 = vrot.slane %v1396, 4
        %v1399 = vrot.slane %v852, 5
        %v1400 = vsel %vm690, %v1398, %v1399
        %v1401 = vrot.slane %v1253, 5
        %v1402 = vrot.slane %v1401, 4
        %v1403 = vrot.slane %v836, 5
        %v1404 = vsel %vm690, %v1402, %v1403
        %v1405 = vrot.slane %v1403, 4
        %v1406 = vrot.slane %v853, 5
        %v1407 = vsel %vm690, %v1405, %v1406
        %v1408 = vrot.slane %v1254, 5
        %v1409 = vrot.slane %v1408, 4
        %v1410 = vrot.slane %v838, 5
        %v1411 = vsel %vm690, %v1409, %v1410
        %v1412 = vrot.slane %v1410, 4
        %v1413 = vrot.slane %v854, 5
        %v1414 = vsel %vm690, %v1412, %v1413
        %s1415 = sadd.s32 %s185, 2
        %s1416 = smul.u32 %s1415, 3
        %s1417 = smul.addr %s1416, 4
        %s1418 = scalar_lea.vmem %s182, %s1417
        %v1419 = vld [vmem:[%s1418] sm:$0xf]
        %v1420 = vld [vmem:[%s1418 + $0x4] sm:$0xf]
        %v1421 = vld [vmem:[%s1418 + $0xc] sm:$0xf]
        %v1422 = vld [vmem:[%s1418 + $0x10] sm:$0xf]
        %v1423 = vld [vmem:[%s1418 + $0x18] sm:$0xf]
        %v1424 = vld [vmem:[%s1418 + $0x1c] sm:$0xf]
        %v1425 = vld [vmem:[%s1418 + $0x24] sm:$0xf]
        %v1426 = vld [vmem:[%s1418 + $0x28] sm:$0xf]
        %v1427 = vld [vmem:[%s1418 + $0x30] sm:$0xf]
        %v1428 = vld [vmem:[%s1418 + $0x34] sm:$0xf]
        %v1429 = vld [vmem:[%s1418 + $0x3c] sm:$0xf]
        %v1430 = vld [vmem:[%s1418 + $0x40] sm:$0xf]
        %v1431 = vld [vmem:[%s1418 + $0x48] sm:$0xf]
        %v1432 = vld [vmem:[%s1418 + $0x4c] sm:$0xf]
        %v1433 = vld [vmem:[%s1418 + $0x54] sm:$0xf]
        %v1434 = vld [vmem:[%s1418 + $0x58] sm:$0xf]
        %v1435 = vld [vmem:[%s1418 + $0x60] sm:$0xf]
        %v1436 = vld [vmem:[%s1418 + $0x64] sm:$0xf]
        %v1437 = vld [vmem:[%s1418 + $0x6c] sm:$0xf]
        %v1438 = vld [vmem:[%s1418 + $0x70] sm:$0xf]
        %v1439 = vld [vmem:[%s1418 + $0x78] sm:$0xf]
        %v1440 = vld [vmem:[%s1418 + $0x7c] sm:$0xf]
        %v1441 = vld [vmem:[%s1418 + $0x84] sm:$0xf]
        %v1442 = vld [vmem:[%s1418 + $0x88] sm:$0xf]
        %v1443 = vld [vmem:[%s1418 + $0x90] sm:$0xf]
        %v1444 = vld [vmem:[%s1418 + $0x94] sm:$0xf]
        %v1445 = vld [vmem:[%s1418 + $0x9c] sm:$0xf]
        %v1446 = vld [vmem:[%s1418 + $0xa0] sm:$0xf]
        %v1447 = vld [vmem:[%s1418 + $0xa8] sm:$0xf]
        %v1448 = vld [vmem:[%s1418 + $0xac] sm:$0xf]
        %v1449 = vld [vmem:[%s1418 + $0xb4] sm:$0xf]
        %v1450 = vld [vmem:[%s1418 + $0xb8] sm:$0xf]
        %v1451 = vld [vmem:[%s1418 + $0x8] sm:$0x1]
        %v1452 = vld [vmem:[%s1418 + $0x14] sm:$0x1]
        %v1453 = vld [vmem:[%s1418 + $0x20] sm:$0x1]
        %v1454 = vld [vmem:[%s1418 + $0x2c] sm:$0x1]
        %v1455 = vld [vmem:[%s1418 + $0x38] sm:$0x1]
        %v1456 = vld [vmem:[%s1418 + $0x44] sm:$0x1]
        %v1457 = vld [vmem:[%s1418 + $0x50] sm:$0x1]
        %v1458 = vld [vmem:[%s1418 + $0x5c] sm:$0x1]
        %v1459 = vld [vmem:[%s1418 + $0x68] sm:$0x1]
        %v1460 = vld [vmem:[%s1418 + $0x74] sm:$0x1]
        %v1461 = vld [vmem:[%s1418 + $0x80] sm:$0x1]
        %v1462 = vld [vmem:[%s1418 + $0x8c] sm:$0x1]
        %v1463 = vld [vmem:[%s1418 + $0x98] sm:$0x1]
        %v1464 = vld [vmem:[%s1418 + $0xa4] sm:$0x1]
        %v1465 = vld [vmem:[%s1418 + $0xb0] sm:$0x1]
        %v1466 = vld [vmem:[%s1418 + $0xbc] sm:$0x1]
        %v1468 = vshrl.u32 %v1419, 16
        %v1470 = vrot.slane %v1468, 4
        %v1471 = vshll.u32 %v1419, 16
        %v1473 = vrot.slane %v1471, 5
        %v1474 = vor.u32 %v1470, %v1473
        %v1475 = vrot.slane %v1474, 4
        %v1477 = vshll.u32 %v1420, 16
        %v1479 = vrot.slane %v1477, 5
        %v1480 = vsel %vm239, %v1475, %v1479
        %v1481 = vshrl.u32 %v1420, 16
        %v1483 = vrot.slane %v1481, 4
        %v1484 = vor.u32 %v1483, %v1479
        %v1485 = vrot.slane %v1484, 4
        %v1487 = vshll.u32 %v1451, 16
        %v1489 = vrot.slane %v1487, 5
        %v1490 = vsel %vm239, %v1485, %v1489
        %v1492 = vshrl.u32 %v1421, 16
        %v1494 = vrot.slane %v1492, 4
        %v1495 = vshll.u32 %v1421, 16
        %v1497 = vrot.slane %v1495, 5
        %v1498 = vor.u32 %v1494, %v1497
        %v1499 = vrot.slane %v1498, 4
        %v1501 = vshll.u32 %v1422, 16
        %v1503 = vrot.slane %v1501, 5
        %v1504 = vsel %vm239, %v1499, %v1503
        %v1505 = vshrl.u32 %v1422, 16
        %v1507 = vrot.slane %v1505, 4
        %v1508 = vor.u32 %v1507, %v1503
        %v1509 = vrot.slane %v1508, 4
        %v1511 = vshll.u32 %v1452, 16
        %v1513 = vrot.slane %v1511, 5
        %v1514 = vsel %vm239, %v1509, %v1513
        %v1516 = vshrl.u32 %v1423, 16
        %v1518 = vrot.slane %v1516, 4
        %v1519 = vshll.u32 %v1423, 16
        %v1521 = vrot.slane %v1519, 5
        %v1522 = vor.u32 %v1518, %v1521
        %v1523 = vrot.slane %v1522, 4
        %v1525 = vshll.u32 %v1424, 16
        %v1527 = vrot.slane %v1525, 5
        %v1528 = vsel %vm239, %v1523, %v1527
        %v1529 = vshrl.u32 %v1424, 16
        %v1531 = vrot.slane %v1529, 4
        %v1532 = vor.u32 %v1531, %v1527
        %v1533 = vrot.slane %v1532, 4
        %v1535 = vshll.u32 %v1453, 16
        %v1537 = vrot.slane %v1535, 5
        %v1538 = vsel %vm239, %v1533, %v1537
        %v1540 = vshrl.u32 %v1425, 16
        %v1542 = vrot.slane %v1540, 4
        %v1543 = vshll.u32 %v1425, 16
        %v1545 = vrot.slane %v1543, 5
        %v1546 = vor.u32 %v1542, %v1545
        %v1547 = vrot.slane %v1546, 4
        %v1549 = vshll.u32 %v1426, 16
        %v1551 = vrot.slane %v1549, 5
        %v1552 = vsel %vm239, %v1547, %v1551
        %v1553 = vshrl.u32 %v1426, 16
        %v1555 = vrot.slane %v1553, 4
        %v1556 = vor.u32 %v1555, %v1551
        %v1557 = vrot.slane %v1556, 4
        %v1559 = vshll.u32 %v1454, 16
        %v1561 = vrot.slane %v1559, 5
        %v1562 = vsel %vm239, %v1557, %v1561
        %v1564 = vshrl.u32 %v1427, 16
        %v1566 = vrot.slane %v1564, 4
        %v1567 = vshll.u32 %v1427, 16
        %v1569 = vrot.slane %v1567, 5
        %v1570 = vor.u32 %v1566, %v1569
        %v1571 = vrot.slane %v1570, 4
        %v1573 = vshll.u32 %v1428, 16
        %v1575 = vrot.slane %v1573, 5
        %v1576 = vsel %vm239, %v1571, %v1575
        %v1577 = vshrl.u32 %v1428, 16
        %v1579 = vrot.slane %v1577, 4
        %v1580 = vor.u32 %v1579, %v1575
        %v1581 = vrot.slane %v1580, 4
        %v1583 = vshll.u32 %v1455, 16
        %v1585 = vrot.slane %v1583, 5
        %v1586 = vsel %vm239, %v1581, %v1585
        %v1588 = vshrl.u32 %v1429, 16
        %v1590 = vrot.slane %v1588, 4
        %v1591 = vshll.u32 %v1429, 16
        %v1593 = vrot.slane %v1591, 5
        %v1594 = vor.u32 %v1590, %v1593
        %v1595 = vrot.slane %v1594, 4
        %v1597 = vshll.u32 %v1430, 16
        %v1599 = vrot.slane %v1597, 5
        %v1600 = vsel %vm239, %v1595, %v1599
        %v1601 = vshrl.u32 %v1430, 16
        %v1603 = vrot.slane %v1601, 4
        %v1604 = vor.u32 %v1603, %v1599
        %v1605 = vrot.slane %v1604, 4
        %v1607 = vshll.u32 %v1456, 16
        %v1609 = vrot.slane %v1607, 5
        %v1610 = vsel %vm239, %v1605, %v1609
        %v1612 = vshrl.u32 %v1431, 16
        %v1614 = vrot.slane %v1612, 4
        %v1615 = vshll.u32 %v1431, 16
        %v1617 = vrot.slane %v1615, 5
        %v1618 = vor.u32 %v1614, %v1617
        %v1619 = vrot.slane %v1618, 4
        %v1621 = vshll.u32 %v1432, 16
        %v1623 = vrot.slane %v1621, 5
        %v1624 = vsel %vm239, %v1619, %v1623
        %v1625 = vshrl.u32 %v1432, 16
        %v1627 = vrot.slane %v1625, 4
        %v1628 = vor.u32 %v1627, %v1623
        %v1629 = vrot.slane %v1628, 4
        %v1631 = vshll.u32 %v1457, 16
        %v1633 = vrot.slane %v1631, 5
        %v1634 = vsel %vm239, %v1629, %v1633
        %v1636 = vshrl.u32 %v1433, 16
        %v1638 = vrot.slane %v1636, 4
        %v1639 = vshll.u32 %v1433, 16
        %v1641 = vrot.slane %v1639, 5
        %v1642 = vor.u32 %v1638, %v1641
        %v1643 = vrot.slane %v1642, 4
        %v1645 = vshll.u32 %v1434, 16
        %v1647 = vrot.slane %v1645, 5
        %v1648 = vsel %vm239, %v1643, %v1647
        %v1649 = vshrl.u32 %v1434, 16
        %v1651 = vrot.slane %v1649, 4
        %v1652 = vor.u32 %v1651, %v1647
        %v1653 = vrot.slane %v1652, 4
        %v1655 = vshll.u32 %v1458, 16
        %v1657 = vrot.slane %v1655, 5
        %v1658 = vsel %vm239, %v1653, %v1657
        %v1660 = vshrl.u32 %v1435, 16
        %v1662 = vrot.slane %v1660, 4
        %v1663 = vshll.u32 %v1435, 16
        %v1665 = vrot.slane %v1663, 5
        %v1666 = vor.u32 %v1662, %v1665
        %v1667 = vrot.slane %v1666, 4
        %v1669 = vshll.u32 %v1436, 16
        %v1671 = vrot.slane %v1669, 5
        %v1672 = vsel %vm239, %v1667, %v1671
        %v1673 = vshrl.u32 %v1436, 16
        %v1675 = vrot.slane %v1673, 4
        %v1676 = vor.u32 %v1675, %v1671
        %v1677 = vrot.slane %v1676, 4
        %v1679 = vshll.u32 %v1459, 16
        %v1681 = vrot.slane %v1679, 5
        %v1682 = vsel %vm239, %v1677, %v1681
        %v1684 = vshrl.u32 %v1437, 16
        %v1686 = vrot.slane %v1684, 4
        %v1687 = vshll.u32 %v1437, 16
        %v1689 = vrot.slane %v1687, 5
        %v1690 = vor.u32 %v1686, %v1689
        %v1691 = vrot.slane %v1690, 4
        %v1693 = vshll.u32 %v1438, 16
        %v1695 = vrot.slane %v1693, 5
        %v1696 = vsel %vm239, %v1691, %v1695
        %v1697 = vshrl.u32 %v1438, 16
        %v1699 = vrot.slane %v1697, 4
        %v1700 = vor.u32 %v1699, %v1695
        %v1701 = vrot.slane %v1700, 4
        %v1703 = vshll.u32 %v1460, 16
        %v1705 = vrot.slane %v1703, 5
        %v1706 = vsel %vm239, %v1701, %v1705
        %v1708 = vshrl.u32 %v1439, 16
        %v1710 = vrot.slane %v1708, 4
        %v1711 = vshll.u32 %v1439, 16
        %v1713 = vrot.slane %v1711, 5
        %v1714 = vor.u32 %v1710, %v1713
        %v1715 = vrot.slane %v1714, 4
        %v1717 = vshll.u32 %v1440, 16
        %v1719 = vrot.slane %v1717, 5
        %v1720 = vsel %vm239, %v1715, %v1719
        %v1721 = vshrl.u32 %v1440, 16
        %v1723 = vrot.slane %v1721, 4
        %v1724 = vor.u32 %v1723, %v1719
        %v1725 = vrot.slane %v1724, 4
        %v1727 = vshll.u32 %v1461, 16
        %v1729 = vrot.slane %v1727, 5
        %v1730 = vsel %vm239, %v1725, %v1729
        %v1732 = vshrl.u32 %v1441, 16
        %v1734 = vrot.slane %v1732, 4
        %v1735 = vshll.u32 %v1441, 16
        %v1737 = vrot.slane %v1735, 5
        %v1738 = vor.u32 %v1734, %v1737
        %v1739 = vrot.slane %v1738, 4
        %v1741 = vshll.u32 %v1442, 16
        %v1743 = vrot.slane %v1741, 5
        %v1744 = vsel %vm239, %v1739, %v1743
        %v1745 = vshrl.u32 %v1442, 16
        %v1747 = vrot.slane %v1745, 4
        %v1748 = vor.u32 %v1747, %v1743
        %v1749 = vrot.slane %v1748, 4
        %v1751 = vshll.u32 %v1462, 16
        %v1753 = vrot.slane %v1751, 5
        %v1754 = vsel %vm239, %v1749, %v1753
        %v1756 = vshrl.u32 %v1443, 16
        %v1758 = vrot.slane %v1756, 4
        %v1759 = vshll.u32 %v1443, 16
        %v1761 = vrot.slane %v1759, 5
        %v1762 = vor.u32 %v1758, %v1761
        %v1763 = vrot.slane %v1762, 4
        %v1765 = vshll.u32 %v1444, 16
        %v1767 = vrot.slane %v1765, 5
        %v1768 = vsel %vm239, %v1763, %v1767
        %v1769 = vshrl.u32 %v1444, 16
        %v1771 = vrot.slane %v1769, 4
        %v1772 = vor.u32 %v1771, %v1767
        %v1773 = vrot.slane %v1772, 4
        %v1775 = vshll.u32 %v1463, 16
        %v1777 = vrot.slane %v1775, 5
        %v1778 = vsel %vm239, %v1773, %v1777
        %v1780 = vshrl.u32 %v1445, 16
        %v1782 = vrot.slane %v1780, 4
        %v1783 = vshll.u32 %v1445, 16
        %v1785 = vrot.slane %v1783, 5
        %v1786 = vor.u32 %v1782, %v1785
        %v1787 = vrot.slane %v1786, 4
        %v1789 = vshll.u32 %v1446, 16
        %v1791 = vrot.slane %v1789, 5
        %v1792 = vsel %vm239, %v1787, %v1791
        %v1793 = vshrl.u32 %v1446, 16
        %v1795 = vrot.slane %v1793, 4
        %v1796 = vor.u32 %v1795, %v1791
        %v1797 = vrot.slane %v1796, 4
        %v1799 = vshll.u32 %v1464, 16
        %v1801 = vrot.slane %v1799, 5
        %v1802 = vsel %vm239, %v1797, %v1801
        %v1804 = vshrl.u32 %v1447, 16
        %v1806 = vrot.slane %v1804, 4
        %v1807 = vshll.u32 %v1447, 16
        %v1809 = vrot.slane %v1807, 5
        %v1810 = vor.u32 %v1806, %v1809
        %v1811 = vrot.slane %v1810, 4
        %v1813 = vshll.u32 %v1448, 16
        %v1815 = vrot.slane %v1813, 5
        %v1816 = vsel %vm239, %v1811, %v1815
        %v1817 = vshrl.u32 %v1448, 16
        %v1819 = vrot.slane %v1817, 4
        %v1820 = vor.u32 %v1819, %v1815
        %v1821 = vrot.slane %v1820, 4
        %v1823 = vshll.u32 %v1465, 16
        %v1825 = vrot.slane %v1823, 5
        %v1826 = vsel %vm239, %v1821, %v1825
        %v1828 = vshrl.u32 %v1449, 16
        %v1830 = vrot.slane %v1828, 4
        %v1831 = vshll.u32 %v1449, 16
        %v1833 = vrot.slane %v1831, 5
        %v1834 = vor.u32 %v1830, %v1833
        %v1835 = vrot.slane %v1834, 4
        %v1837 = vshll.u32 %v1450, 16
        %v1839 = vrot.slane %v1837, 5
        %v1840 = vsel %vm239, %v1835, %v1839
        %v1841 = vshrl.u32 %v1450, 16
        %v1843 = vrot.slane %v1841, 4
        %v1844 = vor.u32 %v1843, %v1839
        %v1845 = vrot.slane %v1844, 4
        %v1847 = vshll.u32 %v1466, 16
        %v1849 = vrot.slane %v1847, 5
        %v1850 = vsel %vm239, %v1845, %v1849
        %v1851 = vld [vmem:[%s1418] sm:$0xe]
        %v1852 = vld [vmem:[%s1418 + $0xc] sm:$0xe]
        %v1853 = vld [vmem:[%s1418 + $0x18] sm:$0xe]
        %v1854 = vld [vmem:[%s1418 + $0x24] sm:$0xe]
        %v1855 = vld [vmem:[%s1418 + $0x30] sm:$0xe]
        %v1856 = vld [vmem:[%s1418 + $0x3c] sm:$0xe]
        %v1857 = vld [vmem:[%s1418 + $0x48] sm:$0xe]
        %v1858 = vld [vmem:[%s1418 + $0x54] sm:$0xe]
        %v1859 = vld [vmem:[%s1418 + $0x60] sm:$0xe]
        %v1860 = vld [vmem:[%s1418 + $0x6c] sm:$0xe]
        %v1861 = vld [vmem:[%s1418 + $0x78] sm:$0xe]
        %v1862 = vld [vmem:[%s1418 + $0x84] sm:$0xe]
        %v1863 = vld [vmem:[%s1418 + $0x90] sm:$0xe]
        %v1864 = vld [vmem:[%s1418 + $0x9c] sm:$0xe]
        %v1865 = vld [vmem:[%s1418 + $0xa8] sm:$0xe]
        %v1866 = vld [vmem:[%s1418 + $0xb4] sm:$0xe]
        %v1915 = vrot.slane %v1851, 5
        %v1916 = vrot.slane %v1915, 4
        %v1917 = vrot.slane %v1420, 5
        %v1918 = vsel %vm690, %v1916, %v1917
        %v1919 = vrot.slane %v1917, 4
        %v1920 = vrot.slane %v1451, 5
        %v1921 = vsel %vm690, %v1919, %v1920
        %v1922 = vrot.slane %v1852, 5
        %v1923 = vrot.slane %v1922, 4
        %v1924 = vrot.slane %v1422, 5
        %v1925 = vsel %vm690, %v1923, %v1924
        %v1926 = vrot.slane %v1924, 4
        %v1927 = vrot.slane %v1452, 5
        %v1928 = vsel %vm690, %v1926, %v1927
        %v1929 = vrot.slane %v1853, 5
        %v1930 = vrot.slane %v1929, 4
        %v1931 = vrot.slane %v1424, 5
        %v1932 = vsel %vm690, %v1930, %v1931
        %v1933 = vrot.slane %v1931, 4
        %v1934 = vrot.slane %v1453, 5
        %v1935 = vsel %vm690, %v1933, %v1934
        %v1936 = vrot.slane %v1854, 5
        %v1937 = vrot.slane %v1936, 4
        %v1938 = vrot.slane %v1426, 5
        %v1939 = vsel %vm690, %v1937, %v1938
        %v1940 = vrot.slane %v1938, 4
        %v1941 = vrot.slane %v1454, 5
        %v1942 = vsel %vm690, %v1940, %v1941
        %v1943 = vrot.slane %v1855, 5
        %v1944 = vrot.slane %v1943, 4
        %v1945 = vrot.slane %v1428, 5
        %v1946 = vsel %vm690, %v1944, %v1945
        %v1947 = vrot.slane %v1945, 4
        %v1948 = vrot.slane %v1455, 5
        %v1949 = vsel %vm690, %v1947, %v1948
        %v1950 = vrot.slane %v1856, 5
        %v1951 = vrot.slane %v1950, 4
        %v1952 = vrot.slane %v1430, 5
        %v1953 = vsel %vm690, %v1951, %v1952
        %v1954 = vrot.slane %v1952, 4
        %v1955 = vrot.slane %v1456, 5
        %v1956 = vsel %vm690, %v1954, %v1955
        %v1957 = vrot.slane %v1857, 5
        %v1958 = vrot.slane %v1957, 4
        %v1959 = vrot.slane %v1432, 5
        %v1960 = vsel %vm690, %v1958, %v1959
        %v1961 = vrot.slane %v1959, 4
        %v1962 = vrot.slane %v1457, 5
        %v1963 = vsel %vm690, %v1961, %v1962
        %v1964 = vrot.slane %v1858, 5
        %v1965 = vrot.slane %v1964, 4
        %v1966 = vrot.slane %v1434, 5
        %v1967 = vsel %vm690, %v1965, %v1966
        %v1968 = vrot.slane %v1966, 4
        %v1969 = vrot.slane %v1458, 5
        %v1970 = vsel %vm690, %v1968, %v1969
        %v1971 = vrot.slane %v1859, 5
        %v1972 = vrot.slane %v1971, 4
        %v1973 = vrot.slane %v1436, 5
        %v1974 = vsel %vm690, %v1972, %v1973
        %v1975 = vrot.slane %v1973, 4
        %v1976 = vrot.slane %v1459, 5
        %v1977 = vsel %vm690, %v1975, %v1976
        %v1978 = vrot.slane %v1860, 5
        %v1979 = vrot.slane %v1978, 4
        %v1980 = vrot.slane %v1438, 5
        %v1981 = vsel %vm690, %v1979, %v1980
        %v1982 = vrot.slane %v1980, 4
        %v1983 = vrot.slane %v1460, 5
        %v1984 = vsel %vm690, %v1982, %v1983
        %v1985 = vrot.slane %v1861, 5
        %v1986 = vrot.slane %v1985, 4
        %v1987 = vrot.slane %v1440, 5
        %v1988 = vsel %vm690, %v1986, %v1987
        %v1989 = vrot.slane %v1987, 4
        %v1990 = vrot.slane %v1461, 5
        %v1991 = vsel %vm690, %v1989, %v1990
        %v1992 = vrot.slane %v1862, 5
        %v1993 = vrot.slane %v1992, 4
        %v1994 = vrot.slane %v1442, 5
        %v1995 = vsel %vm690, %v1993, %v1994
        %v1996 = vrot.slane %v1994, 4
        %v1997 = vrot.slane %v1462, 5
        %v1998 = vsel %vm690, %v1996, %v1997
        %v1999 = vrot.slane %v1863, 5
        %v2000 = vrot.slane %v1999, 4
        %v2001 = vrot.slane %v1444, 5
        %v2002 = vsel %vm690, %v2000, %v2001
        %v2003 = vrot.slane %v2001, 4
        %v2004 = vrot.slane %v1463, 5
        %v2005 = vsel %vm690, %v2003, %v2004
        %v2006 = vrot.slane %v1864, 5
        %v2007 = vrot.slane %v2006, 4
        %v2008 = vrot.slane %v1446, 5
        %v2009 = vsel %vm690, %v2007, %v2008
        %v2010 = vrot.slane %v2008, 4
        %v2011 = vrot.slane %v1464, 5
        %v2012 = vsel %vm690, %v2010, %v2011
        %v2013 = vrot.slane %v1865, 5
        %v2014 = vrot.slane %v2013, 4
        %v2015 = vrot.slane %v1448, 5
        %v2016 = vsel %vm690, %v2014, %v2015
        %v2017 = vrot.slane %v2015, 4
        %v2018 = vrot.slane %v1465, 5
        %v2019 = vsel %vm690, %v2017, %v2018
        %v2020 = vrot.slane %v1866, 5
        %v2021 = vrot.slane %v2020, 4
        %v2022 = vrot.slane %v1450, 5
        %v2023 = vsel %vm690, %v2021, %v2022
        %v2024 = vrot.slane %v2022, 4
        %v2025 = vrot.slane %v1466, 5
        %v2026 = vsel %vm690, %v2024, %v2025
        %v2043 = vunpack.c.l.b16 %v189
        %v2044 = vunpack.c.l.b16 %v190
        %v2045 = vunpack.c.l.b16 %v191
        %v2046 = vunpack.c.l.b16 %v192
        %v2047 = vunpack.c.l.b16 %v193
        %v2048 = vunpack.c.l.b16 %v194
        %v2049 = vunpack.c.l.b16 %v195
        %v2050 = vunpack.c.l.b16 %v196
        %v2051 = vunpack.c.l.b16 %v197
        %v2052 = vunpack.c.l.b16 %v198
        %v2053 = vunpack.c.l.b16 %v199
        %v2054 = vunpack.c.l.b16 %v200
        %v2055 = vunpack.c.l.b16 %v201
        %v2056 = vunpack.c.l.b16 %v202
        %v2057 = vunpack.c.l.b16 %v203
        %v2058 = vunpack.c.l.b16 %v204
        %v2059 = vunpack.c.l.b16 %v205
        %v2060 = vunpack.c.l.b16 %v206
        %v2061 = vunpack.c.l.b16 %v207
        %v2062 = vunpack.c.l.b16 %v208
        %v2063 = vunpack.c.l.b16 %v209
        %v2064 = vunpack.c.l.b16 %v210
        %v2065 = vunpack.c.l.b16 %v211
        %v2066 = vunpack.c.l.b16 %v212
        %v2067 = vunpack.c.l.b16 %v213
        %v2068 = vunpack.c.l.b16 %v214
        %v2069 = vunpack.c.l.b16 %v215
        %v2070 = vunpack.c.l.b16 %v216
        %v2071 = vunpack.c.l.b16 %v217
        %v2072 = vunpack.c.l.b16 %v218
        %v2073 = vunpack.c.l.b16 %v219
        %v2074 = vunpack.c.l.b16 %v220
        %v2075 = vpack.c.b16 %v2044, %v2043
        %v2076 = vpack.c.b16 %v2046, %v2045
        %v2077 = vpack.c.b16 %v2048, %v2047
        %v2078 = vpack.c.b16 %v2050, %v2049
        %v2079 = vpack.c.b16 %v2052, %v2051
        %v2080 = vpack.c.b16 %v2054, %v2053
        %v2081 = vpack.c.b16 %v2056, %v2055
        %v2082 = vpack.c.b16 %v2058, %v2057
        %v2083 = vpack.c.b16 %v2060, %v2059
        %v2084 = vpack.c.b16 %v2062, %v2061
        %v2085 = vpack.c.b16 %v2064, %v2063
        %v2086 = vpack.c.b16 %v2066, %v2065
        %v2087 = vpack.c.b16 %v2068, %v2067
        %v2088 = vpack.c.b16 %v2070, %v2069
        %v2089 = vpack.c.b16 %v2072, %v2071
        %v2090 = vpack.c.b16 %v2074, %v2073
        %v2107 = vunpack.c.l.b16 %v253
        %v2108 = vunpack.c.l.b16 %v263
        %v2109 = vunpack.c.l.b16 %v277
        %v2110 = vunpack.c.l.b16 %v287
        %v2111 = vunpack.c.l.b16 %v301
        %v2112 = vunpack.c.l.b16 %v311
        %v2113 = vunpack.c.l.b16 %v325
        %v2114 = vunpack.c.l.b16 %v335
        %v2115 = vunpack.c.l.b16 %v349
        %v2116 = vunpack.c.l.b16 %v359
        %v2117 = vunpack.c.l.b16 %v373
        %v2118 = vunpack.c.l.b16 %v383
        %v2119 = vunpack.c.l.b16 %v397
        %v2120 = vunpack.c.l.b16 %v407
        %v2121 = vunpack.c.l.b16 %v421
        %v2122 = vunpack.c.l.b16 %v431
        %v2123 = vunpack.c.l.b16 %v445
        %v2124 = vunpack.c.l.b16 %v455
        %v2125 = vunpack.c.l.b16 %v469
        %v2126 = vunpack.c.l.b16 %v479
        %v2127 = vunpack.c.l.b16 %v493
        %v2128 = vunpack.c.l.b16 %v503
        %v2129 = vunpack.c.l.b16 %v517
        %v2130 = vunpack.c.l.b16 %v527
        %v2131 = vunpack.c.l.b16 %v541
        %v2132 = vunpack.c.l.b16 %v551
        %v2133 = vunpack.c.l.b16 %v565
        %v2134 = vunpack.c.l.b16 %v575
        %v2135 = vunpack.c.l.b16 %v589
        %v2136 = vunpack.c.l.b16 %v599
        %v2137 = vunpack.c.l.b16 %v613
        %v2138 = vunpack.c.l.b16 %v623
        %v2139 = vpack.c.b16 %v2108, %v2107
        %v2140 = vpack.c.b16 %v2110, %v2109
        %v2141 = vpack.c.b16 %v2112, %v2111
        %v2142 = vpack.c.b16 %v2114, %v2113
        %v2143 = vpack.c.b16 %v2116, %v2115
        %v2144 = vpack.c.b16 %v2118, %v2117
        %v2145 = vpack.c.b16 %v2120, %v2119
        %v2146 = vpack.c.b16 %v2122, %v2121
        %v2147 = vpack.c.b16 %v2124, %v2123
        %v2148 = vpack.c.b16 %v2126, %v2125
        %v2149 = vpack.c.b16 %v2128, %v2127
        %v2150 = vpack.c.b16 %v2130, %v2129
        %v2151 = vpack.c.b16 %v2132, %v2131
        %v2152 = vpack.c.b16 %v2134, %v2133
        %v2153 = vpack.c.b16 %v2136, %v2135
        %v2154 = vpack.c.b16 %v2138, %v2137
        %v2171 = vunpack.c.l.b16 %v694
        %v2172 = vunpack.c.l.b16 %v697
        %v2173 = vunpack.c.l.b16 %v701
        %v2174 = vunpack.c.l.b16 %v704
        %v2175 = vunpack.c.l.b16 %v708
        %v2176 = vunpack.c.l.b16 %v711
        %v2177 = vunpack.c.l.b16 %v715
        %v2178 = vunpack.c.l.b16 %v718
        %v2179 = vunpack.c.l.b16 %v722
        %v2180 = vunpack.c.l.b16 %v725
        %v2181 = vunpack.c.l.b16 %v729
        %v2182 = vunpack.c.l.b16 %v732
        %v2183 = vunpack.c.l.b16 %v736
        %v2184 = vunpack.c.l.b16 %v739
        %v2185 = vunpack.c.l.b16 %v743
        %v2186 = vunpack.c.l.b16 %v746
        %v2187 = vunpack.c.l.b16 %v750
        %v2188 = vunpack.c.l.b16 %v753
        %v2189 = vunpack.c.l.b16 %v757
        %v2190 = vunpack.c.l.b16 %v760
        %v2191 = vunpack.c.l.b16 %v764
        %v2192 = vunpack.c.l.b16 %v767
        %v2193 = vunpack.c.l.b16 %v771
        %v2194 = vunpack.c.l.b16 %v774
        %v2195 = vunpack.c.l.b16 %v778
        %v2196 = vunpack.c.l.b16 %v781
        %v2197 = vunpack.c.l.b16 %v785
        %v2198 = vunpack.c.l.b16 %v788
        %v2199 = vunpack.c.l.b16 %v792
        %v2200 = vunpack.c.l.b16 %v795
        %v2201 = vunpack.c.l.b16 %v799
        %v2202 = vunpack.c.l.b16 %v802
        %v2203 = vpack.c.b16 %v2172, %v2171
        %v2204 = vpack.c.b16 %v2174, %v2173
        %v2205 = vpack.c.b16 %v2176, %v2175
        %v2206 = vpack.c.b16 %v2178, %v2177
        %v2207 = vpack.c.b16 %v2180, %v2179
        %v2208 = vpack.c.b16 %v2182, %v2181
        %v2209 = vpack.c.b16 %v2184, %v2183
        %v2210 = vpack.c.b16 %v2186, %v2185
        %v2211 = vpack.c.b16 %v2188, %v2187
        %v2212 = vpack.c.b16 %v2190, %v2189
        %v2213 = vpack.c.b16 %v2192, %v2191
        %v2214 = vpack.c.b16 %v2194, %v2193
        %v2215 = vpack.c.b16 %v2196, %v2195
        %v2216 = vpack.c.b16 %v2198, %v2197
        %v2217 = vpack.c.b16 %v2200, %v2199
        %v2218 = vpack.c.b16 %v2202, %v2201
        %v2251 = vunpack.c.l.b16 %v807
        %v2252 = vunpack.c.l.b16 %v808
        %v2253 = vunpack.c.l.b16 %v809
        %v2254 = vunpack.c.l.b16 %v810
        %v2255 = vunpack.c.l.b16 %v811
        %v2256 = vunpack.c.l.b16 %v812
        %v2257 = vunpack.c.l.b16 %v813
        %v2258 = vunpack.c.l.b16 %v814
        %v2259 = vunpack.c.l.b16 %v815
        %v2260 = vunpack.c.l.b16 %v816
        %v2261 = vunpack.c.l.b16 %v817
        %v2262 = vunpack.c.l.b16 %v818
        %v2263 = vunpack.c.l.b16 %v819
        %v2264 = vunpack.c.l.b16 %v820
        %v2265 = vunpack.c.l.b16 %v821
        %v2266 = vunpack.c.l.b16 %v822
        %v2267 = vunpack.c.l.b16 %v823
        %v2268 = vunpack.c.l.b16 %v824
        %v2269 = vunpack.c.l.b16 %v825
        %v2270 = vunpack.c.l.b16 %v826
        %v2271 = vunpack.c.l.b16 %v827
        %v2272 = vunpack.c.l.b16 %v828
        %v2273 = vunpack.c.l.b16 %v829
        %v2274 = vunpack.c.l.b16 %v830
        %v2275 = vunpack.c.l.b16 %v831
        %v2276 = vunpack.c.l.b16 %v832
        %v2277 = vunpack.c.l.b16 %v833
        %v2278 = vunpack.c.l.b16 %v834
        %v2279 = vunpack.c.l.b16 %v835
        %v2280 = vunpack.c.l.b16 %v836
        %v2281 = vunpack.c.l.b16 %v837
        %v2282 = vunpack.c.l.b16 %v838
        %v2283 = vpack.c.b16 %v2252, %v2251
        %v2284 = vpack.c.b16 %v2254, %v2253
        %v2285 = vpack.c.b16 %v2256, %v2255
        %v2286 = vpack.c.b16 %v2258, %v2257
        %v2287 = vpack.c.b16 %v2260, %v2259
        %v2288 = vpack.c.b16 %v2262, %v2261
        %v2289 = vpack.c.b16 %v2264, %v2263
        %v2290 = vpack.c.b16 %v2266, %v2265
        %v2291 = vpack.c.b16 %v2268, %v2267
        %v2292 = vpack.c.b16 %v2270, %v2269
        %v2293 = vpack.c.b16 %v2272, %v2271
        %v2294 = vpack.c.b16 %v2274, %v2273
        %v2295 = vpack.c.b16 %v2276, %v2275
        %v2296 = vpack.c.b16 %v2278, %v2277
        %v2297 = vpack.c.b16 %v2280, %v2279
        %v2298 = vpack.c.b16 %v2282, %v2281
        %v2315 = vunpack.c.l.b16 %v868
        %v2316 = vunpack.c.l.b16 %v878
        %v2317 = vunpack.c.l.b16 %v892
        %v2318 = vunpack.c.l.b16 %v902
        %v2319 = vunpack.c.l.b16 %v916
        %v2320 = vunpack.c.l.b16 %v926
        %v2321 = vunpack.c.l.b16 %v940
        %v2322 = vunpack.c.l.b16 %v950
        %v2323 = vunpack.c.l.b16 %v964
        %v2324 = vunpack.c.l.b16 %v974
        %v2325 = vunpack.c.l.b16 %v988
        %v2326 = vunpack.c.l.b16 %v998
        %v2327 = vunpack.c.l.b16 %v1012
        %v2328 = vunpack.c.l.b16 %v1022
        %v2329 = vunpack.c.l.b16 %v1036
        %v2330 = vunpack.c.l.b16 %v1046
        %v2331 = vunpack.c.l.b16 %v1060
        %v2332 = vunpack.c.l.b16 %v1070
        %v2333 = vunpack.c.l.b16 %v1084
        %v2334 = vunpack.c.l.b16 %v1094
        %v2335 = vunpack.c.l.b16 %v1108
        %v2336 = vunpack.c.l.b16 %v1118
        %v2337 = vunpack.c.l.b16 %v1132
        %v2338 = vunpack.c.l.b16 %v1142
        %v2339 = vunpack.c.l.b16 %v1156
        %v2340 = vunpack.c.l.b16 %v1166
        %v2341 = vunpack.c.l.b16 %v1180
        %v2342 = vunpack.c.l.b16 %v1190
        %v2343 = vunpack.c.l.b16 %v1204
        %v2344 = vunpack.c.l.b16 %v1214
        %v2345 = vunpack.c.l.b16 %v1228
        %v2346 = vunpack.c.l.b16 %v1238
        %v2347 = vpack.c.b16 %v2316, %v2315
        %v2348 = vpack.c.b16 %v2318, %v2317
        %v2349 = vpack.c.b16 %v2320, %v2319
        %v2350 = vpack.c.b16 %v2322, %v2321
        %v2351 = vpack.c.b16 %v2324, %v2323
        %v2352 = vpack.c.b16 %v2326, %v2325
        %v2353 = vpack.c.b16 %v2328, %v2327
        %v2354 = vpack.c.b16 %v2330, %v2329
        %v2355 = vpack.c.b16 %v2332, %v2331
        %v2356 = vpack.c.b16 %v2334, %v2333
        %v2357 = vpack.c.b16 %v2336, %v2335
        %v2358 = vpack.c.b16 %v2338, %v2337
        %v2359 = vpack.c.b16 %v2340, %v2339
        %v2360 = vpack.c.b16 %v2342, %v2341
        %v2361 = vpack.c.b16 %v2344, %v2343
        %v2362 = vpack.c.b16 %v2346, %v2345
        %v2379 = vunpack.c.l.b16 %v1306
        %v2380 = vunpack.c.l.b16 %v1309
        %v2381 = vunpack.c.l.b16 %v1313
        %v2382 = vunpack.c.l.b16 %v1316
        %v2383 = vunpack.c.l.b16 %v1320
        %v2384 = vunpack.c.l.b16 %v1323
        %v2385 = vunpack.c.l.b16 %v1327
        %v2386 = vunpack.c.l.b16 %v1330
        %v2387 = vunpack.c.l.b16 %v1334
        %v2388 = vunpack.c.l.b16 %v1337
        %v2389 = vunpack.c.l.b16 %v1341
        %v2390 = vunpack.c.l.b16 %v1344
        %v2391 = vunpack.c.l.b16 %v1348
        %v2392 = vunpack.c.l.b16 %v1351
        %v2393 = vunpack.c.l.b16 %v1355
        %v2394 = vunpack.c.l.b16 %v1358
        %v2395 = vunpack.c.l.b16 %v1362
        %v2396 = vunpack.c.l.b16 %v1365
        %v2397 = vunpack.c.l.b16 %v1369
        %v2398 = vunpack.c.l.b16 %v1372
        %v2399 = vunpack.c.l.b16 %v1376
        %v2400 = vunpack.c.l.b16 %v1379
        %v2401 = vunpack.c.l.b16 %v1383
        %v2402 = vunpack.c.l.b16 %v1386
        %v2403 = vunpack.c.l.b16 %v1390
        %v2404 = vunpack.c.l.b16 %v1393
        %v2405 = vunpack.c.l.b16 %v1397
        %v2406 = vunpack.c.l.b16 %v1400
        %v2407 = vunpack.c.l.b16 %v1404
        %v2408 = vunpack.c.l.b16 %v1407
        %v2409 = vunpack.c.l.b16 %v1411
        %v2410 = vunpack.c.l.b16 %v1414
        %v2411 = vpack.c.b16 %v2380, %v2379
        %v2412 = vpack.c.b16 %v2382, %v2381
        %v2413 = vpack.c.b16 %v2384, %v2383
        %v2414 = vpack.c.b16 %v2386, %v2385
        %v2415 = vpack.c.b16 %v2388, %v2387
        %v2416 = vpack.c.b16 %v2390, %v2389
        %v2417 = vpack.c.b16 %v2392, %v2391
        %v2418 = vpack.c.b16 %v2394, %v2393
        %v2419 = vpack.c.b16 %v2396, %v2395
        %v2420 = vpack.c.b16 %v2398, %v2397
        %v2421 = vpack.c.b16 %v2400, %v2399
        %v2422 = vpack.c.b16 %v2402, %v2401
        %v2423 = vpack.c.b16 %v2404, %v2403
        %v2424 = vpack.c.b16 %v2406, %v2405
        %v2425 = vpack.c.b16 %v2408, %v2407
        %v2426 = vpack.c.b16 %v2410, %v2409
        %v2459 = vunpack.c.l.b16 %v1419
        %v2460 = vunpack.c.l.b16 %v1420
        %v2461 = vunpack.c.l.b16 %v1421
        %v2462 = vunpack.c.l.b16 %v1422
        %v2463 = vunpack.c.l.b16 %v1423
        %v2464 = vunpack.c.l.b16 %v1424
        %v2465 = vunpack.c.l.b16 %v1425
        %v2466 = vunpack.c.l.b16 %v1426
        %v2467 = vunpack.c.l.b16 %v1427
        %v2468 = vunpack.c.l.b16 %v1428
        %v2469 = vunpack.c.l.b16 %v1429
        %v2470 = vunpack.c.l.b16 %v1430
        %v2471 = vunpack.c.l.b16 %v1431
        %v2472 = vunpack.c.l.b16 %v1432
        %v2473 = vunpack.c.l.b16 %v1433
        %v2474 = vunpack.c.l.b16 %v1434
        %v2475 = vunpack.c.l.b16 %v1435
        %v2476 = vunpack.c.l.b16 %v1436
        %v2477 = vunpack.c.l.b16 %v1437
        %v2478 = vunpack.c.l.b16 %v1438
        %v2479 = vunpack.c.l.b16 %v1439
        %v2480 = vunpack.c.l.b16 %v1440
        %v2481 = vunpack.c.l.b16 %v1441
        %v2482 = vunpack.c.l.b16 %v1442
        %v2483 = vunpack.c.l.b16 %v1443
        %v2484 = vunpack.c.l.b16 %v1444
        %v2485 = vunpack.c.l.b16 %v1445
        %v2486 = vunpack.c.l.b16 %v1446
        %v2487 = vunpack.c.l.b16 %v1447
        %v2488 = vunpack.c.l.b16 %v1448
        %v2489 = vunpack.c.l.b16 %v1449
        %v2490 = vunpack.c.l.b16 %v1450
        %v2491 = vpack.c.b16 %v2460, %v2459
        %v2492 = vpack.c.b16 %v2462, %v2461
        %v2493 = vpack.c.b16 %v2464, %v2463
        %v2494 = vpack.c.b16 %v2466, %v2465
        %v2495 = vpack.c.b16 %v2468, %v2467
        %v2496 = vpack.c.b16 %v2470, %v2469
        %v2497 = vpack.c.b16 %v2472, %v2471
        %v2498 = vpack.c.b16 %v2474, %v2473
        %v2499 = vpack.c.b16 %v2476, %v2475
        %v2500 = vpack.c.b16 %v2478, %v2477
        %v2501 = vpack.c.b16 %v2480, %v2479
        %v2502 = vpack.c.b16 %v2482, %v2481
        %v2503 = vpack.c.b16 %v2484, %v2483
        %v2504 = vpack.c.b16 %v2486, %v2485
        %v2505 = vpack.c.b16 %v2488, %v2487
        %v2506 = vpack.c.b16 %v2490, %v2489
        %v2523 = vunpack.c.l.b16 %v1480
        %v2524 = vunpack.c.l.b16 %v1490
        %v2525 = vunpack.c.l.b16 %v1504
        %v2526 = vunpack.c.l.b16 %v1514
        %v2527 = vunpack.c.l.b16 %v1528
        %v2528 = vunpack.c.l.b16 %v1538
        %v2529 = vunpack.c.l.b16 %v1552
        %v2530 = vunpack.c.l.b16 %v1562
        %v2531 = vunpack.c.l.b16 %v1576
        %v2532 = vunpack.c.l.b16 %v1586
        %v2533 = vunpack.c.l.b16 %v1600
        %v2534 = vunpack.c.l.b16 %v1610
        %v2535 = vunpack.c.l.b16 %v1624
        %v2536 = vunpack.c.l.b16 %v1634
        %v2537 = vunpack.c.l.b16 %v1648
        %v2538 = vunpack.c.l.b16 %v1658
        %v2539 = vunpack.c.l.b16 %v1672
        %v2540 = vunpack.c.l.b16 %v1682
        %v2541 = vunpack.c.l.b16 %v1696
        %v2542 = vunpack.c.l.b16 %v1706
        %v2543 = vunpack.c.l.b16 %v1720
        %v2544 = vunpack.c.l.b16 %v1730
        %v2545 = vunpack.c.l.b16 %v1744
        %v2546 = vunpack.c.l.b16 %v1754
        %v2547 = vunpack.c.l.b16 %v1768
        %v2548 = vunpack.c.l.b16 %v1778
        %v2549 = vunpack.c.l.b16 %v1792
        %v2550 = vunpack.c.l.b16 %v1802
        %v2551 = vunpack.c.l.b16 %v1816
        %v2552 = vunpack.c.l.b16 %v1826
        %v2553 = vunpack.c.l.b16 %v1840
        %v2554 = vunpack.c.l.b16 %v1850
        %v2555 = vpack.c.b16 %v2524, %v2523
        %v2556 = vpack.c.b16 %v2526, %v2525
        %v2557 = vpack.c.b16 %v2528, %v2527
        %v2558 = vpack.c.b16 %v2530, %v2529
        %v2559 = vpack.c.b16 %v2532, %v2531
        %v2560 = vpack.c.b16 %v2534, %v2533
        %v2561 = vpack.c.b16 %v2536, %v2535
        %v2562 = vpack.c.b16 %v2538, %v2537
        %v2563 = vpack.c.b16 %v2540, %v2539
        %v2564 = vpack.c.b16 %v2542, %v2541
        %v2565 = vpack.c.b16 %v2544, %v2543
        %v2566 = vpack.c.b16 %v2546, %v2545
        %v2567 = vpack.c.b16 %v2548, %v2547
        %v2568 = vpack.c.b16 %v2550, %v2549
        %v2569 = vpack.c.b16 %v2552, %v2551
        %v2570 = vpack.c.b16 %v2554, %v2553
        %v2587 = vunpack.c.l.b16 %v1918
        %v2588 = vunpack.c.l.b16 %v1921
        %v2589 = vunpack.c.l.b16 %v1925
        %v2590 = vunpack.c.l.b16 %v1928
        %v2591 = vunpack.c.l.b16 %v1932
        %v2592 = vunpack.c.l.b16 %v1935
        %v2593 = vunpack.c.l.b16 %v1939
        %v2594 = vunpack.c.l.b16 %v1942
        %v2595 = vunpack.c.l.b16 %v1946
        %v2596 = vunpack.c.l.b16 %v1949
        %v2597 = vunpack.c.l.b16 %v1953
        %v2598 = vunpack.c.l.b16 %v1956
        %v2599 = vunpack.c.l.b16 %v1960
        %v2600 = vunpack.c.l.b16 %v1963
        %v2601 = vunpack.c.l.b16 %v1967
        %v2602 = vunpack.c.l.b16 %v1970
        %v2603 = vunpack.c.l.b16 %v1974
        %v2604 = vunpack.c.l.b16 %v1977
        %v2605 = vunpack.c.l.b16 %v1981
        %v2606 = vunpack.c.l.b16 %v1984
        %v2607 = vunpack.c.l.b16 %v1988
        %v2608 = vunpack.c.l.b16 %v1991
        %v2609 = vunpack.c.l.b16 %v1995
        %v2610 = vunpack.c.l.b16 %v1998
        %v2611 = vunpack.c.l.b16 %v2002
        %v2612 = vunpack.c.l.b16 %v2005
        %v2613 = vunpack.c.l.b16 %v2009
        %v2614 = vunpack.c.l.b16 %v2012
        %v2615 = vunpack.c.l.b16 %v2016
        %v2616 = vunpack.c.l.b16 %v2019
        %v2617 = vunpack.c.l.b16 %v2023
        %v2618 = vunpack.c.l.b16 %v2026
        %v2619 = vpack.c.b16 %v2588, %v2587
        %v2620 = vpack.c.b16 %v2590, %v2589
        %v2621 = vpack.c.b16 %v2592, %v2591
        %v2622 = vpack.c.b16 %v2594, %v2593
        %v2623 = vpack.c.b16 %v2596, %v2595
        %v2624 = vpack.c.b16 %v2598, %v2597
        %v2625 = vpack.c.b16 %v2600, %v2599
        %v2626 = vpack.c.b16 %v2602, %v2601
        %v2627 = vpack.c.b16 %v2604, %v2603
        %v2628 = vpack.c.b16 %v2606, %v2605
        %v2629 = vpack.c.b16 %v2608, %v2607
        %v2630 = vpack.c.b16 %v2610, %v2609
        %v2631 = vpack.c.b16 %v2612, %v2611
        %v2632 = vpack.c.b16 %v2614, %v2613
        %v2633 = vpack.c.b16 %v2616, %v2615
        %v2634 = vpack.c.b16 %v2618, %v2617
        %v2651 = vld [vmem:[%s1] sm:$0xf]
        %v2652 = vld [vmem:[%s1 + $0x4] sm:$0xf]
        %v2653 = vld [vmem:[%s1 + $0x8] sm:$0xf]
        %v2654 = vld [vmem:[%s1 + $0xc] sm:$0xf]
        %v2655 = vld [vmem:[%s1 + $0x10] sm:$0xf]
        %v2656 = vld [vmem:[%s1 + $0x14] sm:$0xf]
        %v2657 = vld [vmem:[%s1 + $0x18] sm:$0xf]
        %v2658 = vld [vmem:[%s1 + $0x1c] sm:$0xf]
        %v2659 = vld [vmem:[%s1 + $0x20] sm:$0xf]
        %v2660 = vld [vmem:[%s1 + $0x24] sm:$0xf]
        %v2661 = vld [vmem:[%s1 + $0x28] sm:$0xf]
        %v2662 = vld [vmem:[%s1 + $0x2c] sm:$0xf]
        %v2663 = vld [vmem:[%s1 + $0x30] sm:$0xf]
        %v2664 = vld [vmem:[%s1 + $0x34] sm:$0xf]
        %v2665 = vld [vmem:[%s1 + $0x38] sm:$0xf]
        %v2666 = vld [vmem:[%s1 + $0x3c] sm:$0xf]
        %v2667 = vld [vmem:[%s1 + $0x40] sm:$0xf]
        %v2668 = vld [vmem:[%s1 + $0x44] sm:$0xf]
        %v2669 = vld [vmem:[%s1 + $0x48] sm:$0xf]
        %v2670 = vld [vmem:[%s1 + $0x4c] sm:$0xf]
        %v2671 = vld [vmem:[%s1 + $0x50] sm:$0xf]
        %v2672 = vld [vmem:[%s1 + $0x54] sm:$0xf]
        %v2673 = vld [vmem:[%s1 + $0x58] sm:$0xf]
        %v2674 = vld [vmem:[%s1 + $0x5c] sm:$0xf]
        %v2675 = vld [vmem:[%s1 + $0x60] sm:$0xf]
        %v2676 = vld [vmem:[%s1 + $0x64] sm:$0xf]
        %v2677 = vld [vmem:[%s1 + $0x68] sm:$0xf]
        %v2678 = vld [vmem:[%s1 + $0x6c] sm:$0xf]
        %v2679 = vld [vmem:[%s1 + $0x70] sm:$0xf]
        %v2680 = vld [vmem:[%s1 + $0x74] sm:$0xf]
        %v2681 = vld [vmem:[%s1 + $0x78] sm:$0xf]
        %v2682 = vld [vmem:[%s1 + $0x7c] sm:$0xf]
        %v2683 = vld [vmem:[%s1 + $0x80] sm:$0xf]
        %v2684 = vld [vmem:[%s1 + $0x84] sm:$0xf]
        %v2685 = vld [vmem:[%s1 + $0x88] sm:$0xf]
        %v2686 = vld [vmem:[%s1 + $0x8c] sm:$0xf]
        %v2687 = vld [vmem:[%s1 + $0x90] sm:$0xf]
        %v2688 = vld [vmem:[%s1 + $0x94] sm:$0xf]
        %v2689 = vld [vmem:[%s1 + $0x98] sm:$0xf]
        %v2690 = vld [vmem:[%s1 + $0x9c] sm:$0xf]
        %v2691 = vld [vmem:[%s1 + $0xa0] sm:$0xf]
        %v2692 = vld [vmem:[%s1 + $0xa4] sm:$0xf]
        %v2693 = vld [vmem:[%s1 + $0xa8] sm:$0xf]
        %v2694 = vld [vmem:[%s1 + $0xac] sm:$0xf]
        %v2695 = vld [vmem:[%s1 + $0xb0] sm:$0xf]
        %v2696 = vld [vmem:[%s1 + $0xb4] sm:$0xf]
        %v2697 = vld [vmem:[%s1 + $0xb8] sm:$0xf]
        %v2698 = vld [vmem:[%s1 + $0xbc] sm:$0xf]
        %v2699 = vld [vmem:[%s1 + $0xc0] sm:$0xf]
        %v2700 = vld [vmem:[%s1 + $0xc4] sm:$0xf]
        %v2701 = vld [vmem:[%s1 + $0xc8] sm:$0xf]
        %v2702 = vld [vmem:[%s1 + $0xcc] sm:$0xf]
        %v2703 = vld [vmem:[%s1 + $0xd0] sm:$0xf]
        %v2704 = vld [vmem:[%s1 + $0xd4] sm:$0xf]
        %v2705 = vld [vmem:[%s1 + $0xd8] sm:$0xf]
        %v2706 = vld [vmem:[%s1 + $0xdc] sm:$0xf]
        %v2707 = vld [vmem:[%s1 + $0xe0] sm:$0xf]
        %v2708 = vld [vmem:[%s1 + $0xe4] sm:$0xf]
        %v2709 = vld [vmem:[%s1 + $0xe8] sm:$0xf]
        %v2710 = vld [vmem:[%s1 + $0xec] sm:$0xf]
        %v2711 = vld [vmem:[%s1 + $0xf0] sm:$0xf]
        %v2712 = vld [vmem:[%s1 + $0xf4] sm:$0xf]
        %v2713 = vld [vmem:[%s1 + $0xf8] sm:$0xf]
        %v2714 = vld [vmem:[%s1 + $0xfc] sm:$0xf]
        %v2715 = vld [vmem:[%s1 + $0x100] sm:$0xf]
        %v2716 = vld [vmem:[%s1 + $0x104] sm:$0xf]
        %v2717 = vld [vmem:[%s1 + $0x108] sm:$0xf]
        %v2718 = vld [vmem:[%s1 + $0x10c] sm:$0xf]
        %v2719 = vld [vmem:[%s1 + $0x110] sm:$0xf]
        %v2720 = vld [vmem:[%s1 + $0x114] sm:$0xf]
        %v2721 = vld [vmem:[%s1 + $0x118] sm:$0xf]
        %v2722 = vld [vmem:[%s1 + $0x11c] sm:$0xf]
        %v2723 = vld [vmem:[%s1 + $0x120] sm:$0xf]
        %v2724 = vld [vmem:[%s1 + $0x124] sm:$0xf]
        %v2725 = vld [vmem:[%s1 + $0x128] sm:$0xf]
        %v2726 = vld [vmem:[%s1 + $0x12c] sm:$0xf]
        %v2727 = vld [vmem:[%s1 + $0x130] sm:$0xf]
        %v2728 = vld [vmem:[%s1 + $0x134] sm:$0xf]
        %v2729 = vld [vmem:[%s1 + $0x138] sm:$0xf]
        %v2730 = vld [vmem:[%s1 + $0x13c] sm:$0xf]
        %v2731 = vld [vmem:[%s1 + $0x140] sm:$0xf]
        %v2732 = vld [vmem:[%s1 + $0x144] sm:$0xf]
        %v2733 = vld [vmem:[%s1 + $0x148] sm:$0xf]
        %v2734 = vld [vmem:[%s1 + $0x14c] sm:$0xf]
        %v2735 = vld [vmem:[%s1 + $0x150] sm:$0xf]
        %v2736 = vld [vmem:[%s1 + $0x154] sm:$0xf]
        %v2737 = vld [vmem:[%s1 + $0x158] sm:$0xf]
        %v2738 = vld [vmem:[%s1 + $0x15c] sm:$0xf]
        %v2739 = vld [vmem:[%s1 + $0x160] sm:$0xf]
        %v2740 = vld [vmem:[%s1 + $0x164] sm:$0xf]
        %v2741 = vld [vmem:[%s1 + $0x168] sm:$0xf]
        %v2742 = vld [vmem:[%s1 + $0x16c] sm:$0xf]
        %v2743 = vld [vmem:[%s1 + $0x170] sm:$0xf]
        %v2744 = vld [vmem:[%s1 + $0x174] sm:$0xf]
        %v2745 = vld [vmem:[%s1 + $0x178] sm:$0xf]
        %v2746 = vld [vmem:[%s1 + $0x17c] sm:$0xf]
        %v2747 = vld [vmem:[%s1 + $0x180] sm:$0xf]
        %v2748 = vld [vmem:[%s1 + $0x184] sm:$0xf]
        %v2749 = vld [vmem:[%s1 + $0x188] sm:$0xf]
        %v2750 = vld [vmem:[%s1 + $0x18c] sm:$0xf]
        %v2751 = vld [vmem:[%s1 + $0x190] sm:$0xf]
        %v2752 = vld [vmem:[%s1 + $0x194] sm:$0xf]
        %v2753 = vld [vmem:[%s1 + $0x198] sm:$0xf]
        %v2754 = vld [vmem:[%s1 + $0x19c] sm:$0xf]
        %v2755 = vld [vmem:[%s1 + $0x1a0] sm:$0xf]
        %v2756 = vld [vmem:[%s1 + $0x1a4] sm:$0xf]
        %v2757 = vld [vmem:[%s1 + $0x1a8] sm:$0xf]
        %v2758 = vld [vmem:[%s1 + $0x1ac] sm:$0xf]
        %v2759 = vld [vmem:[%s1 + $0x1b0] sm:$0xf]
        %v2760 = vld [vmem:[%s1 + $0x1b4] sm:$0xf]
        %v2761 = vld [vmem:[%s1 + $0x1b8] sm:$0xf]
        %v2762 = vld [vmem:[%s1 + $0x1bc] sm:$0xf]
        %v2763 = vld [vmem:[%s1 + $0x1c0] sm:$0xf]
        %v2764 = vld [vmem:[%s1 + $0x1c4] sm:$0xf]
        %v2765 = vld [vmem:[%s1 + $0x1c8] sm:$0xf]
        %v2766 = vld [vmem:[%s1 + $0x1cc] sm:$0xf]
        %v2767 = vld [vmem:[%s1 + $0x1d0] sm:$0xf]
        %v2768 = vld [vmem:[%s1 + $0x1d4] sm:$0xf]
        %v2769 = vld [vmem:[%s1 + $0x1d8] sm:$0xf]
        %v2770 = vld [vmem:[%s1 + $0x1dc] sm:$0xf]
        %v2771 = vld [vmem:[%s1 + $0x1e0] sm:$0xf]
        %v2772 = vld [vmem:[%s1 + $0x1e4] sm:$0xf]
        %v2773 = vld [vmem:[%s1 + $0x1e8] sm:$0xf]
        %v2774 = vld [vmem:[%s1 + $0x1ec] sm:$0xf]
        %v2775 = vld [vmem:[%s1 + $0x1f0] sm:$0xf]
        %v2776 = vld [vmem:[%s1 + $0x1f4] sm:$0xf]
        %v2777 = vld [vmem:[%s1 + $0x1f8] sm:$0xf]
        %v2778 = vld [vmem:[%s1 + $0x1fc] sm:$0xf]
        %v2779 = vld [vmem:[%s1 + $0x200] sm:$0xf]
        %v2780 = vld [vmem:[%s1 + $0x204] sm:$0xf]
        %v2781 = vld [vmem:[%s1 + $0x208] sm:$0xf]
        %v2782 = vld [vmem:[%s1 + $0x20c] sm:$0xf]
        %v2783 = vld [vmem:[%s1 + $0x210] sm:$0xf]
        %v2784 = vld [vmem:[%s1 + $0x214] sm:$0xf]
        %v2785 = vld [vmem:[%s1 + $0x218] sm:$0xf]
        %v2786 = vld [vmem:[%s1 + $0x21c] sm:$0xf]
        %v2787 = vld [vmem:[%s1 + $0x220] sm:$0xf]
        %v2788 = vld [vmem:[%s1 + $0x224] sm:$0xf]
        %v2789 = vld [vmem:[%s1 + $0x228] sm:$0xf]
        %v2790 = vld [vmem:[%s1 + $0x22c] sm:$0xf]
        %v2791 = vld [vmem:[%s1 + $0x230] sm:$0xf]
        %v2792 = vld [vmem:[%s1 + $0x234] sm:$0xf]
        %v2793 = vld [vmem:[%s1 + $0x238] sm:$0xf]
        %v2794 = vld [vmem:[%s1 + $0x23c] sm:$0xf]
        %v2795 = vld [vmem:[%s2] sm:$0x1]
        %v2797 = vlaneseq
        %v2798 = vshrl.u32 %v2797, 7
        %v2799 = vsub.s32 0, %v2798
        %v2800 = vrot.slane %v2795, %v2799
        %v2946 = vunpack.c.l.b16 %v2651
        %v2947 = vunpack.c.l.b16 %v2652
        %v2948 = vunpack.c.l.b16 %v2653
        %v2949 = vunpack.c.l.b16 %v2654
        %v2950 = vunpack.c.l.b16 %v2655
        %v2951 = vunpack.c.l.b16 %v2656
        %v2952 = vunpack.c.l.b16 %v2657
        %v2953 = vunpack.c.l.b16 %v2658
        %v2954 = vunpack.c.l.b16 %v2659
        %v2955 = vunpack.c.l.b16 %v2660
        %v2956 = vunpack.c.l.b16 %v2661
        %v2957 = vunpack.c.l.b16 %v2662
        %v2958 = vunpack.c.l.b16 %v2663
        %v2959 = vunpack.c.l.b16 %v2664
        %v2960 = vunpack.c.l.b16 %v2665
        %v2961 = vunpack.c.l.b16 %v2666
        %v2962 = vunpack.c.l.b16 %v2667
        %v2963 = vunpack.c.l.b16 %v2668
        %v2964 = vunpack.c.l.b16 %v2669
        %v2965 = vunpack.c.l.b16 %v2670
        %v2966 = vunpack.c.l.b16 %v2671
        %v2967 = vunpack.c.l.b16 %v2672
        %v2968 = vunpack.c.l.b16 %v2673
        %v2969 = vunpack.c.l.b16 %v2674
        %v2970 = vunpack.c.l.b16 %v2675
        %v2971 = vunpack.c.l.b16 %v2676
        %v2972 = vunpack.c.l.b16 %v2677
        %v2973 = vunpack.c.l.b16 %v2678
        %v2974 = vunpack.c.l.b16 %v2679
        %v2975 = vunpack.c.l.b16 %v2680
        %v2976 = vunpack.c.l.b16 %v2681
        %v2977 = vunpack.c.l.b16 %v2682
        %v2978 = vunpack.c.l.b16 %v2683
        %v2979 = vunpack.c.l.b16 %v2684
        %v2980 = vunpack.c.l.b16 %v2685
        %v2981 = vunpack.c.l.b16 %v2686
        %v2982 = vunpack.c.l.b16 %v2687
        %v2983 = vunpack.c.l.b16 %v2688
        %v2984 = vunpack.c.l.b16 %v2689
        %v2985 = vunpack.c.l.b16 %v2690
        %v2986 = vunpack.c.l.b16 %v2691
        %v2987 = vunpack.c.l.b16 %v2692
        %v2988 = vunpack.c.l.b16 %v2693
        %v2989 = vunpack.c.l.b16 %v2694
        %v2990 = vunpack.c.l.b16 %v2695
        %v2991 = vunpack.c.l.b16 %v2696
        %v2992 = vunpack.c.l.b16 %v2697
        %v2993 = vunpack.c.l.b16 %v2698
        %v2994 = vunpack.c.l.b16 %v2699
        %v2995 = vunpack.c.l.b16 %v2700
        %v2996 = vunpack.c.l.b16 %v2701
        %v2997 = vunpack.c.l.b16 %v2702
        %v2998 = vunpack.c.l.b16 %v2703
        %v2999 = vunpack.c.l.b16 %v2704
        %v3000 = vunpack.c.l.b16 %v2705
        %v3001 = vunpack.c.l.b16 %v2706
        %v3002 = vunpack.c.l.b16 %v2707
        %v3003 = vunpack.c.l.b16 %v2708
        %v3004 = vunpack.c.l.b16 %v2709
        %v3005 = vunpack.c.l.b16 %v2710
        %v3006 = vunpack.c.l.b16 %v2711
        %v3007 = vunpack.c.l.b16 %v2712
        %v3008 = vunpack.c.l.b16 %v2713
        %v3009 = vunpack.c.l.b16 %v2714
        %v3010 = vunpack.c.l.b16 %v2715
        %v3011 = vunpack.c.l.b16 %v2716
        %v3012 = vunpack.c.l.b16 %v2717
        %v3013 = vunpack.c.l.b16 %v2718
        %v3014 = vunpack.c.l.b16 %v2719
        %v3015 = vunpack.c.l.b16 %v2720
        %v3016 = vunpack.c.l.b16 %v2721
        %v3017 = vunpack.c.l.b16 %v2722
        %v3018 = vunpack.c.l.b16 %v2723
        %v3019 = vunpack.c.l.b16 %v2724
        %v3020 = vunpack.c.l.b16 %v2725
        %v3021 = vunpack.c.l.b16 %v2726
        %v3022 = vunpack.c.l.b16 %v2727
        %v3023 = vunpack.c.l.b16 %v2728
        %v3024 = vunpack.c.l.b16 %v2729
        %v3025 = vunpack.c.l.b16 %v2730
        %v3026 = vunpack.c.l.b16 %v2731
        %v3027 = vunpack.c.l.b16 %v2732
        %v3028 = vunpack.c.l.b16 %v2733
        %v3029 = vunpack.c.l.b16 %v2734
        %v3030 = vunpack.c.l.b16 %v2735
        %v3031 = vunpack.c.l.b16 %v2736
        %v3032 = vunpack.c.l.b16 %v2737
        %v3033 = vunpack.c.l.b16 %v2738
        %v3034 = vunpack.c.l.b16 %v2739
        %v3035 = vunpack.c.l.b16 %v2740
        %v3036 = vunpack.c.l.b16 %v2741
        %v3037 = vunpack.c.l.b16 %v2742
        %v3038 = vunpack.c.l.b16 %v2743
        %v3039 = vunpack.c.l.b16 %v2744
        %v3040 = vunpack.c.l.b16 %v2745
        %v3041 = vunpack.c.l.b16 %v2746
        %v3042 = vunpack.c.l.b16 %v2747
        %v3043 = vunpack.c.l.b16 %v2748
        %v3044 = vunpack.c.l.b16 %v2749
        %v3045 = vunpack.c.l.b16 %v2750
        %v3046 = vunpack.c.l.b16 %v2751
        %v3047 = vunpack.c.l.b16 %v2752
        %v3048 = vunpack.c.l.b16 %v2753
        %v3049 = vunpack.c.l.b16 %v2754
        %v3050 = vunpack.c.l.b16 %v2755
        %v3051 = vunpack.c.l.b16 %v2756
        %v3052 = vunpack.c.l.b16 %v2757
        %v3053 = vunpack.c.l.b16 %v2758
        %v3054 = vunpack.c.l.b16 %v2759
        %v3055 = vunpack.c.l.b16 %v2760
        %v3056 = vunpack.c.l.b16 %v2761
        %v3057 = vunpack.c.l.b16 %v2762
        %v3058 = vunpack.c.l.b16 %v2763
        %v3059 = vunpack.c.l.b16 %v2764
        %v3060 = vunpack.c.l.b16 %v2765
        %v3061 = vunpack.c.l.b16 %v2766
        %v3062 = vunpack.c.l.b16 %v2767
        %v3063 = vunpack.c.l.b16 %v2768
        %v3064 = vunpack.c.l.b16 %v2769
        %v3065 = vunpack.c.l.b16 %v2770
        %v3066 = vunpack.c.l.b16 %v2771
        %v3067 = vunpack.c.l.b16 %v2772
        %v3068 = vunpack.c.l.b16 %v2773
        %v3069 = vunpack.c.l.b16 %v2774
        %v3070 = vunpack.c.l.b16 %v2775
        %v3071 = vunpack.c.l.b16 %v2776
        %v3072 = vunpack.c.l.b16 %v2777
        %v3073 = vunpack.c.l.b16 %v2778
        %v3074 = vunpack.c.l.b16 %v2779
        %v3075 = vunpack.c.l.b16 %v2780
        %v3076 = vunpack.c.l.b16 %v2781
        %v3077 = vunpack.c.l.b16 %v2782
        %v3078 = vunpack.c.l.b16 %v2783
        %v3079 = vunpack.c.l.b16 %v2784
        %v3080 = vunpack.c.l.b16 %v2785
        %v3081 = vunpack.c.l.b16 %v2786
        %v3082 = vunpack.c.l.b16 %v2787
        %v3083 = vunpack.c.l.b16 %v2788
        %v3084 = vunpack.c.l.b16 %v2789
        %v3085 = vunpack.c.l.b16 %v2790
        %v3086 = vunpack.c.l.b16 %v2791
        %v3087 = vunpack.c.l.b16 %v2792
        %v3088 = vunpack.c.l.b16 %v2793
        %v3089 = vunpack.c.l.b16 %v2794
        %v3090 = vpack.c.b16 %v2947, %v2946
        %v3091 = vpack.c.b16 %v2949, %v2948
        %v3092 = vpack.c.b16 %v2951, %v2950
        %v3093 = vpack.c.b16 %v2953, %v2952
        %v3094 = vpack.c.b16 %v2955, %v2954
        %v3095 = vpack.c.b16 %v2957, %v2956
        %v3096 = vpack.c.b16 %v2959, %v2958
        %v3097 = vpack.c.b16 %v2961, %v2960
        %v3098 = vpack.c.b16 %v2963, %v2962
        %v3099 = vpack.c.b16 %v2965, %v2964
        %v3100 = vpack.c.b16 %v2967, %v2966
        %v3101 = vpack.c.b16 %v2969, %v2968
        %v3102 = vpack.c.b16 %v2971, %v2970
        %v3103 = vpack.c.b16 %v2973, %v2972
        %v3104 = vpack.c.b16 %v2975, %v2974
        %v3105 = vpack.c.b16 %v2977, %v2976
        %v3106 = vpack.c.b16 %v2979, %v2978
        %v3107 = vpack.c.b16 %v2981, %v2980
        %v3108 = vpack.c.b16 %v2983, %v2982
        %v3109 = vpack.c.b16 %v2985, %v2984
        %v3110 = vpack.c.b16 %v2987, %v2986
        %v3111 = vpack.c.b16 %v2989, %v2988
        %v3112 = vpack.c.b16 %v2991, %v2990
        %v3113 = vpack.c.b16 %v2993, %v2992
        %v3114 = vpack.c.b16 %v2995, %v2994
        %v3115 = vpack.c.b16 %v2997, %v2996
        %v3116 = vpack.c.b16 %v2999, %v2998
        %v3117 = vpack.c.b16 %v3001, %v3000
        %v3118 = vpack.c.b16 %v3003, %v3002
        %v3119 = vpack.c.b16 %v3005, %v3004
        %v3120 = vpack.c.b16 %v3007, %v3006
        %v3121 = vpack.c.b16 %v3009, %v3008
        %v3122 = vpack.c.b16 %v3011, %v3010
        %v3123 = vpack.c.b16 %v3013, %v3012
        %v3124 = vpack.c.b16 %v3015, %v3014
        %v3125 = vpack.c.b16 %v3017, %v3016
        %v3126 = vpack.c.b16 %v3019, %v3018
        %v3127 = vpack.c.b16 %v3021, %v3020
        %v3128 = vpack.c.b16 %v3023, %v3022
        %v3129 = vpack.c.b16 %v3025, %v3024
        %v3130 = vpack.c.b16 %v3027, %v3026
        %v3131 = vpack.c.b16 %v3029, %v3028
        %v3132 = vpack.c.b16 %v3031, %v3030
        %v3133 = vpack.c.b16 %v3033, %v3032
        %v3134 = vpack.c.b16 %v3035, %v3034
        %v3135 = vpack.c.b16 %v3037, %v3036
        %v3136 = vpack.c.b16 %v3039, %v3038
        %v3137 = vpack.c.b16 %v3041, %v3040
        %v3138 = vpack.c.b16 %v3043, %v3042
        %v3139 = vpack.c.b16 %v3045, %v3044
        %v3140 = vpack.c.b16 %v3047, %v3046
        %v3141 = vpack.c.b16 %v3049, %v3048
        %v3142 = vpack.c.b16 %v3051, %v3050
        %v3143 = vpack.c.b16 %v3053, %v3052
        %v3144 = vpack.c.b16 %v3055, %v3054
        %v3145 = vpack.c.b16 %v3057, %v3056
        %v3146 = vpack.c.b16 %v3059, %v3058
        %v3147 = vpack.c.b16 %v3061, %v3060
        %v3148 = vpack.c.b16 %v3063, %v3062
        %v3149 = vpack.c.b16 %v3065, %v3064
        %v3150 = vpack.c.b16 %v3067, %v3066
        %v3151 = vpack.c.b16 %v3069, %v3068
        %v3152 = vpack.c.b16 %v3071, %v3070
        %v3153 = vpack.c.b16 %v3073, %v3072
        %v3154 = vpack.c.b16 %v3075, %v3074
        %v3155 = vpack.c.b16 %v3077, %v3076
        %v3156 = vpack.c.b16 %v3079, %v3078
        %v3157 = vpack.c.b16 %v3081, %v3080
        %v3158 = vpack.c.b16 %v3083, %v3082
        %v3159 = vpack.c.b16 %v3085, %v3084
        %v3160 = vpack.c.b16 %v3087, %v3086
        %v3161 = vpack.c.b16 %v3089, %v3088
        %3234 = vmatprep.subr.bf16.mxu0 0
        %3235 = vmatpush1.bf16.msra.mxu0 %v3090
        %3236 = vmatprep.subr.bf16.mxu0 0
        %3237 = vmatpush1.bf16.msra.mxu0 %v3091
        %3238 = vmatprep.subr.bf16.mxu0 0
        %3239 = vmatpush1.bf16.msra.mxu0 %v3092
        %3240 = vmatprep.subr.bf16.mxu0 0
        %3241 = vmatpush1.bf16.msra.mxu0 %v3093
        %3242 = vmatprep.subr.bf16.mxu0 0
        %3243 = vmatpush1.bf16.msra.mxu0 %v3094
        %3244 = vmatprep.subr.bf16.mxu0 0
        %3245 = vmatpush1.bf16.msra.mxu0 %v3095
        %3246 = vmatprep.subr.bf16.mxu0 0
        %3247 = vmatpush1.bf16.msra.mxu0 %v3096
        %3248 = vmatprep.subr.bf16.mxu0 0
        %3249 = vmatpush1.bf16.msra.mxu0 %v3097
        %3250 = vmatprep.subr.bf16.mxu0 0
        %3251 = vmatpush1.bf16.msra.mxu0 %v3098
        %3252 = vmatprep.subr.bf16.mxu0 0
        %3253 = vmatpush1.bf16.msra.mxu0 %v3099
        %3254 = vmatprep.subr.bf16.mxu0 0
        %3255 = vmatpush1.bf16.msra.mxu0 %v3100
        %3256 = vmatprep.subr.bf16.mxu0 0
        %3257 = vmatpush1.bf16.msra.mxu0 %v3101
        %3258 = vmatprep.subr.bf16.mxu0 0
        %3259 = vmatpush1.bf16.msra.mxu0 %v3102
        %3260 = vmatprep.subr.bf16.mxu0 0
        %3261 = vmatpush1.bf16.msra.mxu0 %v3103
        %3262 = vmatprep.subr.bf16.mxu0 0
        %3263 = vmatpush1.bf16.msra.mxu0 %v3104
        %3264 = vmatprep.subr.bf16.mxu0 0
        %3265 = vmatpush1.bf16.msra.mxu0 %v3105
        %3266 = vmatprep.mubr.bf16.mxu0 %v2139
        %3267 = vmatmul.mubr.bf16.gmra.mrb[0].mxu0 %v2075
        %v3268 = vpop.f32.mrb[0].mxu0
        %v3269 = vadd.f32 %v2800, %v3268
        %v3270 = vpop.f32.mrb[0].mxu0
        %v3271 = vpop.f32.mrb[0].mxu0
        %v3272 = vadd.f32 %v2800, %v3271
        %v3273 = vpop.f32.mrb[0].mxu0
        %3274 = vmatprep.mubr.bf16.mxu0 %v2140
        %3275 = vmatmul.mubr.bf16.gmra.mrb[0].mxu0 %v2076
        %v3276 = vpop.f32.mrb[0].mxu0
        %v3277 = vadd.f32 %v2800, %v3276
        %v3278 = vpop.f32.mrb[0].mxu0
        %v3279 = vpop.f32.mrb[0].mxu0
        %v3280 = vadd.f32 %v2800, %v3279
        %v3281 = vpop.f32.mrb[0].mxu0
        %3282 = vmatprep.mubr.bf16.mxu0 %v2141
        %3283 = vmatmul.mubr.bf16.gmra.mrb[0].mxu0 %v2077
        %v3284 = vpop.f32.mrb[0].mxu0
        %v3285 = vadd.f32 %v2800, %v3284
        %v3286 = vpop.f32.mrb[0].mxu0
        %v3287 = vpop.f32.mrb[0].mxu0
        %v3288 = vadd.f32 %v2800, %v3287
        %v3289 = vpop.f32.mrb[0].mxu0
        %3290 = vmatprep.mubr.bf16.mxu0 %v2142
        %3291 = vmatmul.mubr.bf16.gmra.mrb[0].mxu0 %v2078
        %v3292 = vpop.f32.mrb[0].mxu0
        %v3293 = vadd.f32 %v2800, %v3292
        %v3294 = vpop.f32.mrb[0].mxu0
        %v3295 = vpop.f32.mrb[0].mxu0
        %v3296 = vadd.f32 %v2800, %v3295
        %v3297 = vpop.f32.mrb[0].mxu0
        %3298 = vmatprep.mubr.bf16.mxu0 %v2143
        %3299 = vmatmul.mubr.bf16.gmra.mrb[0].mxu0 %v2079
        %v3300 = vpop.f32.mrb[0].mxu0
        %v3301 = vadd.f32 %v2800, %v3300
        %v3302 = vpop.f32.mrb[0].mxu0
        %v3303 = vpop.f32.mrb[0].mxu0
        %v3304 = vadd.f32 %v2800, %v3303
        %v3305 = vpop.f32.mrb[0].mxu0
        %3306 = vmatprep.mubr.bf16.mxu0 %v2144
        %3307 = vmatmul.mubr.bf16.gmra.mrb[0].mxu0 %v2080
        %v3308 = vpop.f32.mrb[0].mxu0
        %v3309 = vadd.f32 %v2800, %v3308
        %v3310 = vpop.f32.mrb[0].mxu0
        %v3311 = vpop.f32.mrb[0].mxu0
        %v3312 = vadd.f32 %v2800, %v3311
        %v3313 = vpop.f32.mrb[0].mxu0
        %3314 = vmatprep.mubr.bf16.mxu0 %v2145
        %3315 = vmatmul.mubr.bf16.gmra.mrb[0].mxu0 %v2081
        %v3316 = vpop.f32.mrb[0].mxu0
        %v3317 = vadd.f32 %v2800, %v3316
        %v3318 = vpop.f32.mrb[0].mxu0
        %v3319 = vpop.f32.mrb[0].mxu0
        %v3320 = vadd.f32 %v2800, %v3319
        %v3321 = vpop.f32.mrb[0].mxu0
        %3322 = vmatprep.mubr.bf16.mxu0 %v2146
        %3323 = vmatmul.mubr.bf16.gmra.mrb[0].mxu0 %v2082
        %v3324 = vpop.f32.mrb[0].mxu0
        %v3325 = vadd.f32 %v2800, %v3324
        %v3326 = vpop.f32.mrb[0].mxu0
        %v3327 = vpop.f32.mrb[0].mxu0
        %v3328 = vadd.f32 %v2800, %v3327
        %v3329 = vpop.f32.mrb[0].mxu0
        %3330 = vmatprep.mubr.bf16.mxu0 %v2147
        %3331 = vmatmul.mubr.bf16.gmra.mrb[0].mxu0 %v2083
        %v3332 = vpop.f32.mrb[0].mxu0
        %v3333 = vadd.f32 %v2800, %v3332
        %v3334 = vpop.f32.mrb[0].mxu0
        %v3335 = vpop.f32.mrb[0].mxu0
        %v3336 = vadd.f32 %v2800, %v3335
        %v3337 = vpop.f32.mrb[0].mxu0
        %3338 = vmatprep.mubr.bf16.mxu0 %v2148
        %3339 = vmatmul.mubr.bf16.gmra.mrb[0].mxu0 %v2084
        %v3340 = vpop.f32.mrb[0].mxu0
        %v3341 = vadd.f32 %v2800, %v3340
        %v3342 = vpop.f32.mrb[0].mxu0
        %v3343 = vpop.f32.mrb[0].mxu0
        %v3344 = vadd.f32 %v2800, %v3343
        %v3345 = vpop.f32.mrb[0].mxu0
        %3346 = vmatprep.mubr.bf16.mxu0 %v2149
        %3347 = vmatmul.mubr.bf16.gmra.mrb[0].mxu0 %v2085
        %v3348 = vpop.f32.mrb[0].mxu0
        %v3349 = vadd.f32 %v2800, %v3348
        %v3350 = vpop.f32.mrb[0].mxu0
        %v3351 = vpop.f32.mrb[0].mxu0
        %v3352 = vadd.f32 %v2800, %v3351
        %v3353 = vpop.f32.mrb[0].mxu0
        %3354 = vmatprep.mubr.bf16.mxu0 %v2150
        %3355 = vmatmul.mubr.bf16.gmra.mrb[0].mxu0 %v2086
        %v3356 = vpop.f32.mrb[0].mxu0
        %v3357 = vadd.f32 %v2800, %v3356
        %v3358 = vpop.f32.mrb[0].mxu0
        %v3359 = vpop.f32.mrb[0].mxu0
        %v3360 = vadd.f32 %v2800, %v3359
        %v3361 = vpop.f32.mrb[0].mxu0
        %3362 = vmatprep.mubr.bf16.mxu0 %v2151
        %3363 = vmatmul.mubr.bf16.gmra.mrb[0].mxu0 %v2087
        %v3364 = vpop.f32.mrb[0].mxu0
        %v3365 = vadd.f32 %v2800, %v3364
        %v3366 = vpop.f32.mrb[0].mxu0
        %v3367 = vpop.f32.mrb[0].mxu0
        %v3368 = vadd.f32 %v2800, %v3367
        %v3369 = vpop.f32.mrb[0].mxu0
        %3370 = vmatprep.mubr.bf16.mxu0 %v2152
        %3371 = vmatmul.mubr.bf16.gmra.mrb[0].mxu0 %v2088
        %v3372 = vpop.f32.mrb[0].mxu0
        %v3373 = vadd.f32 %v2800, %v3372
        %v3374 = vpop.f32.mrb[0].mxu0
        %v3375 = vpop.f32.mrb[0].mxu0
        %v3376 = vadd.f32 %v2800, %v3375
        %v3377 = vpop.f32.mrb[0].mxu0
        %3378 = vmatprep.mubr.bf16.mxu0 %v2153
        %3379 = vmatmul.mubr.bf16.gmra.mrb[0].mxu0 %v2089
        %v3380 = vpop.f32.mrb[0].mxu0
        %v3381 = vadd.f32 %v2800, %v3380
        %v3382 = vpop.f32.mrb[0].mxu0
        %v3383 = vpop.f32.mrb[0].mxu0
        %v3384 = vadd.f32 %v2800, %v3383
        %v3385 = vpop.f32.mrb[0].mxu0
        %3386 = vmatprep.mubr.bf16.mxu0 %v2154
        %3387 = vmatmul.mubr.bf16.gmra.mrb[0].mxu0 %v2090
        %v3388 = vpop.f32.mrb[0].mxu0
        %v3389 = vadd.f32 %v2800, %v3388
        %v3390 = vpop.f32.mrb[0].mxu0
        %v3391 = vpop.f32.mrb[0].mxu0
        %v3392 = vadd.f32 %v2800, %v3391
        %v3393 = vpop.f32.mrb[0].mxu0
        %3394 = vdwg.mxu0
        %3395 = vmatprep.subr.bf16.mxu0 0
        %3396 = vmatpush1.bf16.msra.mxu0 %v3106
        %3397 = vmatprep.subr.bf16.mxu0 0
        %3398 = vmatpush1.bf16.msra.mxu0 %v3107
        %3399 = vmatprep.subr.bf16.mxu0 0
        %3400 = vmatpush1.bf16.msra.mxu0 %v3108
        %3401 = vmatprep.subr.bf16.mxu0 0
        %3402 = vmatpush1.bf16.msra.mxu0 %v3109
        %3403 = vmatprep.subr.bf16.mxu0 0
        %3404 = vmatpush1.bf16.msra.mxu0 %v3110
        %3405 = vmatprep.subr.bf16.mxu0 0
        %3406 = vmatpush1.bf16.msra.mxu0 %v3111
        %3407 = vmatprep.subr.bf16.mxu0 0
        %3408 = vmatpush1.bf16.msra.mxu0 %v3112
        %3409 = vmatprep.subr.bf16.mxu0 0
        %3410 = vmatpush1.bf16.msra.mxu0 %v3113
        %3411 = vmatprep.subr.bf16.mxu0 0
        %3412 = vmatpush1.bf16.msra.mxu0 %v3114
        %3413 = vmatprep.subr.bf16.mxu0 0
        %3414 = vmatpush1.bf16.msra.mxu0 %v3115
        %3415 = vmatprep.subr.bf16.mxu0 0
        %3416 = vmatpush1.bf16.msra.mxu0 %v3116
        %3417 = vmatprep.subr.bf16.mxu0 0
        %3418 = vmatpush1.bf16.msra.mxu0 %v3117
        %3419 = vmatprep.subr.bf16.mxu0 0
        %3420 = vmatpush1.bf16.msra.mxu0 %v3118
        %3421 = vmatprep.subr.bf16.mxu0 0
        %3422 = vmatpush1.bf16.msra.mxu0 %v3119
        %3423 = vmatprep.subr.bf16.mxu0 0
        %3424 = vmatpush1.bf16.msra.mxu0 %v3120
        %3425 = vmatprep.subr.bf16.mxu0 0
        %3426 = vmatpush1.bf16.msra.mxu0 %v3121
        %3427 = vmatprep.mubr.bf16.mxu0 %v2283
        %3428 = vmatmul.mubr.bf16.gmra.mrb[0].mxu0 %v2203
        %v3429 = vpop.f32.mrb[0].mxu0
        %v3430 = vadd.f32 %v3269, %v3429
        %v3431 = vpop.f32.mrb[0].mxu0
        %v3432 = vpop.f32.mrb[0].mxu0
        %v3433 = vadd.f32 %v3272, %v3432
        %v3434 = vpop.f32.mrb[0].mxu0
        %3435 = vmatprep.mubr.bf16.mxu0 %v2284
        %3436 = vmatmul.mubr.bf16.gmra.mrb[0].mxu0 %v2204
        %v3437 = vpop.f32.mrb[0].mxu0
        %v3438 = vadd.f32 %v3277, %v3437
        %v3439 = vpop.f32.mrb[0].mxu0
        %v3440 = vpop.f32.mrb[0].mxu0
        %v3441 = vadd.f32 %v3280, %v3440
        %v3442 = vpop.f32.mrb[0].mxu0
        %3443 = vmatprep.mubr.bf16.mxu0 %v2285
        %3444 = vmatmul.mubr.bf16.gmra.mrb[0].mxu0 %v2205
        %v3445 = vpop.f32.mrb[0].mxu0
        %v3446 = vadd.f32 %v3285, %v3445
        %v3447 = vpop.f32.mrb[0].mxu0
        %v3448 = vpop.f32.mrb[0].mxu0
        %v3449 = vadd.f32 %v3288, %v3448
        %v3450 = vpop.f32.mrb[0].mxu0
        %3451 = vmatprep.mubr.bf16.mxu0 %v2286
        %3452 = vmatmul.mubr.bf16.gmra.mrb[0].mxu0 %v2206
        %v3453 = vpop.f32.mrb[0].mxu0
        %v3454 = vadd.f32 %v3293, %v3453
        %v3455 = vpop.f32.mrb[0].mxu0
        %v3456 = vpop.f32.mrb[0].mxu0
        %v3457 = vadd.f32 %v3296, %v3456
        %v3458 = vpop.f32.mrb[0].mxu0
        %3459 = vmatprep.mubr.bf16.mxu0 %v2287
        %3460 = vmatmul.mubr.bf16.gmra.mrb[0].mxu0 %v2207
        %v3461 = vpop.f32.mrb[0].mxu0
        %v3462 = vadd.f32 %v3301, %v3461
        %v3463 = vpop.f32.mrb[0].mxu0
        %v3464 = vpop.f32.mrb[0].mxu0
        %v3465 = vadd.f32 %v3304, %v3464
        %v3466 = vpop.f32.mrb[0].mxu0
        %3467 = vmatprep.mubr.bf16.mxu0 %v2288
        %3468 = vmatmul.mubr.bf16.gmra.mrb[0].mxu0 %v2208
        %v3469 = vpop.f32.mrb[0].mxu0
        %v3470 = vadd.f32 %v3309, %v3469
        %v3471 = vpop.f32.mrb[0].mxu0
        %v3472 = vpop.f32.mrb[0].mxu0
        %v3473 = vadd.f32 %v3312, %v3472
        %v3474 = vpop.f32.mrb[0].mxu0
        %3475 = vmatprep.mubr.bf16.mxu0 %v2289
        %3476 = vmatmul.mubr.bf16.gmra.mrb[0].mxu0 %v2209
        %v3477 = vpop.f32.mrb[0].mxu0
        %v3478 = vadd.f32 %v3317, %v3477
        %v3479 = vpop.f32.mrb[0].mxu0
        %v3480 = vpop.f32.mrb[0].mxu0
        %v3481 = vadd.f32 %v3320, %v3480
        %v3482 = vpop.f32.mrb[0].mxu0
        %3483 = vmatprep.mubr.bf16.mxu0 %v2290
        %3484 = vmatmul.mubr.bf16.gmra.mrb[0].mxu0 %v2210
        %v3485 = vpop.f32.mrb[0].mxu0
        %v3486 = vadd.f32 %v3325, %v3485
        %v3487 = vpop.f32.mrb[0].mxu0
        %v3488 = vpop.f32.mrb[0].mxu0
        %v3489 = vadd.f32 %v3328, %v3488
        %v3490 = vpop.f32.mrb[0].mxu0
        %3491 = vmatprep.mubr.bf16.mxu0 %v2291
        %3492 = vmatmul.mubr.bf16.gmra.mrb[0].mxu0 %v2211
        %v3493 = vpop.f32.mrb[0].mxu0
        %v3494 = vadd.f32 %v3333, %v3493
        %v3495 = vpop.f32.mrb[0].mxu0
        %v3496 = vpop.f32.mrb[0].mxu0
        %v3497 = vadd.f32 %v3336, %v3496
        %v3498 = vpop.f32.mrb[0].mxu0
        %3499 = vmatprep.mubr.bf16.mxu0 %v2292
        %3500 = vmatmul.mubr.bf16.gmra.mrb[0].mxu0 %v2212
        %v3501 = vpop.f32.mrb[0].mxu0
        %v3502 = vadd.f32 %v3341, %v3501
        %v3503 = vpop.f32.mrb[0].mxu0
        %v3504 = vpop.f32.mrb[0].mxu0
        %v3505 = vadd.f32 %v3344, %v3504
        %v3506 = vpop.f32.mrb[0].mxu0
        %3507 = vmatprep.mubr.bf16.mxu0 %v2293
        %3508 = vmatmul.mubr.bf16.gmra.mrb[0].mxu0 %v2213
        %v3509 = vpop.f32.mrb[0].mxu0
        %v3510 = vadd.f32 %v3349, %v3509
        %v3511 = vpop.f32.mrb[0].mxu0
        %v3512 = vpop.f32.mrb[0].mxu0
        %v3513 = vadd.f32 %v3352, %v3512
        %v3514 = vpop.f32.mrb[0].mxu0
        %3515 = vmatprep.mubr.bf16.mxu0 %v2294
        %3516 = vmatmul.mubr.bf16.gmra.mrb[0].mxu0 %v2214
        %v3517 = vpop.f32.mrb[0].mxu0
        %v3518 = vadd.f32 %v3357, %v3517
        %v3519 = vpop.f32.mrb[0].mxu0
        %v3520 = vpop.f32.mrb[0].mxu0
        %v3521 = vadd.f32 %v3360, %v3520
        %v3522 = vpop.f32.mrb[0].mxu0
        %3523 = vmatprep.mubr.bf16.mxu0 %v2295
        %3524 = vmatmul.mubr.bf16.gmra.mrb[0].mxu0 %v2215
        %v3525 = vpop.f32.mrb[0].mxu0
        %v3526 = vadd.f32 %v3365, %v3525
        %v3527 = vpop.f32.mrb[0].mxu0
        %v3528 = vpop.f32.mrb[0].mxu0
        %v3529 = vadd.f32 %v3368, %v3528
        %v3530 = vpop.f32.mrb[0].mxu0
        %3531 = vmatprep.mubr.bf16.mxu0 %v2296
        %3532 = vmatmul.mubr.bf16.gmra.mrb[0].mxu0 %v2216
        %v3533 = vpop.f32.mrb[0].mxu0
        %v3534 = vadd.f32 %v3373, %v3533
        %v3535 = vpop.f32.mrb[0].mxu0
        %v3536 = vpop.f32.mrb[0].mxu0
        %v3537 = vadd.f32 %v3376, %v3536
        %v3538 = vpop.f32.mrb[0].mxu0
        %3539 = vmatprep.mubr.bf16.mxu0 %v2297
        %3540 = vmatmul.mubr.bf16.gmra.mrb[0].mxu0 %v2217
        %v3541 = vpop.f32.mrb[0].mxu0
        %v3542 = vadd.f32 %v3381, %v3541
        %v3543 = vpop.f32.mrb[0].mxu0
        %v3544 = vpop.f32.mrb[0].mxu0
        %v3545 = vadd.f32 %v3384, %v3544
        %v3546 = vpop.f32.mrb[0].mxu0
        %3547 = vmatprep.mubr.bf16.mxu0 %v2298
        %3548 = vmatmul.mubr.bf16.gmra.mrb[0].mxu0 %v2218
        %v3549 = vpop.f32.mrb[0].mxu0
        %v3550 = vadd.f32 %v3389, %v3549
        %v3551 = vpop.f32.mrb[0].mxu0
        %v3552 = vpop.f32.mrb[0].mxu0
        %v3553 = vadd.f32 %v3392, %v3552
        %v3554 = vpop.f32.mrb[0].mxu0
        %3555 = vdwg.mxu0
        %3556 = vmatprep.subr.bf16.mxu0 0
        %3557 = vmatpush1.bf16.msra.mxu0 %v3122
        %3558 = vmatprep.subr.bf16.mxu0 0
        %3559 = vmatpush1.bf16.msra.mxu0 %v3123
        %3560 = vmatprep.subr.bf16.mxu0 0
        %3561 = vmatpush1.bf16.msra.mxu0 %v3124
        %3562 = vmatprep.subr.bf16.mxu0 0
        %3563 = vmatpush1.bf16.msra.mxu0 %v3125
        %3564 = vmatprep.subr.bf16.mxu0 0
        %3565 = vmatpush1.bf16.msra.mxu0 %v3126
        %3566 = vmatprep.subr.bf16.mxu0 0
        %3567 = vmatpush1.bf16.msra.mxu0 %v3127
        %3568 = vmatprep.subr.bf16.mxu0 0
        %3569 = vmatpush1.bf16.msra.mxu0 %v3128
        %3570 = vmatprep.subr.bf16.mxu0 0
        %3571 = vmatpush1.bf16.msra.mxu0 %v3129
        %3572 = vmatprep.subr.bf16.mxu0 0
        %3573 = vmatpush1.bf16.msra.mxu0 %v3130
        %3574 = vmatprep.subr.bf16.mxu0 0
        %3575 = vmatpush1.bf16.msra.mxu0 %v3131
        %3576 = vmatprep.subr.bf16.mxu0 0
        %3577 = vmatpush1.bf16.msra.mxu0 %v3132
        %3578 = vmatprep.subr.bf16.mxu0 0
        %3579 = vmatpush1.bf16.msra.mxu0 %v3133
        %3580 = vmatprep.subr.bf16.mxu0 0
        %3581 = vmatpush1.bf16.msra.mxu0 %v3134
        %3582 = vmatprep.subr.bf16.mxu0 0
        %3583 = vmatpush1.bf16.msra.mxu0 %v3135
        %3584 = vmatprep.subr.bf16.mxu0 0
        %3585 = vmatpush1.bf16.msra.mxu0 %v3136
        %3586 = vmatprep.subr.bf16.mxu0 0
        %3587 = vmatpush1.bf16.msra.mxu0 %v3137
        %3588 = vmatprep.mubr.bf16.mxu0 %v2411
        %3589 = vmatmul.mubr.bf16.gmra.mrb[0].mxu0 %v2347
        %v3590 = vpop.f32.mrb[0].mxu0
        %v3591 = vadd.f32 %v3430, %v3590
        %v3592 = vpop.f32.mrb[0].mxu0
        %v3593 = vpop.f32.mrb[0].mxu0
        %v3594 = vadd.f32 %v3433, %v3593
        %v3595 = vpop.f32.mrb[0].mxu0
        %3596 = vmatprep.mubr.bf16.mxu0 %v2412
        %3597 = vmatmul.mubr.bf16.gmra.mrb[0].mxu0 %v2348
        %v3598 = vpop.f32.mrb[0].mxu0
        %v3599 = vadd.f32 %v3438, %v3598
        %v3600 = vpop.f32.mrb[0].mxu0
        %v3601 = vpop.f32.mrb[0].mxu0
        %v3602 = vadd.f32 %v3441, %v3601
        %v3603 = vpop.f32.mrb[0].mxu0
        %3604 = vmatprep.mubr.bf16.mxu0 %v2413
        %3605 = vmatmul.mubr.bf16.gmra.mrb[0].mxu0 %v2349
        %v3606 = vpop.f32.mrb[0].mxu0
        %v3607 = vadd.f32 %v3446, %v3606
        %v3608 = vpop.f32.mrb[0].mxu0
        %v3609 = vpop.f32.mrb[0].mxu0
        %v3610 = vadd.f32 %v3449, %v3609
        %v3611 = vpop.f32.mrb[0].mxu0
        %3612 = vmatprep.mubr.bf16.mxu0 %v2414
        %3613 = vmatmul.mubr.bf16.gmra.mrb[0].mxu0 %v2350
        %v3614 = vpop.f32.mrb[0].mxu0
        %v3615 = vadd.f32 %v3454, %v3614
        %v3616 = vpop.f32.mrb[0].mxu0
        %v3617 = vpop.f32.mrb[0].mxu0
        %v3618 = vadd.f32 %v3457, %v3617
        %v3619 = vpop.f32.mrb[0].mxu0
        %3620 = vmatprep.mubr.bf16.mxu0 %v2415
        %3621 = vmatmul.mubr.bf16.gmra.mrb[0].mxu0 %v2351
        %v3622 = vpop.f32.mrb[0].mxu0
        %v3623 = vadd.f32 %v3462, %v3622
        %v3624 = vpop.f32.mrb[0].mxu0
        %v3625 = vpop.f32.mrb[0].mxu0
        %v3626 = vadd.f32 %v3465, %v3625
        %v3627 = vpop.f32.mrb[0].mxu0
        %3628 = vmatprep.mubr.bf16.mxu0 %v2416
        %3629 = vmatmul.mubr.bf16.gmra.mrb[0].mxu0 %v2352
        %v3630 = vpop.f32.mrb[0].mxu0
        %v3631 = vadd.f32 %v3470, %v3630
        %v3632 = vpop.f32.mrb[0].mxu0
        %v3633 = vpop.f32.mrb[0].mxu0
        %v3634 = vadd.f32 %v3473, %v3633
        %v3635 = vpop.f32.mrb[0].mxu0
        %3636 = vmatprep.mubr.bf16.mxu0 %v2417
        %3637 = vmatmul.mubr.bf16.gmra.mrb[0].mxu0 %v2353
        %v3638 = vpop.f32.mrb[0].mxu0
        %v3639 = vadd.f32 %v3478, %v3638
        %v3640 = vpop.f32.mrb[0].mxu0
        %v3641 = vpop.f32.mrb[0].mxu0
        %v3642 = vadd.f32 %v3481, %v3641
        %v3643 = vpop.f32.mrb[0].mxu0
        %3644 = vmatprep.mubr.bf16.mxu0 %v2418
        %3645 = vmatmul.mubr.bf16.gmra.mrb[0].mxu0 %v2354
        %v3646 = vpop.f32.mrb[0].mxu0
        %v3647 = vadd.f32 %v3486, %v3646
        %v3648 = vpop.f32.mrb[0].mxu0
        %v3649 = vpop.f32.mrb[0].mxu0
        %v3650 = vadd.f32 %v3489, %v3649
        %v3651 = vpop.f32.mrb[0].mxu0
        %3652 = vmatprep.mubr.bf16.mxu0 %v2419
        %3653 = vmatmul.mubr.bf16.gmra.mrb[0].mxu0 %v2355
        %v3654 = vpop.f32.mrb[0].mxu0
        %v3655 = vadd.f32 %v3494, %v3654
        %v3656 = vpop.f32.mrb[0].mxu0
        %v3657 = vpop.f32.mrb[0].mxu0
        %v3658 = vadd.f32 %v3497, %v3657
        %v3659 = vpop.f32.mrb[0].mxu0
        %3660 = vmatprep.mubr.bf16.mxu0 %v2420
        %3661 = vmatmul.mubr.bf16.gmra.mrb[0].mxu0 %v2356
        %v3662 = vpop.f32.mrb[0].mxu0
        %v3663 = vadd.f32 %v3502, %v3662
        %v3664 = vpop.f32.mrb[0].mxu0
        %v3665 = vpop.f32.mrb[0].mxu0
        %v3666 = vadd.f32 %v3505, %v3665
        %v3667 = vpop.f32.mrb[0].mxu0
        %3668 = vmatprep.mubr.bf16.mxu0 %v2421
        %3669 = vmatmul.mubr.bf16.gmra.mrb[0].mxu0 %v2357
        %v3670 = vpop.f32.mrb[0].mxu0
        %v3671 = vadd.f32 %v3510, %v3670
        %v3672 = vpop.f32.mrb[0].mxu0
        %v3673 = vpop.f32.mrb[0].mxu0
        %v3674 = vadd.f32 %v3513, %v3673
        %v3675 = vpop.f32.mrb[0].mxu0
        %3676 = vmatprep.mubr.bf16.mxu0 %v2422
        %3677 = vmatmul.mubr.bf16.gmra.mrb[0].mxu0 %v2358
        %v3678 = vpop.f32.mrb[0].mxu0
        %v3679 = vadd.f32 %v3518, %v3678
        %v3680 = vpop.f32.mrb[0].mxu0
        %v3681 = vpop.f32.mrb[0].mxu0
        %v3682 = vadd.f32 %v3521, %v3681
        %v3683 = vpop.f32.mrb[0].mxu0
        %3684 = vmatprep.mubr.bf16.mxu0 %v2423
        %3685 = vmatmul.mubr.bf16.gmra.mrb[0].mxu0 %v2359
        %v3686 = vpop.f32.mrb[0].mxu0
        %v3687 = vadd.f32 %v3526, %v3686
        %v3688 = vpop.f32.mrb[0].mxu0
        %v3689 = vpop.f32.mrb[0].mxu0
        %v3690 = vadd.f32 %v3529, %v3689
        %v3691 = vpop.f32.mrb[0].mxu0
        %3692 = vmatprep.mubr.bf16.mxu0 %v2424
        %3693 = vmatmul.mubr.bf16.gmra.mrb[0].mxu0 %v2360
        %v3694 = vpop.f32.mrb[0].mxu0
        %v3695 = vadd.f32 %v3534, %v3694
        %v3696 = vpop.f32.mrb[0].mxu0
        %v3697 = vpop.f32.mrb[0].mxu0
        %v3698 = vadd.f32 %v3537, %v3697
        %v3699 = vpop.f32.mrb[0].mxu0
        %3700 = vmatprep.mubr.bf16.mxu0 %v2425
        %3701 = vmatmul.mubr.bf16.gmra.mrb[0].mxu0 %v2361
        %v3702 = vpop.f32.mrb[0].mxu0
        %v3703 = vadd.f32 %v3542, %v3702
        %v3704 = vpop.f32.mrb[0].mxu0
        %v3705 = vpop.f32.mrb[0].mxu0
        %v3706 = vadd.f32 %v3545, %v3705
        %v3707 = vpop.f32.mrb[0].mxu0
        %3708 = vmatprep.mubr.bf16.mxu0 %v2426
        %3709 = vmatmul.mubr.bf16.gmra.mrb[0].mxu0 %v2362
        %v3710 = vpop.f32.mrb[0].mxu0
        %v3711 = vadd.f32 %v3550, %v3710
        %v3712 = vpop.f32.mrb[0].mxu0
        %v3713 = vpop.f32.mrb[0].mxu0
        %v3714 = vadd.f32 %v3553, %v3713
        %v3715 = vpop.f32.mrb[0].mxu0
        %3716 = vdwg.mxu0
        %3717 = vmatprep.subr.bf16.mxu0 0
        %3718 = vmatpush1.bf16.msra.mxu0 %v3138
        %3719 = vmatprep.subr.bf16.mxu0 0
        %3720 = vmatpush1.bf16.msra.mxu0 %v3139
        %3721 = vmatprep.subr.bf16.mxu0 0
        %3722 = vmatpush1.bf16.msra.mxu0 %v3140
        %3723 = vmatprep.subr.bf16.mxu0 0
        %3724 = vmatpush1.bf16.msra.mxu0 %v3141
        %3725 = vmatprep.subr.bf16.mxu0 0
        %3726 = vmatpush1.bf16.msra.mxu0 %v3142
        %3727 = vmatprep.subr.bf16.mxu0 0
        %3728 = vmatpush1.bf16.msra.mxu0 %v3143
        %3729 = vmatprep.subr.bf16.mxu0 0
        %3730 = vmatpush1.bf16.msra.mxu0 %v3144
        %3731 = vmatprep.subr.bf16.mxu0 0
        %3732 = vmatpush1.bf16.msra.mxu0 %v3145
        %3733 = vmatprep.subr.bf16.mxu0 0
        %3734 = vmatpush1.bf16.msra.mxu0 %v3146
        %3735 = vmatprep.subr.bf16.mxu0 0
        %3736 = vmatpush1.bf16.msra.mxu0 %v3147
        %3737 = vmatprep.subr.bf16.mxu0 0
        %3738 = vmatpush1.bf16.msra.mxu0 %v3148
        %3739 = vmatprep.subr.bf16.mxu0 0
        %3740 = vmatpush1.bf16.msra.mxu0 %v3149
        %3741 = vmatprep.subr.bf16.mxu0 0
        %3742 = vmatpush1.bf16.msra.mxu0 %v3150
        %3743 = vmatprep.subr.bf16.mxu0 0
        %3744 = vmatpush1.bf16.msra.mxu0 %v3151
        %3745 = vmatprep.subr.bf16.mxu0 0
        %3746 = vmatpush1.bf16.msra.mxu0 %v3152
        %3747 = vmatprep.subr.bf16.mxu0 0
        %3748 = vmatpush1.bf16.msra.mxu0 %v3153
        %3749 = vmatprep.mubr.bf16.mxu0 %v2555
        %3750 = vmatmul.mubr.bf16.gmra.mrb[0].mxu0 %v2491
        %v3751 = vpop.f32.mrb[0].mxu0
        %v3752 = vadd.f32 %v3591, %v3751
        %v3753 = vpop.f32.mrb[0].mxu0
        %v3754 = vpop.f32.mrb[0].mxu0
        %v3755 = vadd.f32 %v3594, %v3754
        %v3756 = vpop.f32.mrb[0].mxu0
        %3757 = vmatprep.mubr.bf16.mxu0 %v2556
        %3758 = vmatmul.mubr.bf16.gmra.mrb[0].mxu0 %v2492
        %v3759 = vpop.f32.mrb[0].mxu0
        %v3760 = vadd.f32 %v3599, %v3759
        %v3761 = vpop.f32.mrb[0].mxu0
        %v3762 = vpop.f32.mrb[0].mxu0
        %v3763 = vadd.f32 %v3602, %v3762
        %v3764 = vpop.f32.mrb[0].mxu0
        %3765 = vmatprep.mubr.bf16.mxu0 %v2557
        %3766 = vmatmul.mubr.bf16.gmra.mrb[0].mxu0 %v2493
        %v3767 = vpop.f32.mrb[0].mxu0
        %v3768 = vadd.f32 %v3607, %v3767
        %v3769 = vpop.f32.mrb[0].mxu0
        %v3770 = vpop.f32.mrb[0].mxu0
        %v3771 = vadd.f32 %v3610, %v3770
        %v3772 = vpop.f32.mrb[0].mxu0
        %3773 = vmatprep.mubr.bf16.mxu0 %v2558
        %3774 = vmatmul.mubr.bf16.gmra.mrb[0].mxu0 %v2494
        %v3775 = vpop.f32.mrb[0].mxu0
        %v3776 = vadd.f32 %v3615, %v3775
        %v3777 = vpop.f32.mrb[0].mxu0
        %v3778 = vpop.f32.mrb[0].mxu0
        %v3779 = vadd.f32 %v3618, %v3778
        %v3780 = vpop.f32.mrb[0].mxu0
        %3781 = vmatprep.mubr.bf16.mxu0 %v2559
        %3782 = vmatmul.mubr.bf16.gmra.mrb[0].mxu0 %v2495
        %v3783 = vpop.f32.mrb[0].mxu0
        %v3784 = vadd.f32 %v3623, %v3783
        %v3785 = vpop.f32.mrb[0].mxu0
        %v3786 = vpop.f32.mrb[0].mxu0
        %v3787 = vadd.f32 %v3626, %v3786
        %v3788 = vpop.f32.mrb[0].mxu0
        %3789 = vmatprep.mubr.bf16.mxu0 %v2560
        %3790 = vmatmul.mubr.bf16.gmra.mrb[0].mxu0 %v2496
        %v3791 = vpop.f32.mrb[0].mxu0
        %v3792 = vadd.f32 %v3631, %v3791
        %v3793 = vpop.f32.mrb[0].mxu0
        %v3794 = vpop.f32.mrb[0].mxu0
        %v3795 = vadd.f32 %v3634, %v3794
        %v3796 = vpop.f32.mrb[0].mxu0
        %3797 = vmatprep.mubr.bf16.mxu0 %v2561
        %3798 = vmatmul.mubr.bf16.gmra.mrb[0].mxu0 %v2497
        %v3799 = vpop.f32.mrb[0].mxu0
        %v3800 = vadd.f32 %v3639, %v3799
        %v3801 = vpop.f32.mrb[0].mxu0
        %v3802 = vpop.f32.mrb[0].mxu0
        %v3803 = vadd.f32 %v3642, %v3802
        %v3804 = vpop.f32.mrb[0].mxu0
        %3805 = vmatprep.mubr.bf16.mxu0 %v2562
        %3806 = vmatmul.mubr.bf16.gmra.mrb[0].mxu0 %v2498
        %v3807 = vpop.f32.mrb[0].mxu0
        %v3808 = vadd.f32 %v3647, %v3807
        %v3809 = vpop.f32.mrb[0].mxu0
        %v3810 = vpop.f32.mrb[0].mxu0
        %v3811 = vadd.f32 %v3650, %v3810
        %v3812 = vpop.f32.mrb[0].mxu0
        %3813 = vmatprep.mubr.bf16.mxu0 %v2563
        %3814 = vmatmul.mubr.bf16.gmra.mrb[0].mxu0 %v2499
        %v3815 = vpop.f32.mrb[0].mxu0
        %v3816 = vadd.f32 %v3655, %v3815
        %v3817 = vpop.f32.mrb[0].mxu0
        %v3818 = vpop.f32.mrb[0].mxu0
        %v3819 = vadd.f32 %v3658, %v3818
        %v3820 = vpop.f32.mrb[0].mxu0
        %3821 = vmatprep.mubr.bf16.mxu0 %v2564
        %3822 = vmatmul.mubr.bf16.gmra.mrb[0].mxu0 %v2500
        %v3823 = vpop.f32.mrb[0].mxu0
        %v3824 = vadd.f32 %v3663, %v3823
        %v3825 = vpop.f32.mrb[0].mxu0
        %v3826 = vpop.f32.mrb[0].mxu0
        %v3827 = vadd.f32 %v3666, %v3826
        %v3828 = vpop.f32.mrb[0].mxu0
        %3829 = vmatprep.mubr.bf16.mxu0 %v2565
        %3830 = vmatmul.mubr.bf16.gmra.mrb[0].mxu0 %v2501
        %v3831 = vpop.f32.mrb[0].mxu0
        %v3832 = vadd.f32 %v3671, %v3831
        %v3833 = vpop.f32.mrb[0].mxu0
        %v3834 = vpop.f32.mrb[0].mxu0
        %v3835 = vadd.f32 %v3674, %v3834
        %v3836 = vpop.f32.mrb[0].mxu0
        %3837 = vmatprep.mubr.bf16.mxu0 %v2566
        %3838 = vmatmul.mubr.bf16.gmra.mrb[0].mxu0 %v2502
        %v3839 = vpop.f32.mrb[0].mxu0
        %v3840 = vadd.f32 %v3679, %v3839
        %v3841 = vpop.f32.mrb[0].mxu0
        %v3842 = vpop.f32.mrb[0].mxu0
        %v3843 = vadd.f32 %v3682, %v3842
        %v3844 = vpop.f32.mrb[0].mxu0
        %3845 = vmatprep.mubr.bf16.mxu0 %v2567
        %3846 = vmatmul.mubr.bf16.gmra.mrb[0].mxu0 %v2503
        %v3847 = vpop.f32.mrb[0].mxu0
        %v3848 = vadd.f32 %v3687, %v3847
        %v3849 = vpop.f32.mrb[0].mxu0
        %v3850 = vpop.f32.mrb[0].mxu0
        %v3851 = vadd.f32 %v3690, %v3850
        %v3852 = vpop.f32.mrb[0].mxu0
        %3853 = vmatprep.mubr.bf16.mxu0 %v2568
        %3854 = vmatmul.mubr.bf16.gmra.mrb[0].mxu0 %v2504
        %v3855 = vpop.f32.mrb[0].mxu0
        %v3856 = vadd.f32 %v3695, %v3855
        %v3857 = vpop.f32.mrb[0].mxu0
        %v3858 = vpop.f32.mrb[0].mxu0
        %v3859 = vadd.f32 %v3698, %v3858
        %v3860 = vpop.f32.mrb[0].mxu0
        %3861 = vmatprep.mubr.bf16.mxu0 %v2569
        %3862 = vmatmul.mubr.bf16.gmra.mrb[0].mxu0 %v2505
        %v3863 = vpop.f32.mrb[0].mxu0
        %v3864 = vadd.f32 %v3703, %v3863
        %v3865 = vpop.f32.mrb[0].mxu0
        %v3866 = vpop.f32.mrb[0].mxu0
        %v3867 = vadd.f32 %v3706, %v3866
        %v3868 = vpop.f32.mrb[0].mxu0
        %3869 = vmatprep.mubr.bf16.mxu0 %v2570
        %3870 = vmatmul.mubr.bf16.gmra.mrb[0].mxu0 %v2506
        %v3871 = vpop.f32.mrb[0].mxu0
        %v3872 = vadd.f32 %v3711, %v3871
        %v3873 = vpop.f32.mrb[0].mxu0
        %v3874 = vpop.f32.mrb[0].mxu0
        %v3875 = vadd.f32 %v3714, %v3874
        %v3876 = vpop.f32.mrb[0].mxu0
        %3877 = vdwg.mxu0
        %3878 = vmatprep.subr.bf16.mxu0 0
        %3879 = vmatpush1.bf16.msra.mxu0 %v3154
        %3880 = vmatprep.subr.bf16.mxu0 0
        %3881 = vmatpush1.bf16.msra.mxu0 %v3155
        %3882 = vmatprep.subr.bf16.mxu0 0
        %3883 = vmatpush1.bf16.msra.mxu0 %v3156
        %3884 = vmatprep.subr.bf16.mxu0 0
        %3885 = vmatpush1.bf16.msra.mxu0 %v3157
        %3886 = vmatprep.subr.bf16.mxu0 0
        %3887 = vmatpush1.bf16.msra.mxu0 %v3158
        %3888 = vmatprep.subr.bf16.mxu0 0
        %3889 = vmatpush1.bf16.msra.mxu0 %v3159
        %3890 = vmatprep.subr.bf16.mxu0 0
        %3891 = vmatpush1.bf16.msra.mxu0 %v3160
        %3892 = vmatprep.subr.bf16.mxu0 0
        %3893 = vmatpush1.bf16.msra.mxu0 %v3161
        %3894 = vmatprep.subr.bf16.mxu0 0
        %3895 = vmatpush1.bf16.msra.mxu0 0
        %3896 = vmatprep.subr.bf16.mxu0 0
        %3897 = vmatpush1.bf16.msra.mxu0 0
        %3898 = vmatprep.subr.bf16.mxu0 0
        %3899 = vmatpush1.bf16.msra.mxu0 0
        %3900 = vmatprep.subr.bf16.mxu0 0
        %3901 = vmatpush1.bf16.msra.mxu0 0
        %3902 = vmatprep.subr.bf16.mxu0 0
        %3903 = vmatpush1.bf16.msra.mxu0 0
        %3904 = vmatprep.subr.bf16.mxu0 0
        %3905 = vmatpush1.bf16.msra.mxu0 0
        %3906 = vmatprep.subr.bf16.mxu0 0
        %3907 = vmatpush1.bf16.msra.mxu0 0
        %3908 = vmatprep.subr.bf16.mxu0 0
        %3909 = vmatpush1.bf16.msra.mxu0 0
        %3910 = vmatprep.mubr.bf16.mxu0 0
        %3911 = vmatmul.mubr.bf16.gmra.mrb[0].mxu0 %v2619
        %v3912 = vpop.f32.mrb[0].mxu0
        %v3913 = vadd.f32 %v3752, %v3912
        %v3914 = vpop.f32.mrb[0].mxu0
        %v3915 = vpop.f32.mrb[0].mxu0
        %v3916 = vadd.f32 %v3755, %v3915
        %v3917 = vpop.f32.mrb[0].mxu0
        %3918 = vmatprep.mubr.bf16.mxu0 0
        %3919 = vmatmul.mubr.bf16.gmra.mrb[0].mxu0 %v2620
        %v3920 = vpop.f32.mrb[0].mxu0
        %v3921 = vadd.f32 %v3760, %v3920
        %v3922 = vpop.f32.mrb[0].mxu0
        %v3923 = vpop.f32.mrb[0].mxu0
        %v3924 = vadd.f32 %v3763, %v3923
        %v3925 = vpop.f32.mrb[0].mxu0
        %3926 = vmatprep.mubr.bf16.mxu0 0
        %3927 = vmatmul.mubr.bf16.gmra.mrb[0].mxu0 %v2621
        %v3928 = vpop.f32.mrb[0].mxu0
        %v3929 = vadd.f32 %v3768, %v3928
        %v3930 = vpop.f32.mrb[0].mxu0
        %v3931 = vpop.f32.mrb[0].mxu0
        %v3932 = vadd.f32 %v3771, %v3931
        %v3933 = vpop.f32.mrb[0].mxu0
        %3934 = vmatprep.mubr.bf16.mxu0 0
        %3935 = vmatmul.mubr.bf16.gmra.mrb[0].mxu0 %v2622
        %v3936 = vpop.f32.mrb[0].mxu0
        %v3937 = vadd.f32 %v3776, %v3936
        %v3938 = vpop.f32.mrb[0].mxu0
        %v3939 = vpop.f32.mrb[0].mxu0
        %v3940 = vadd.f32 %v3779, %v3939
        %v3941 = vpop.f32.mrb[0].mxu0
        %3942 = vmatprep.mubr.bf16.mxu0 0
        %3943 = vmatmul.mubr.bf16.gmra.mrb[0].mxu0 %v2623
        %v3944 = vpop.f32.mrb[0].mxu0
        %v3945 = vadd.f32 %v3784, %v3944
        %v3946 = vpop.f32.mrb[0].mxu0
        %v3947 = vpop.f32.mrb[0].mxu0
        %v3948 = vadd.f32 %v3787, %v3947
        %v3949 = vpop.f32.mrb[0].mxu0
        %3950 = vmatprep.mubr.bf16.mxu0 0
        %3951 = vmatmul.mubr.bf16.gmra.mrb[0].mxu0 %v2624
        %v3952 = vpop.f32.mrb[0].mxu0
        %v3953 = vadd.f32 %v3792, %v3952
        %v3954 = vpop.f32.mrb[0].mxu0
        %v3955 = vpop.f32.mrb[0].mxu0
        %v3956 = vadd.f32 %v3795, %v3955
        %v3957 = vpop.f32.mrb[0].mxu0
        %3958 = vmatprep.mubr.bf16.mxu0 0
        %3959 = vmatmul.mubr.bf16.gmra.mrb[0].mxu0 %v2625
        %v3960 = vpop.f32.mrb[0].mxu0
        %v3961 = vadd.f32 %v3800, %v3960
        %v3962 = vpop.f32.mrb[0].mxu0
        %v3963 = vpop.f32.mrb[0].mxu0
        %v3964 = vadd.f32 %v3803, %v3963
        %v3965 = vpop.f32.mrb[0].mxu0
        %3966 = vmatprep.mubr.bf16.mxu0 0
        %3967 = vmatmul.mubr.bf16.gmra.mrb[0].mxu0 %v2626
        %v3968 = vpop.f32.mrb[0].mxu0
        %v3969 = vadd.f32 %v3808, %v3968
        %v3970 = vpop.f32.mrb[0].mxu0
        %v3971 = vpop.f32.mrb[0].mxu0
        %v3972 = vadd.f32 %v3811, %v3971
        %v3973 = vpop.f32.mrb[0].mxu0
        %3974 = vmatprep.mubr.bf16.mxu0 0
        %3975 = vmatmul.mubr.bf16.gmra.mrb[0].mxu0 %v2627
        %v3976 = vpop.f32.mrb[0].mxu0
        %v3977 = vadd.f32 %v3816, %v3976
        %v3978 = vpop.f32.mrb[0].mxu0
        %v3979 = vpop.f32.mrb[0].mxu0
        %v3980 = vadd.f32 %v3819, %v3979
        %v3981 = vpop.f32.mrb[0].mxu0
        %3982 = vmatprep.mubr.bf16.mxu0 0
        %3983 = vmatmul.mubr.bf16.gmra.mrb[0].mxu0 %v2628
        %v3984 = vpop.f32.mrb[0].mxu0
        %v3985 = vadd.f32 %v3824, %v3984
        %v3986 = vpop.f32.mrb[0].mxu0
        %v3987 = vpop.f32.mrb[0].mxu0
        %v3988 = vadd.f32 %v3827, %v3987
        %v3989 = vpop.f32.mrb[0].mxu0
        %3990 = vmatprep.mubr.bf16.mxu0 0
        %3991 = vmatmul.mubr.bf16.gmra.mrb[0].mxu0 %v2629
        %v3992 = vpop.f32.mrb[0].mxu0
        %v3993 = vadd.f32 %v3832, %v3992
        %v3994 = vpop.f32.mrb[0].mxu0
        %v3995 = vpop.f32.mrb[0].mxu0
        %v3996 = vadd.f32 %v3835, %v3995
        %v3997 = vpop.f32.mrb[0].mxu0
        %3998 = vmatprep.mubr.bf16.mxu0 0
        %3999 = vmatmul.mubr.bf16.gmra.mrb[0].mxu0 %v2630
        %v4000 = vpop.f32.mrb[0].mxu0
        %v4001 = vadd.f32 %v3840, %v4000
        %v4002 = vpop.f32.mrb[0].mxu0
        %v4003 = vpop.f32.mrb[0].mxu0
        %v4004 = vadd.f32 %v3843, %v4003
        %v4005 = vpop.f32.mrb[0].mxu0
        %4006 = vmatprep.mubr.bf16.mxu0 0
        %4007 = vmatmul.mubr.bf16.gmra.mrb[0].mxu0 %v2631
        %v4008 = vpop.f32.mrb[0].mxu0
        %v4009 = vadd.f32 %v3848, %v4008
        %v4010 = vpop.f32.mrb[0].mxu0
        %v4011 = vpop.f32.mrb[0].mxu0
        %v4012 = vadd.f32 %v3851, %v4011
        %v4013 = vpop.f32.mrb[0].mxu0
        %4014 = vmatprep.mubr.bf16.mxu0 0
        %4015 = vmatmul.mubr.bf16.gmra.mrb[0].mxu0 %v2632
        %v4016 = vpop.f32.mrb[0].mxu0
        %v4017 = vadd.f32 %v3856, %v4016
        %v4018 = vpop.f32.mrb[0].mxu0
        %v4019 = vpop.f32.mrb[0].mxu0
        %v4020 = vadd.f32 %v3859, %v4019
        %v4021 = vpop.f32.mrb[0].mxu0
        %4022 = vmatprep.mubr.bf16.mxu0 0
        %4023 = vmatmul.mubr.bf16.gmra.mrb[0].mxu0 %v2633
        %v4024 = vpop.f32.mrb[0].mxu0
        %v4025 = vadd.f32 %v3864, %v4024
        %v4026 = vpop.f32.mrb[0].mxu0
        %v4027 = vpop.f32.mrb[0].mxu0
        %v4028 = vadd.f32 %v3867, %v4027
        %v4029 = vpop.f32.mrb[0].mxu0
        %4030 = vmatprep.mubr.bf16.mxu0 0
        %4031 = vmatmul.mubr.bf16.gmra.mrb[0].mxu0 %v2634
        %v4032 = vpop.f32.mrb[0].mxu0
        %v4033 = vadd.f32 %v3872, %v4032
        %v4034 = vpop.f32.mrb[0].mxu0
        %v4035 = vpop.f32.mrb[0].mxu0
        %v4036 = vadd.f32 %v3875, %v4035
        %v4037 = vpop.f32.mrb[0].mxu0
        %4038 = vdwg.mxu0
        %v4039 = vmax.f32 %v3913, 0.0
        %v4040 = vmax.f32 %v3916, 0.0
        %v4041 = vmax.f32 %v3921, 0.0
        %v4042 = vmax.f32 %v3924, 0.0
        %v4043 = vmax.f32 %v3929, 0.0
        %v4044 = vmax.f32 %v3932, 0.0
        %v4045 = vmax.f32 %v3937, 0.0
        %v4046 = vmax.f32 %v3940, 0.0
        %v4047 = vmax.f32 %v3945, 0.0
        %v4048 = vmax.f32 %v3948, 0.0
        %v4049 = vmax.f32 %v3953, 0.0
        %v4050 = vmax.f32 %v3956, 0.0
        %v4051 = vmax.f32 %v3961, 0.0
        %v4052 = vmax.f32 %v3964, 0.0
        %v4053 = vmax.f32 %v3969, 0.0
        %v4054 = vmax.f32 %v3972, 0.0
        %v4055 = vmax.f32 %v3977, 0.0
        %v4056 = vmax.f32 %v3980, 0.0
        %v4057 = vmax.f32 %v3985, 0.0
        %v4058 = vmax.f32 %v3988, 0.0
        %v4059 = vmax.f32 %v3993, 0.0
        %v4060 = vmax.f32 %v3996, 0.0
        %v4061 = vmax.f32 %v4001, 0.0
        %v4062 = vmax.f32 %v4004, 0.0
        %v4063 = vmax.f32 %v4009, 0.0
        %v4064 = vmax.f32 %v4012, 0.0
        %v4065 = vmax.f32 %v4017, 0.0
        %v4066 = vmax.f32 %v4020, 0.0
        %v4067 = vmax.f32 %v4025, 0.0
        %v4068 = vmax.f32 %v4028, 0.0
        %v4069 = vmax.f32 %v4033, 0.0
        %v4070 = vmax.f32 %v4036, 0.0
        %4071 = vst [vmem:[%s177] sm:$0xff] %v4039
        %4072 = vst [vmem:[%s177 + $0x8] sm:$0xff] %v4040
        %4073 = vst [vmem:[%s177 + $0x10] sm:$0xff] %v4041
        %4074 = vst [vmem:[%s177 + $0x18] sm:$0xff] %v4042
        %4075 = vst [vmem:[%s177 + $0x20] sm:$0xff] %v4043
        %4076 = vst [vmem:[%s177 + $0x28] sm:$0xff] %v4044
        %4077 = vst [vmem:[%s177 + $0x30] sm:$0xff] %v4045
        %4078 = vst [vmem:[%s177 + $0x38] sm:$0xff] %v4046
        %4079 = vst [vmem:[%s177 + $0x40] sm:$0xff] %v4047
        %4080 = vst [vmem:[%s177 + $0x48] sm:$0xff] %v4048
        %4081 = vst [vmem:[%s177 + $0x50] sm:$0xff] %v4049
        %4082 = vst [vmem:[%s177 + $0x58] sm:$0xff] %v4050
        %4083 = vst [vmem:[%s177 + $0x60] sm:$0xff] %v4051
        %4084 = vst [vmem:[%s177 + $0x68] sm:$0xff] %v4052
        %4085 = vst [vmem:[%s177 + $0x70] sm:$0xff] %v4053
        %4086 = vst [vmem:[%s177 + $0x78] sm:$0xff] %v4054
        %4087 = vst [vmem:[%s177 + $0x80] sm:$0xff] %v4055
        %4088 = vst [vmem:[%s177 + $0x88] sm:$0xff] %v4056
        %4089 = vst [vmem:[%s177 + $0x90] sm:$0xff] %v4057
        %4090 = vst [vmem:[%s177 + $0x98] sm:$0xff] %v4058
        %4091 = vst [vmem:[%s177 + $0xa0] sm:$0xff] %v4059
        %4092 = vst [vmem:[%s177 + $0xa8] sm:$0xff] %v4060
        %4093 = vst [vmem:[%s177 + $0xb0] sm:$0xff] %v4061
        %4094 = vst [vmem:[%s177 + $0xb8] sm:$0xff] %v4062
        %4095 = vst [vmem:[%s177 + $0xc0] sm:$0xff] %v4063
        %4096 = vst [vmem:[%s177 + $0xc8] sm:$0xff] %v4064
        %4097 = vst [vmem:[%s177 + $0xd0] sm:$0xff] %v4065
        %4098 = vst [vmem:[%s177 + $0xd8] sm:$0xff] %v4066
        %4099 = vst [vmem:[%s177 + $0xe0] sm:$0xff] %v4067
        %4100 = vst [vmem:[%s177 + $0xe8] sm:$0xff] %v4068
        %4101 = vst [vmem:[%s177 + $0xf0] sm:$0xff] %v4069
        %4102 = vst [vmem:[%s177 + $0xf8] sm:$0xff] %v4070
        %s4103 = sand.u32 %s107, 1
        %s4104 = scalar_lea.sflag [#allocation3], %s4103
        %s4105 = sand.u32 %s107, 1
        %s4106 = smul.addr %s4105, 256
        %s4107 = scalar_lea.vmem [#allocation2], %s4106
        // Predicated region
        $region33: #{tpu_custom_call.1} parent=31 // pred_check
          %p4108 = pneg %p117
        $region34: #{tpu_custom_call.1} parent=31 // pred_check_branch
          %4110 = sbr.rel (%p4108) target = $region36
        $region35: #{tpu_custom_call.1} parent=31 // pred_region
          %s4111 = smul.u32 16, %s22
          %s4113 = ssub.s32 4096, 4096
          %4114 = vsyncadd %s4104, %s4113
          %s4115 = smul.addr %s4111, 2
          %s4116 = smul.addr %s21, 32
          %s4117 = sadd.s32 %s4115, %s4116
          %s4118 = smul.addr %s4117, 128
          %s4119 = scalar_lea.hbm %s3, %s4118
          %s4120 = sshll.u32 %s4107, 4
          %s4121 = int_to_ptr.vmem [resolvable:$true] %s4120
          %4126 = dma.vmem_to_hbm [thread:$0]  %s4121, 4096, %s4119, %s4104, 128, 128, 8
        $region36: #{tpu_custom_call.1} parent=31 // pred_fallthru
          _
      $region32: #{tpu_custom_call.1} parent=5 // pred_fallthru
        _
      %p4127 = scmp.le.s32.totalorder 2, %s12
      // Predicated region
      $region37: #{tpu_custom_call.1} parent=5 // pred_check
        %p4128 = pneg %p4127
      $region38: #{tpu_custom_call.1} parent=5 // pred_check_branch
        %4130 = sbr.rel (%p4128) target = $region40
      $region39: #{tpu_custom_call.1} parent=5 // pred_region
        %s4131 = ssub.s32 %s12, 2
        // Predicated region
        $region41: #{tpu_custom_call.1} parent=39 // pred_check
          %p4132 = pneg %p123
        $region42: #{tpu_custom_call.1} parent=39 // pred_check_branch
          %4134 = sbr.rel (%p4132) target = $region44
        $region43: #{tpu_custom_call.1} parent=39 // pred_region
          %s4135 = sand.u32 %s108, 1
          %s4136 = scalar_lea.sflag [#allocation3], %s4135
          %s4137 = sand.u32 %s108, 1
          %s4138 = smul.addr %s4137, 256
          %s4139 = scalar_lea.vmem [#allocation2], %s4138
          %4140 = dma.done %s4136, 4096
        $region44: #{tpu_custom_call.1} parent=39 // pred_fallthru
          _
      $region40: #{tpu_custom_call.1} parent=5 // pred_fallthru
        _
    $region6: #{tpu_custom_call.1} parent=1 // loop_footer
      %s16 = sadd.s32 1, %s12
    $region7: #{tpu_custom_call.1} parent=1 // loop_footer_branch
      %11 = sbr.rel target = $region3
    $region8: #{tpu_custom_call.1} parent=1 // loop_exit
      _
    %4141 = vsyncpa [#allocation3], 1
    %s4142 = scalar_lea.sflag [#allocation3], 1
    %4143 = vsyncpa %s4142, 1

</llo_original>
